<compile_context>
chip_gen: v6e
topology: v6e:2x2x1
jax: 0.10.0
libtpu: 0.0.40
codegen_flags: <defaults>
</compile_context>

<pallas_src>
import functools

import jax
import jax.numpy as jnp
from jax.experimental import pallas as pl
from jax.experimental.pallas import tpu as pltpu


# -----------------------------------------------------------------------------
# Fused kernel: backbone stand-in + 3 branch 1x1 convs + all MGN max pools +
# 8 reduction heads (conv1x1/BN/PReLU) + 8 classifiers.  One grid step = one
# block of G images; feature maps and pooled vectors never leave VMEM.
# -----------------------------------------------------------------------------
def _mgn_fused_kernel(hh, ww,
                      x_ref, bbw_ref, bbb_ref, brw_ref, brb_ref,
                      w1_ref, scale_ref, shift_ref, alpha_ref,
                      w2_ref, b2_ref,
                      f_ref, l_ref, z_scr):
    # x:     [G*HW, Cin]  bf16   pre-flattened NHWC rows for G images
    # bbw:   [Cin, Cf] bf16   bbb: [1, Cf] f32     backbone stand-in (1x1 + ReLU)
    # brw:   [Cf, 3*Cf] bf16  brb: [1, 3*Cf] f32   p1|p2|p3 branch convs, stacked
    # w1:    [8, Cf, R] bf16  scale/shift/alpha: [8, 1, R] f32
    # w2:    [8*R, Kpad] bf16 block-diagonal       b2: [1, Kpad] f32
    # f:     [G, 8*R] f32   (== predict concat)
    # l:     [G, Kpad] f32  (8 heads x K logits, lane-packed, zero padded)
    # z_scr: [8*G, Cf] f32  pooled rows, head-major
    hw = hh * ww
    gg = x_ref.shape[0] // hw
    cf = bbw_ref.shape[1]
    r = w1_ref.shape[2]

    # ---- backbone stand-in + the three branch 1x1 convs (bf16 MXU, f32 acc) --
    feat = jnp.dot(x_ref[...], bbw_ref[...], preferred_element_type=jnp.float32)
    feat = jnp.maximum(feat + bbb_ref[...], 0.0)                  # [G*HW, Cf]
    pall = jnp.dot(feat.astype(jnp.bfloat16), brw_ref[...],
                   preferred_element_type=jnp.float32)
    pall = jnp.maximum(pall + brb_ref[...], 0.0)                  # [G*HW, 3*Cf]

    # ---- max pools (f32), per image; direct row stores into the z scratch ----
    half = (hh // 2) * ww
    third = (hh // 3) * ww
    for g in range(gg):                                           # static unroll
        seg = pall[g * hw:(g + 1) * hw, :]                        # [HW, 3*Cf]
        p1 = seg[:, :cf]                                          # lane-aligned
        p2 = seg[:, cf:2 * cf]
        p3 = seg[:, 2 * cf:]
        zg_p1 = jnp.max(p1, axis=0, keepdims=True)                # [1, Cf]
        z0_p2 = jnp.max(p2[:half], axis=0, keepdims=True)
        z1_p2 = jnp.max(p2[half:], axis=0, keepdims=True)
        z0_p3 = jnp.max(p3[:third], axis=0, keepdims=True)
        z1_p3 = jnp.max(p3[third:2 * third], axis=0, keepdims=True)
        z2_p3 = jnp.max(p3[2 * third:], axis=0, keepdims=True)
        zg_p2 = jnp.maximum(z0_p2, z1_p2)                         # exact tiling of H
        zg_p3 = jnp.maximum(jnp.maximum(z0_p3, z1_p3), z2_p3)
        rows = (zg_p1, zg_p2, zg_p3, z0_p2, z1_p2, z0_p3, z1_p3, z2_p3)
        for h in range(8):
            idx = h * gg + g
            z_scr[idx:idx + 1, :] = rows[h]                       # plain row store

    # ---- 8 reduction heads: conv1x1 (no bias) + BN(eval, folded) + PReLU ----
    ys = []
    for h in range(8):                                            # static unroll
        z_h = z_scr[h * gg:(h + 1) * gg, :]                       # [G, Cf] f32
        y = jnp.dot(z_h.astype(jnp.bfloat16), w1_ref[h],
                    preferred_element_type=jnp.float32)           # [G, R]
        y = y * scale_ref[h] + shift_ref[h]                       # BN, f32
        y = jnp.where(y >= 0.0, y, alpha_ref[h] * y)              # PReLU, f32
        ys.append(y)
    y_all = jnp.concatenate(ys, axis=1)                           # [G, 8*R], 128-tile concat
    f_ref[...] = y_all                                            # one unmasked store

    # ---- 8 classifiers as ONE lane-dense stacked (block-diagonal) matmul ----
    l_ref[...] = (jnp.dot(y_all.astype(jnp.bfloat16), w2_ref[...],
                          preferred_element_type=jnp.float32) + b2_ref[...])


# -----------------------------------------------------------------------------
# Model (deterministic parameter construction + forward)
# -----------------------------------------------------------------------------
class MGNPallas:
    """Scaled-down MGN: c_feat stands in for 2048, red_dim for 256."""

    def __init__(self, key, num_classes=8, c_in=4, c_feat=256, red_dim=128,
                 bn_eps=1e-5):
        self.num_classes = num_classes
        self.c_in = c_in
        self.c_feat = c_feat
        self.red_dim = red_dim
        # lane-padded width of the stacked logits slab (>= 128 lanes)
        self.k_pad = max(128, ((8 * num_classes + 127) // 128) * 128)

        keys = jax.random.split(key, 32)
        ki = iter(range(32))

        def nrm(k, shape, std):
            return std * jax.random.normal(k, shape, dtype=jnp.float32)

        # --- backbone / branch stand-ins (see TODO(synk) above) ---
        self.bb_w = nrm(keys[next(ki)], (c_in, c_feat),
                        (2.0 / c_in) ** 0.5).astype(jnp.bfloat16)
        self.bb_b = jnp.zeros((1, c_feat), jnp.float32)
        bws = [nrm(keys[next(ki)], (c_feat, c_feat), (2.0 / c_feat) ** 0.5)
               for _ in range(3)]                            # p1, p2, p3
        self.br_w = jnp.concatenate(bws, axis=1).astype(jnp.bfloat16)  # [Cf, 3*Cf]
        self.br_b = jnp.zeros((1, 3 * c_feat), jnp.float32)

        # --- 8 reduction heads (conv1x1 no-bias + BN + PReLU) + 8 FC heads ---
        w1s, scales, shifts, alphas = [], [], [], []
        w2_big = jnp.zeros((8 * red_dim, self.k_pad), jnp.float32)
        b2_big = jnp.zeros((1, self.k_pad), jnp.float32)
        for h in range(8):
            k_w1, k_g, k_w2 = keys[next(ki)], keys[next(ki)], keys[next(ki)]
            # kaiming_normal_ fan_in on Conv2d(c_feat, red_dim, 1)
            w1 = nrm(k_w1, (c_feat, red_dim), (2.0 / c_feat) ** 0.5)
            gamma = 1.0 + nrm(k_g, (1, red_dim), 0.02)       # BN weight N(1, 0.02)
            beta = jnp.zeros((1, red_dim), jnp.float32)      # BN bias = 0
            run_mean = jnp.zeros((1, red_dim), jnp.float32)  # fresh BN stats
            run_var = jnp.ones((1, red_dim), jnp.float32)
            scale = gamma / jnp.sqrt(run_var + bn_eps)
            shift = beta - run_mean * scale
            alpha = jnp.full((1, red_dim), 0.25, jnp.float32)  # PReLU init
            # kaiming_normal_ fan_out on Linear(red_dim, num_classes); bias = 0
            w2 = nrm(k_w2, (red_dim, num_classes), (2.0 / num_classes) ** 0.5)
            b2 = jnp.zeros((num_classes,), jnp.float32)
            w1s.append(w1); scales.append(scale); shifts.append(shift)
            alphas.append(alpha)
            # block-diagonal stacked classifier: head h -> lanes [h*K, (h+1)*K)
            w2_big = w2_big.at[h * red_dim:(h + 1) * red_dim,
                               h * num_classes:(h + 1) * num_classes].set(w2)
            b2_big = b2_big.at[0, h * num_classes:(h + 1) * num_classes].set(b2)

        self.w1s = jnp.stack(w1s).astype(jnp.bfloat16)       # [8, Cf, R]
        self.scales = jnp.stack(scales)                      # [8, 1, R] f32
        self.shifts = jnp.stack(shifts)                      # [8, 1, R] f32
        self.alphas = jnp.stack(alphas)                      # [8, 1, R] f32
        self.w2_big = w2_big.astype(jnp.bfloat16)            # [8*R, Kpad]
        self.b2_big = b2_big                                 # [1, Kpad] f32

    def __call__(self, x_nchw, training=False):
        # x: [B, C_in, H, W]   (NCHW, PyTorch convention)
        b, cin, hh, ww = x_nchw.shape
        assert cin == self.c_in
        # part pools assume H divisible by 2 and 3 (matches reference MGN tiling)
        assert hh % 6 == 0, "H must be divisible by 6 for the 2- and 3-part pools"
        cf, r, k, kpad = self.c_feat, self.red_dim, self.num_classes, self.k_pad
        hw = hh * ww

        # NCHW -> NHWC -> lane-clean [B*HW, Cin] bf16 rows (reshape done by XLA
        # on HBM; no padded (1,H,W,C) block / in-kernel relayout).
        x2d = jnp.transpose(x_nchw, (0, 2, 3, 1)).reshape(b * hw, cin)
        x2d = x2d.astype(jnp.bfloat16)

        # Images per grid step: a full-sublane block of 8 when the batch allows,
        # otherwise the whole batch in one step (block dim == full array dim).
        g_img = 8 if (b % 8 == 0) else b
        n_steps = b // g_img

        flops = 2 * b * (hw * cin * cf + hw * cf * 3 * cf + 8 * cf * r
                         + 8 * r * kpad)
        in_bytes = sum(int(a.size) * a.dtype.itemsize for a in
                       (x2d, self.bb_w, self.bb_b, self.br_w, self.br_b,
                        self.w1s, self.scales, self.shifts, self.alphas,
                        self.w2_big, self.b2_big))
        out_bytes = b * 8 * r * 4 + b * kpad * 4

        kernel = functools.partial(_mgn_fused_kernel, hh, ww)
        feats, logits_pad = pl.pallas_call(
            kernel,
            out_shape=(jax.ShapeDtypeStruct((b, 8 * r), jnp.float32),
                       jax.ShapeDtypeStruct((b, kpad), jnp.float32)),
            grid=(n_steps,),
            in_specs=[
                pl.BlockSpec((g_img * hw, cin), lambda i: (i, 0)),
                pl.BlockSpec((cin, cf), lambda i: (0, 0)),
                pl.BlockSpec((1, cf), lambda i: (0, 0)),
                pl.BlockSpec((cf, 3 * cf), lambda i: (0, 0)),
                pl.BlockSpec((1, 3 * cf), lambda i: (0, 0)),
                pl.BlockSpec((8, cf, r), lambda i: (0, 0, 0)),
                pl.BlockSpec((8, 1, r), lambda i: (0, 0, 0)),
                pl.BlockSpec((8, 1, r), lambda i: (0, 0, 0)),
                pl.BlockSpec((8, 1, r), lambda i: (0, 0, 0)),
                pl.BlockSpec((8 * r, kpad), lambda i: (0, 0)),
                pl.BlockSpec((1, kpad), lambda i: (0, 0)),
            ],
            out_specs=(pl.BlockSpec((g_img, 8 * r), lambda i: (i, 0)),
                       pl.BlockSpec((g_img, kpad), lambda i: (i, 0))),
            scratch_shapes=[pltpu.VMEM((8 * g_img, cf), jnp.float32)],
            compiler_params=pltpu.CompilerParams(
                dimension_semantics=("parallel",)),
            cost_estimate=pl.CostEstimate(
                flops=int(flops), transcendentals=0,
                bytes_accessed=int(in_bytes + out_bytes)),
        )(x2d, self.bb_w, self.bb_b, self.br_w, self.br_b,
          self.w1s, self.scales, self.shifts, self.alphas,
          self.w2_big, self.b2_big)

        # feats:      [B, 8*R]   = fg_p1|fg_p2|fg_p3|f0_p2|f1_p2|f0_p3|f1_p3|f2_p3
        # logits_pad: [B, Kpad]  lanes [h*K,(h+1)*K) = logits of head h
        if training:
            fg_p1 = feats[:, 0 * r:1 * r]
            fg_p2 = feats[:, 1 * r:2 * r]
            fg_p3 = feats[:, 2 * r:3 * r]
            (l_p1, l_p2, l_p3, l0_p2, l1_p2, l0_p3, l1_p3, l2_p3) = (
                logits_pad[:, h * k:(h + 1) * k] for h in range(8))
            return (fg_p1, fg_p2, fg_p3, l_p1, l_p2, l_p3,
                    l0_p2, l1_p2, l0_p3, l1_p3, l2_p3)
        # eval path: feats is already the torch.cat([...], dim=1) predict vector.
        return feats


# -----------------------------------------------------------------------------
if __name__ == "__main__":
    key = jax.random.PRNGKey(0)
    k_model, k_x = jax.random.split(key)

    # small shapes: B=2, C_in=4, H=24 (divisible by 2 and 3 for part pools), W=8
    model = MGNPallas(k_model, num_classes=8, c_in=4, c_feat=256, red_dim=128)
    x = jax.random.normal(k_x, (2, 4, 24, 8), dtype=jnp.float32)

    predict = model(x, training=False)          # eval path: concat features
    train_out = model(x, training=True)         # training path: feats + logits
    jax.block_until_ready(predict)
    jax.block_until_ready(train_out)

    assert predict.shape == (2, 8 * 128)
    assert train_out[3].shape == (2, 8)         # l_p1 logits
    print("KERNEL_OK")
</pallas_src>

<mosaic_0001>
module attributes {stable_mosaic.version = 11 : i64} {
  func.func @_mgn_fused_kernel(%arg0: i32, %arg1: memref<384x4xbf16, #tpu.memory_space<vmem>>, %arg2: memref<4x256xbf16, #tpu.memory_space<vmem>>, %arg3: memref<1x256xf32, #tpu.memory_space<vmem>>, %arg4: memref<256x768xbf16, #tpu.memory_space<vmem>>, %arg5: memref<1x768xf32, #tpu.memory_space<vmem>>, %arg6: memref<8x256x128xbf16, #tpu.memory_space<vmem>>, %arg7: memref<8x1x128xf32, #tpu.memory_space<vmem>>, %arg8: memref<8x1x128xf32, #tpu.memory_space<vmem>>, %arg9: memref<8x1x128xf32, #tpu.memory_space<vmem>>, %arg10: memref<1024x128xbf16, #tpu.memory_space<vmem>>, %arg11: memref<1x128xf32, #tpu.memory_space<vmem>>, %arg12: memref<2x1024xf32, #tpu.memory_space<vmem>>, %arg13: memref<2x128xf32, #tpu.memory_space<vmem>>, %arg14: memref<16x256xf32, #tpu.memory_space<vmem>>) attributes {dimension_semantics = [#tpu.dimension_semantics<parallel>], iteration_bounds = array<i64: 1>, scalar_prefetch = 0 : i64, scratch_operands = 1 : i64, tpu.core_type = #tpu.core_type<tc>, window_params = [{transform_indices = @transform_0, window_bounds = array<i64: 384, 4>}, {pipeline_mode = #tpu.pipeline_mode<synchronous>, transform_indices = @transform_1, window_bounds = array<i64: 4, 256>}, {pipeline_mode = #tpu.pipeline_mode<synchronous>, transform_indices = @transform_2, window_bounds = array<i64: 1, 256>}, {pipeline_mode = #tpu.pipeline_mode<synchronous>, transform_indices = @transform_3, window_bounds = array<i64: 256, 768>}, {pipeline_mode = #tpu.pipeline_mode<synchronous>, transform_indices = @transform_4, window_bounds = array<i64: 1, 768>}, {pipeline_mode = #tpu.pipeline_mode<synchronous>, transform_indices = @transform_5, window_bounds = array<i64: 8, 256, 128>}, {pipeline_mode = #tpu.pipeline_mode<synchronous>, transform_indices = @transform_6, window_bounds = array<i64: 8, 1, 128>}, {pipeline_mode = #tpu.pipeline_mode<synchronous>, transform_indices = @transform_7, window_bounds = array<i64: 8, 1, 128>}, {pipeline_mode = #tpu.pipeline_mode<synchronous>, transform_indices = @transform_8, window_bounds = array<i64: 8, 1, 128>}, {pipeline_mode = #tpu.pipeline_mode<synchronous>, transform_indices = @transform_9, window_bounds = array<i64: 1024, 128>}, {pipeline_mode = #tpu.pipeline_mode<synchronous>, transform_indices = @transform_10, window_bounds = array<i64: 1, 128>}, {transform_indices = @transform_11, window_bounds = array<i64: 2, 1024>}, {transform_indices = @transform_12, window_bounds = array<i64: 2, 128>}]} {
    %c0 = arith.constant 0 : index
    %c0_0 = arith.constant 0 : index
    %0 = vector.load %arg1[%c0, %c0_0] : memref<384x4xbf16, #tpu.memory_space<vmem>>, vector<384x4xbf16>
    %c0_1 = arith.constant 0 : index
    %c0_2 = arith.constant 0 : index
    %1 = vector.load %arg2[%c0_1, %c0_2] : memref<4x256xbf16, #tpu.memory_space<vmem>>, vector<4x256xbf16>
    %cst = arith.constant dense<0.000000e+00> : vector<384x256xf32>
    %2 = tpu.matmul %0, %1, %cst {dimension_numbers = #tpu.dot_dimension_numbers<[1], [0], [0], [1], [0, 0, 1, 1], [], []>} : vector<384x4xbf16>, vector<4x256xbf16>, vector<384x256xf32> -> vector<384x256xf32>
    %c0_3 = arith.constant 0 : index
    %c0_4 = arith.constant 0 : index
    %3 = vector.load %arg3[%c0_3, %c0_4] : memref<1x256xf32, #tpu.memory_space<vmem>>, vector<1x256xf32>
    %4 = vector.broadcast %3 : vector<1x256xf32> to vector<384x256xf32>
    %5 = arith.addf %2, %4 : vector<384x256xf32>
    %cst_5 = arith.constant 0.000000e+00 : f32
    %6 = vector.broadcast %cst_5 : f32 to vector<384x256xf32>
    %7 = arith.maximumf %5, %6 : vector<384x256xf32>
    %8 = arith.truncf %7 : vector<384x256xf32> to vector<384x256xbf16>
    %c0_6 = arith.constant 0 : index
    %c0_7 = arith.constant 0 : index
    %9 = vector.load %arg4[%c0_6, %c0_7] : memref<256x768xbf16, #tpu.memory_space<vmem>>, vector<256x768xbf16>
    %cst_8 = arith.constant dense<0.000000e+00> : vector<384x768xf32>
    %10 = tpu.matmul %8, %9, %cst_8 {dimension_numbers = #tpu.dot_dimension_numbers<[1], [0], [0], [1], [0, 0, 1, 1], [], []>} : vector<384x256xbf16>, vector<256x768xbf16>, vector<384x768xf32> -> vector<384x768xf32>
    %c0_9 = arith.constant 0 : index
    %c0_10 = arith.constant 0 : index
    %11 = vector.load %arg5[%c0_9, %c0_10] : memref<1x768xf32, #tpu.memory_space<vmem>>, vector<1x768xf32>
    %12 = vector.broadcast %11 : vector<1x768xf32> to vector<384x768xf32>
    %13 = arith.addf %10, %12 : vector<384x768xf32>
    %cst_11 = arith.constant 0.000000e+00 : f32
    %14 = vector.broadcast %cst_11 : f32 to vector<384x768xf32>
    %15 = arith.maximumf %13, %14 : vector<384x768xf32>
    %16 = vector.extract_strided_slice %15 {offsets = [0, 0], sizes = [192, 768], strides = [1, 1]} : vector<384x768xf32> to vector<192x768xf32>
    %17 = vector.extract_strided_slice %16 {offsets = [0, 0], sizes = [192, 256], strides = [1, 1]} : vector<192x768xf32> to vector<192x256xf32>
    %18 = vector.extract_strided_slice %16 {offsets = [0, 256], sizes = [192, 256], strides = [1, 1]} : vector<192x768xf32> to vector<192x256xf32>
    %19 = vector.extract_strided_slice %16 {offsets = [0, 512], sizes = [192, 256], strides = [1, 1]} : vector<192x768xf32> to vector<192x256xf32>
    %cst_12 = arith.constant dense<0xFF800000> : vector<256xf32>
    %20 = vector.multi_reduction <maximumf>, %17, %cst_12 [0] : vector<192x256xf32> to vector<256xf32>
    %21 = vector.shape_cast %20 : vector<256xf32> to vector<1x256xf32>
    %22 = vector.extract_strided_slice %18 {offsets = [0, 0], sizes = [96, 256], strides = [1, 1]} : vector<192x256xf32> to vector<96x256xf32>
    %cst_13 = arith.constant dense<0xFF800000> : vector<256xf32>
    %23 = vector.multi_reduction <maximumf>, %22, %cst_13 [0] : vector<96x256xf32> to vector<256xf32>
    %24 = vector.shape_cast %23 : vector<256xf32> to vector<1x256xf32>
    %25 = vector.extract_strided_slice %18 {offsets = [96, 0], sizes = [96, 256], strides = [1, 1]} : vector<192x256xf32> to vector<96x256xf32>
    %cst_14 = arith.constant dense<0xFF800000> : vector<256xf32>
    %26 = vector.multi_reduction <maximumf>, %25, %cst_14 [0] : vector<96x256xf32> to vector<256xf32>
    %27 = vector.shape_cast %26 : vector<256xf32> to vector<1x256xf32>
    %28 = vector.extract_strided_slice %19 {offsets = [0, 0], sizes = [64, 256], strides = [1, 1]} : vector<192x256xf32> to vector<64x256xf32>
    %cst_15 = arith.constant dense<0xFF800000> : vector<256xf32>
    %29 = vector.multi_reduction <maximumf>, %28, %cst_15 [0] : vector<64x256xf32> to vector<256xf32>
    %30 = vector.shape_cast %29 : vector<256xf32> to vector<1x256xf32>
    %31 = vector.extract_strided_slice %19 {offsets = [64, 0], sizes = [64, 256], strides = [1, 1]} : vector<192x256xf32> to vector<64x256xf32>
    %cst_16 = arith.constant dense<0xFF800000> : vector<256xf32>
    %32 = vector.multi_reduction <maximumf>, %31, %cst_16 [0] : vector<64x256xf32> to vector<256xf32>
    %33 = vector.shape_cast %32 : vector<256xf32> to vector<1x256xf32>
    %34 = vector.extract_strided_slice %19 {offsets = [128, 0], sizes = [64, 256], strides = [1, 1]} : vector<192x256xf32> to vector<64x256xf32>
    %cst_17 = arith.constant dense<0xFF800000> : vector<256xf32>
    %35 = vector.multi_reduction <maximumf>, %34, %cst_17 [0] : vector<64x256xf32> to vector<256xf32>
    %36 = vector.shape_cast %35 : vector<256xf32> to vector<1x256xf32>
    %37 = arith.maximumf %24, %27 : vector<1x256xf32>
    %38 = arith.maximumf %30, %33 : vector<1x256xf32>
    %39 = arith.maximumf %38, %36 : vector<1x256xf32>
    %c0_18 = arith.constant 0 : index
    %c0_19 = arith.constant 0 : index
    %40 = vector.load %arg14[%c0_18, %c0_19] : memref<16x256xf32, #tpu.memory_space<vmem>>, vector<1x256xf32>
    tpu.vector_store %arg14[%c0_18, %c0_19], %21 {strides = array<i32>} : memref<16x256xf32, #tpu.memory_space<vmem>>, vector<1x256xf32>,
    %c2 = arith.constant 2 : index
    %c0_20 = arith.constant 0 : index
    %41 = vector.load %arg14[%c2, %c0_20] : memref<16x256xf32, #tpu.memory_space<vmem>>, vector<1x256xf32>
    tpu.vector_store %arg14[%c2, %c0_20], %37 {strides = array<i32>} : memref<16x256xf32, #tpu.memory_space<vmem>>, vector<1x256xf32>,
    %c4 = arith.constant 4 : index
    %c0_21 = arith.constant 0 : index
    %42 = vector.load %arg14[%c4, %c0_21] : memref<16x256xf32, #tpu.memory_space<vmem>>, vector<1x256xf32>
    tpu.vector_store %arg14[%c4, %c0_21], %39 {strides = array<i32>} : memref<16x256xf32, #tpu.memory_space<vmem>>, vector<1x256xf32>,
    %c6 = arith.constant 6 : index
    %c0_22 = arith.constant 0 : index
    %43 = vector.load %arg14[%c6, %c0_22] : memref<16x256xf32, #tpu.memory_space<vmem>>, vector<1x256xf32>
    tpu.vector_store %arg14[%c6, %c0_22], %24 {strides = array<i32>} : memref<16x256xf32, #tpu.memory_space<vmem>>, vector<1x256xf32>,
    %c8 = arith.constant 8 : index
    %c0_23 = arith.constant 0 : index
    %44 = vector.load %arg14[%c8, %c0_23] : memref<16x256xf32, #tpu.memory_space<vmem>>, vector<1x256xf32>
    tpu.vector_store %arg14[%c8, %c0_23], %27 {strides = array<i32>} : memref<16x256xf32, #tpu.memory_space<vmem>>, vector<1x256xf32>,
    %c10 = arith.constant 10 : index
    %c0_24 = arith.constant 0 : index
    %45 = vector.load %arg14[%c10, %c0_24] : memref<16x256xf32, #tpu.memory_space<vmem>>, vector<1x256xf32>
    tpu.vector_store %arg14[%c10, %c0_24], %30 {strides = array<i32>} : memref<16x256xf32, #tpu.memory_space<vmem>>, vector<1x256xf32>,
    %c12 = arith.constant 12 : index
    %c0_25 = arith.constant 0 : index
    %46 = vector.load %arg14[%c12, %c0_25] : memref<16x256xf32, #tpu.memory_space<vmem>>, vector<1x256xf32>
    tpu.vector_store %arg14[%c12, %c0_25], %33 {strides = array<i32>} : memref<16x256xf32, #tpu.memory_space<vmem>>, vector<1x256xf32>,
    %c14 = arith.constant 14 : index
    %c0_26 = arith.constant 0 : index
    %47 = vector.load %arg14[%c14, %c0_26] : memref<16x256xf32, #tpu.memory_space<vmem>>, vector<1x256xf32>
    tpu.vector_store %arg14[%c14, %c0_26], %36 {strides = array<i32>} : memref<16x256xf32, #tpu.memory_space<vmem>>, vector<1x256xf32>,
    %48 = vector.extract_strided_slice %15 {offsets = [192, 0], sizes = [192, 768], strides = [1, 1]} : vector<384x768xf32> to vector<192x768xf32>
    %49 = vector.extract_strided_slice %48 {offsets = [0, 0], sizes = [192, 256], strides = [1, 1]} : vector<192x768xf32> to vector<192x256xf32>
    %50 = vector.extract_strided_slice %48 {offsets = [0, 256], sizes = [192, 256], strides = [1, 1]} : vector<192x768xf32> to vector<192x256xf32>
    %51 = vector.extract_strided_slice %48 {offsets = [0, 512], sizes = [192, 256], strides = [1, 1]} : vector<192x768xf32> to vector<192x256xf32>
    %cst_27 = arith.constant dense<0xFF800000> : vector<256xf32>
    %52 = vector.multi_reduction <maximumf>, %49, %cst_27 [0] : vector<192x256xf32> to vector<256xf32>
    %53 = vector.shape_cast %52 : vector<256xf32> to vector<1x256xf32>
    %54 = vector.extract_strided_slice %50 {offsets = [0, 0], sizes = [96, 256], strides = [1, 1]} : vector<192x256xf32> to vector<96x256xf32>
    %cst_28 = arith.constant dense<0xFF800000> : vector<256xf32>
    %55 = vector.multi_reduction <maximumf>, %54, %cst_28 [0] : vector<96x256xf32> to vector<256xf32>
    %56 = vector.shape_cast %55 : vector<256xf32> to vector<1x256xf32>
    %57 = vector.extract_strided_slice %50 {offsets = [96, 0], sizes = [96, 256], strides = [1, 1]} : vector<192x256xf32> to vector<96x256xf32>
    %cst_29 = arith.constant dense<0xFF800000> : vector<256xf32>
    %58 = vector.multi_reduction <maximumf>, %57, %cst_29 [0] : vector<96x256xf32> to vector<256xf32>
    %59 = vector.shape_cast %58 : vector<256xf32> to vector<1x256xf32>
    %60 = vector.extract_strided_slice %51 {offsets = [0, 0], sizes = [64, 256], strides = [1, 1]} : vector<192x256xf32> to vector<64x256xf32>
    %cst_30 = arith.constant dense<0xFF800000> : vector<256xf32>
    %61 = vector.multi_reduction <maximumf>, %60, %cst_30 [0] : vector<64x256xf32> to vector<256xf32>
    %62 = vector.shape_cast %61 : vector<256xf32> to vector<1x256xf32>
    %63 = vector.extract_strided_slice %51 {offsets = [64, 0], sizes = [64, 256], strides = [1, 1]} : vector<192x256xf32> to vector<64x256xf32>
    %cst_31 = arith.constant dense<0xFF800000> : vector<256xf32>
    %64 = vector.multi_reduction <maximumf>, %63, %cst_31 [0] : vector<64x256xf32> to vector<256xf32>
    %65 = vector.shape_cast %64 : vector<256xf32> to vector<1x256xf32>
    %66 = vector.extract_strided_slice %51 {offsets = [128, 0], sizes = [64, 256], strides = [1, 1]} : vector<192x256xf32> to vector<64x256xf32>
    %cst_32 = arith.constant dense<0xFF800000> : vector<256xf32>
    %67 = vector.multi_reduction <maximumf>, %66, %cst_32 [0] : vector<64x256xf32> to vector<256xf32>
    %68 = vector.shape_cast %67 : vector<256xf32> to vector<1x256xf32>
    %69 = arith.maximumf %56, %59 : vector<1x256xf32>
    %70 = arith.maximumf %62, %65 : vector<1x256xf32>
    %71 = arith.maximumf %70, %68 : vector<1x256xf32>
    %c1 = arith.constant 1 : index
    %c0_33 = arith.constant 0 : index
    %72 = vector.load %arg14[%c1, %c0_33] : memref<16x256xf32, #tpu.memory_space<vmem>>, vector<1x256xf32>
    tpu.vector_store %arg14[%c1, %c0_33], %53 {strides = array<i32>} : memref<16x256xf32, #tpu.memory_space<vmem>>, vector<1x256xf32>,
    %c3 = arith.constant 3 : index
    %c0_34 = arith.constant 0 : index
    %73 = vector.load %arg14[%c3, %c0_34] : memref<16x256xf32, #tpu.memory_space<vmem>>, vector<1x256xf32>
    tpu.vector_store %arg14[%c3, %c0_34], %69 {strides = array<i32>} : memref<16x256xf32, #tpu.memory_space<vmem>>, vector<1x256xf32>,
    %c5 = arith.constant 5 : index
    %c0_35 = arith.constant 0 : index
    %74 = vector.load %arg14[%c5, %c0_35] : memref<16x256xf32, #tpu.memory_space<vmem>>, vector<1x256xf32>
    tpu.vector_store %arg14[%c5, %c0_35], %71 {strides = array<i32>} : memref<16x256xf32, #tpu.memory_space<vmem>>, vector<1x256xf32>,
    %c7 = arith.constant 7 : index
    %c0_36 = arith.constant 0 : index
    %75 = vector.load %arg14[%c7, %c0_36] : memref<16x256xf32, #tpu.memory_space<vmem>>, vector<1x256xf32>
    tpu.vector_store %arg14[%c7, %c0_36], %56 {strides = array<i32>} : memref<16x256xf32, #tpu.memory_space<vmem>>, vector<1x256xf32>,
    %c9 = arith.constant 9 : index
    %c0_37 = arith.constant 0 : index
    %76 = vector.load %arg14[%c9, %c0_37] : memref<16x256xf32, #tpu.memory_space<vmem>>, vector<1x256xf32>
    tpu.vector_store %arg14[%c9, %c0_37], %59 {strides = array<i32>} : memref<16x256xf32, #tpu.memory_space<vmem>>, vector<1x256xf32>,
    %c11 = arith.constant 11 : index
    %c0_38 = arith.constant 0 : index
    %77 = vector.load %arg14[%c11, %c0_38] : memref<16x256xf32, #tpu.memory_space<vmem>>, vector<1x256xf32>
    tpu.vector_store %arg14[%c11, %c0_38], %62 {strides = array<i32>} : memref<16x256xf32, #tpu.memory_space<vmem>>, vector<1x256xf32>,
    %c13 = arith.constant 13 : index
    %c0_39 = arith.constant 0 : index
    %78 = vector.load %arg14[%c13, %c0_39] : memref<16x256xf32, #tpu.memory_space<vmem>>, vector<1x256xf32>
    tpu.vector_store %arg14[%c13, %c0_39], %65 {strides = array<i32>} : memref<16x256xf32, #tpu.memory_space<vmem>>, vector<1x256xf32>,
    %c15 = arith.constant 15 : index
    %c0_40 = arith.constant 0 : index
    %79 = vector.load %arg14[%c15, %c0_40] : memref<16x256xf32, #tpu.memory_space<vmem>>, vector<1x256xf32>
    tpu.vector_store %arg14[%c15, %c0_40], %68 {strides = array<i32>} : memref<16x256xf32, #tpu.memory_space<vmem>>, vector<1x256xf32>,
    %c0_41 = arith.constant 0 : index
    %c0_42 = arith.constant 0 : index
    %80 = vector.load %arg14[%c0_41, %c0_42] : memref<16x256xf32, #tpu.memory_space<vmem>>, vector<2x256xf32>
    %81 = arith.truncf %80 : vector<2x256xf32> to vector<2x256xbf16>
    %c0_43 = arith.constant 0 : index
    %c0_44 = arith.constant 0 : index
    %c0_45 = arith.constant 0 : index
    %82 = vector.load %arg6[%c0_43, %c0_44, %c0_45] : memref<8x256x128xbf16, #tpu.memory_space<vmem>>, vector<1x256x128xbf16>
    %83 = vector.shape_cast %82 : vector<1x256x128xbf16> to vector<256x128xbf16>
    %cst_46 = arith.constant dense<0.000000e+00> : vector<2x128xf32>
    %84 = tpu.matmul %81, %83, %cst_46 {dimension_numbers = #tpu.dot_dimension_numbers<[1], [0], [0], [1], [0, 0, 1, 1], [], []>} : vector<2x256xbf16>, vector<256x128xbf16>, vector<2x128xf32> -> vector<2x128xf32>
    %c0_47 = arith.constant 0 : index
    %c0_48 = arith.constant 0 : index
    %c0_49 = arith.constant 0 : index
    %85 = vector.load %arg7[%c0_47, %c0_48, %c0_49] : memref<8x1x128xf32, #tpu.memory_space<vmem>>, vector<1x1x128xf32>
    %86 = vector.shape_cast %85 : vector<1x1x128xf32> to vector<1x128xf32>
    %87 = vector.broadcast %86 : vector<1x128xf32> to vector<2x128xf32>
    %88 = arith.mulf %84, %87 : vector<2x128xf32>
    %c0_50 = arith.constant 0 : index
    %c0_51 = arith.constant 0 : index
    %c0_52 = arith.constant 0 : index
    %89 = vector.load %arg8[%c0_50, %c0_51, %c0_52] : memref<8x1x128xf32, #tpu.memory_space<vmem>>, vector<1x1x128xf32>
    %90 = vector.shape_cast %89 : vector<1x1x128xf32> to vector<1x128xf32>
    %91 = vector.broadcast %90 : vector<1x128xf32> to vector<2x128xf32>
    %92 = arith.addf %88, %91 : vector<2x128xf32>
    %cst_53 = arith.constant 0.000000e+00 : f32
    %93 = vector.broadcast %cst_53 : f32 to vector<2x128xf32>
    %94 = arith.cmpf oge, %92, %93 : vector<2x128xf32>
    %c0_54 = arith.constant 0 : index
    %c0_55 = arith.constant 0 : index
    %c0_56 = arith.constant 0 : index
    %95 = vector.load %arg9[%c0_54, %c0_55, %c0_56] : memref<8x1x128xf32, #tpu.memory_space<vmem>>, vector<1x1x128xf32>
    %96 = vector.shape_cast %95 : vector<1x1x128xf32> to vector<1x128xf32>
    %97 = vector.broadcast %96 : vector<1x128xf32> to vector<2x128xf32>
    %98 = arith.mulf %97, %92 : vector<2x128xf32>
    %99 = arith.select %94, %92, %98 : vector<2x128xi1>, vector<2x128xf32>
    %c2_57 = arith.constant 2 : index
    %c0_58 = arith.constant 0 : index
    %100 = vector.load %arg14[%c2_57, %c0_58] : memref<16x256xf32, #tpu.memory_space<vmem>>, vector<2x256xf32>
    %101 = arith.truncf %100 : vector<2x256xf32> to vector<2x256xbf16>
    %c1_59 = arith.constant 1 : index
    %c0_60 = arith.constant 0 : index
    %c0_61 = arith.constant 0 : index
    %102 = vector.load %arg6[%c1_59, %c0_60, %c0_61] : memref<8x256x128xbf16, #tpu.memory_space<vmem>>, vector<1x256x128xbf16>
    %103 = vector.shape_cast %102 : vector<1x256x128xbf16> to vector<256x128xbf16>
    %cst_62 = arith.constant dense<0.000000e+00> : vector<2x128xf32>
    %104 = tpu.matmul %101, %103, %cst_62 {dimension_numbers = #tpu.dot_dimension_numbers<[1], [0], [0], [1], [0, 0, 1, 1], [], []>} : vector<2x256xbf16>, vector<256x128xbf16>, vector<2x128xf32> -> vector<2x128xf32>
    %c1_63 = arith.constant 1 : index
    %c0_64 = arith.constant 0 : index
    %c0_65 = arith.constant 0 : index
    %105 = vector.load %arg7[%c1_63, %c0_64, %c0_65] : memref<8x1x128xf32, #tpu.memory_space<vmem>>, vector<1x1x128xf32>
    %106 = vector.shape_cast %105 : vector<1x1x128xf32> to vector<1x128xf32>
    %107 = vector.broadcast %106 : vector<1x128xf32> to vector<2x128xf32>
    %108 = arith.mulf %104, %107 : vector<2x128xf32>
    %c1_66 = arith.constant 1 : index
    %c0_67 = arith.constant 0 : index
    %c0_68 = arith.constant 0 : index
    %109 = vector.load %arg8[%c1_66, %c0_67, %c0_68] : memref<8x1x128xf32, #tpu.memory_space<vmem>>, vector<1x1x128xf32>
    %110 = vector.shape_cast %109 : vector<1x1x128xf32> to vector<1x128xf32>
    %111 = vector.broadcast %110 : vector<1x128xf32> to vector<2x128xf32>
    %112 = arith.addf %108, %111 : vector<2x128xf32>
    %cst_69 = arith.constant 0.000000e+00 : f32
    %113 = vector.broadcast %cst_69 : f32 to vector<2x128xf32>
    %114 = arith.cmpf oge, %112, %113 : vector<2x128xf32>
    %c1_70 = arith.constant 1 : index
    %c0_71 = arith.constant 0 : index
    %c0_72 = arith.constant 0 : index
    %115 = vector.load %arg9[%c1_70, %c0_71, %c0_72] : memref<8x1x128xf32, #tpu.memory_space<vmem>>, vector<1x1x128xf32>
    %116 = vector.shape_cast %115 : vector<1x1x128xf32> to vector<1x128xf32>
    %117 = vector.broadcast %116 : vector<1x128xf32> to vector<2x128xf32>
    %118 = arith.mulf %117, %112 : vector<2x128xf32>
    %119 = arith.select %114, %112, %118 : vector<2x128xi1>, vector<2x128xf32>
    %c4_73 = arith.constant 4 : index
    %c0_74 = arith.constant 0 : index
    %120 = vector.load %arg14[%c4_73, %c0_74] : memref<16x256xf32, #tpu.memory_space<vmem>>, vector<2x256xf32>
    %121 = arith.truncf %120 : vector<2x256xf32> to vector<2x256xbf16>
    %c2_75 = arith.constant 2 : index
    %c0_76 = arith.constant 0 : index
    %c0_77 = arith.constant 0 : index
    %122 = vector.load %arg6[%c2_75, %c0_76, %c0_77] : memref<8x256x128xbf16, #tpu.memory_space<vmem>>, vector<1x256x128xbf16>
    %123 = vector.shape_cast %122 : vector<1x256x128xbf16> to vector<256x128xbf16>
    %cst_78 = arith.constant dense<0.000000e+00> : vector<2x128xf32>
    %124 = tpu.matmul %121, %123, %cst_78 {dimension_numbers = #tpu.dot_dimension_numbers<[1], [0], [0], [1], [0, 0, 1, 1], [], []>} : vector<2x256xbf16>, vector<256x128xbf16>, vector<2x128xf32> -> vector<2x128xf32>
    %c2_79 = arith.constant 2 : index
    %c0_80 = arith.constant 0 : index
    %c0_81 = arith.constant 0 : index
    %125 = vector.load %arg7[%c2_79, %c0_80, %c0_81] : memref<8x1x128xf32, #tpu.memory_space<vmem>>, vector<1x1x128xf32>
    %126 = vector.shape_cast %125 : vector<1x1x128xf32> to vector<1x128xf32>
    %127 = vector.broadcast %126 : vector<1x128xf32> to vector<2x128xf32>
    %128 = arith.mulf %124, %127 : vector<2x128xf32>
    %c2_82 = arith.constant 2 : index
    %c0_83 = arith.constant 0 : index
    %c0_84 = arith.constant 0 : index
    %129 = vector.load %arg8[%c2_82, %c0_83, %c0_84] : memref<8x1x128xf32, #tpu.memory_space<vmem>>, vector<1x1x128xf32>
    %130 = vector.shape_cast %129 : vector<1x1x128xf32> to vector<1x128xf32>
    %131 = vector.broadcast %130 : vector<1x128xf32> to vector<2x128xf32>
    %132 = arith.addf %128, %131 : vector<2x128xf32>
    %cst_85 = arith.constant 0.000000e+00 : f32
    %133 = vector.broadcast %cst_85 : f32 to vector<2x128xf32>
    %134 = arith.cmpf oge, %132, %133 : vector<2x128xf32>
    %c2_86 = arith.constant 2 : index
    %c0_87 = arith.constant 0 : index
    %c0_88 = arith.constant 0 : index
    %135 = vector.load %arg9[%c2_86, %c0_87, %c0_88] : memref<8x1x128xf32, #tpu.memory_space<vmem>>, vector<1x1x128xf32>
    %136 = vector.shape_cast %135 : vector<1x1x128xf32> to vector<1x128xf32>
    %137 = vector.broadcast %136 : vector<1x128xf32> to vector<2x128xf32>
    %138 = arith.mulf %137, %132 : vector<2x128xf32>
    %139 = arith.select %134, %132, %138 : vector<2x128xi1>, vector<2x128xf32>
    %c6_89 = arith.constant 6 : index
    %c0_90 = arith.constant 0 : index
    %140 = vector.load %arg14[%c6_89, %c0_90] : memref<16x256xf32, #tpu.memory_space<vmem>>, vector<2x256xf32>
    %141 = arith.truncf %140 : vector<2x256xf32> to vector<2x256xbf16>
    %c3_91 = arith.constant 3 : index
    %c0_92 = arith.constant 0 : index
    %c0_93 = arith.constant 0 : index
    %142 = vector.load %arg6[%c3_91, %c0_92, %c0_93] : memref<8x256x128xbf16, #tpu.memory_space<vmem>>, vector<1x256x128xbf16>
    %143 = vector.shape_cast %142 : vector<1x256x128xbf16> to vector<256x128xbf16>
    %cst_94 = arith.constant dense<0.000000e+00> : vector<2x128xf32>
    %144 = tpu.matmul %141, %143, %cst_94 {dimension_numbers = #tpu.dot_dimension_numbers<[1], [0], [0], [1], [0, 0, 1, 1], [], []>} : vector<2x256xbf16>, vector<256x128xbf16>, vector<2x128xf32> -> vector<2x128xf32>
    %c3_95 = arith.constant 3 : index
    %c0_96 = arith.constant 0 : index
    %c0_97 = arith.constant 0 : index
    %145 = vector.load %arg7[%c3_95, %c0_96, %c0_97] : memref<8x1x128xf32, #tpu.memory_space<vmem>>, vector<1x1x128xf32>
    %146 = vector.shape_cast %145 : vector<1x1x128xf32> to vector<1x128xf32>
    %147 = vector.broadcast %146 : vector<1x128xf32> to vector<2x128xf32>
    %148 = arith.mulf %144, %147 : vector<2x128xf32>
    %c3_98 = arith.constant 3 : index
    %c0_99 = arith.constant 0 : index
    %c0_100 = arith.constant 0 : index
    %149 = vector.load %arg8[%c3_98, %c0_99, %c0_100] : memref<8x1x128xf32, #tpu.memory_space<vmem>>, vector<1x1x128xf32>
    %150 = vector.shape_cast %149 : vector<1x1x128xf32> to vector<1x128xf32>
    %151 = vector.broadcast %150 : vector<1x128xf32> to vector<2x128xf32>
    %152 = arith.addf %148, %151 : vector<2x128xf32>
    %cst_101 = arith.constant 0.000000e+00 : f32
    %153 = vector.broadcast %cst_101 : f32 to vector<2x128xf32>
    %154 = arith.cmpf oge, %152, %153 : vector<2x128xf32>
    %c3_102 = arith.constant 3 : index
    %c0_103 = arith.constant 0 : index
    %c0_104 = arith.constant 0 : index
    %155 = vector.load %arg9[%c3_102, %c0_103, %c0_104] : memref<8x1x128xf32, #tpu.memory_space<vmem>>, vector<1x1x128xf32>
    %156 = vector.shape_cast %155 : vector<1x1x128xf32> to vector<1x128xf32>
    %157 = vector.broadcast %156 : vector<1x128xf32> to vector<2x128xf32>
    %158 = arith.mulf %157, %152 : vector<2x128xf32>
    %159 = arith.select %154, %152, %158 : vector<2x128xi1>, vector<2x128xf32>
    %c8_105 = arith.constant 8 : index
    %c0_106 = arith.constant 0 : index
    %160 = vector.load %arg14[%c8_105, %c0_106] : memref<16x256xf32, #tpu.memory_space<vmem>>, vector<2x256xf32>
    %161 = arith.truncf %160 : vector<2x256xf32> to vector<2x256xbf16>
    %c4_107 = arith.constant 4 : index
    %c0_108 = arith.constant 0 : index
    %c0_109 = arith.constant 0 : index
    %162 = vector.load %arg6[%c4_107, %c0_108, %c0_109] : memref<8x256x128xbf16, #tpu.memory_space<vmem>>, vector<1x256x128xbf16>
    %163 = vector.shape_cast %162 : vector<1x256x128xbf16> to vector<256x128xbf16>
    %cst_110 = arith.constant dense<0.000000e+00> : vector<2x128xf32>
    %164 = tpu.matmul %161, %163, %cst_110 {dimension_numbers = #tpu.dot_dimension_numbers<[1], [0], [0], [1], [0, 0, 1, 1], [], []>} : vector<2x256xbf16>, vector<256x128xbf16>, vector<2x128xf32> -> vector<2x128xf32>
    %c4_111 = arith.constant 4 : index
    %c0_112 = arith.constant 0 : index
    %c0_113 = arith.constant 0 : index
    %165 = vector.load %arg7[%c4_111, %c0_112, %c0_113] : memref<8x1x128xf32, #tpu.memory_space<vmem>>, vector<1x1x128xf32>
    %166 = vector.shape_cast %165 : vector<1x1x128xf32> to vector<1x128xf32>
    %167 = vector.broadcast %166 : vector<1x128xf32> to vector<2x128xf32>
    %168 = arith.mulf %164, %167 : vector<2x128xf32>
    %c4_114 = arith.constant 4 : index
    %c0_115 = arith.constant 0 : index
    %c0_116 = arith.constant 0 : index
    %169 = vector.load %arg8[%c4_114, %c0_115, %c0_116] : memref<8x1x128xf32, #tpu.memory_space<vmem>>, vector<1x1x128xf32>
    %170 = vector.shape_cast %169 : vector<1x1x128xf32> to vector<1x128xf32>
    %171 = vector.broadcast %170 : vector<1x128xf32> to vector<2x128xf32>
    %172 = arith.addf %168, %171 : vector<2x128xf32>
    %cst_117 = arith.constant 0.000000e+00 : f32
    %173 = vector.broadcast %cst_117 : f32 to vector<2x128xf32>
    %174 = arith.cmpf oge, %172, %173 : vector<2x128xf32>
    %c4_118 = arith.constant 4 : index
    %c0_119 = arith.constant 0 : index
    %c0_120 = arith.constant 0 : index
    %175 = vector.load %arg9[%c4_118, %c0_119, %c0_120] : memref<8x1x128xf32, #tpu.memory_space<vmem>>, vector<1x1x128xf32>
    %176 = vector.shape_cast %175 : vector<1x1x128xf32> to vector<1x128xf32>
    %177 = vector.broadcast %176 : vector<1x128xf32> to vector<2x128xf32>
    %178 = arith.mulf %177, %172 : vector<2x128xf32>
    %179 = arith.select %174, %172, %178 : vector<2x128xi1>, vector<2x128xf32>
    %c10_121 = arith.constant 10 : index
    %c0_122 = arith.constant 0 : index
    %180 = vector.load %arg14[%c10_121, %c0_122] : memref<16x256xf32, #tpu.memory_space<vmem>>, vector<2x256xf32>
    %181 = arith.truncf %180 : vector<2x256xf32> to vector<2x256xbf16>
    %c5_123 = arith.constant 5 : index
    %c0_124 = arith.constant 0 : index
    %c0_125 = arith.constant 0 : index
    %182 = vector.load %arg6[%c5_123, %c0_124, %c0_125] : memref<8x256x128xbf16, #tpu.memory_space<vmem>>, vector<1x256x128xbf16>
    %183 = vector.shape_cast %182 : vector<1x256x128xbf16> to vector<256x128xbf16>
    %cst_126 = arith.constant dense<0.000000e+00> : vector<2x128xf32>
    %184 = tpu.matmul %181, %183, %cst_126 {dimension_numbers = #tpu.dot_dimension_numbers<[1], [0], [0], [1], [0, 0, 1, 1], [], []>} : vector<2x256xbf16>, vector<256x128xbf16>, vector<2x128xf32> -> vector<2x128xf32>
    %c5_127 = arith.constant 5 : index
    %c0_128 = arith.constant 0 : index
    %c0_129 = arith.constant 0 : index
    %185 = vector.load %arg7[%c5_127, %c0_128, %c0_129] : memref<8x1x128xf32, #tpu.memory_space<vmem>>, vector<1x1x128xf32>
    %186 = vector.shape_cast %185 : vector<1x1x128xf32> to vector<1x128xf32>
    %187 = vector.broadcast %186 : vector<1x128xf32> to vector<2x128xf32>
    %188 = arith.mulf %184, %187 : vector<2x128xf32>
    %c5_130 = arith.constant 5 : index
    %c0_131 = arith.constant 0 : index
    %c0_132 = arith.constant 0 : index
    %189 = vector.load %arg8[%c5_130, %c0_131, %c0_132] : memref<8x1x128xf32, #tpu.memory_space<vmem>>, vector<1x1x128xf32>
    %190 = vector.shape_cast %189 : vector<1x1x128xf32> to vector<1x128xf32>
    %191 = vector.broadcast %190 : vector<1x128xf32> to vector<2x128xf32>
    %192 = arith.addf %188, %191 : vector<2x128xf32>
    %cst_133 = arith.constant 0.000000e+00 : f32
    %193 = vector.broadcast %cst_133 : f32 to vector<2x128xf32>
    %194 = arith.cmpf oge, %192, %193 : vector<2x128xf32>
    %c5_134 = arith.constant 5 : index
    %c0_135 = arith.constant 0 : index
    %c0_136 = arith.constant 0 : index
    %195 = vector.load %arg9[%c5_134, %c0_135, %c0_136] : memref<8x1x128xf32, #tpu.memory_space<vmem>>, vector<1x1x128xf32>
    %196 = vector.shape_cast %195 : vector<1x1x128xf32> to vector<1x128xf32>
    %197 = vector.broadcast %196 : vector<1x128xf32> to vector<2x128xf32>
    %198 = arith.mulf %197, %192 : vector<2x128xf32>
    %199 = arith.select %194, %192, %198 : vector<2x128xi1>, vector<2x128xf32>
    %c12_137 = arith.constant 12 : index
    %c0_138 = arith.constant 0 : index
    %200 = vector.load %arg14[%c12_137, %c0_138] : memref<16x256xf32, #tpu.memory_space<vmem>>, vector<2x256xf32>
    %201 = arith.truncf %200 : vector<2x256xf32> to vector<2x256xbf16>
    %c6_139 = arith.constant 6 : index
    %c0_140 = arith.constant 0 : index
    %c0_141 = arith.constant 0 : index
    %202 = vector.load %arg6[%c6_139, %c0_140, %c0_141] : memref<8x256x128xbf16, #tpu.memory_space<vmem>>, vector<1x256x128xbf16>
    %203 = vector.shape_cast %202 : vector<1x256x128xbf16> to vector<256x128xbf16>
    %cst_142 = arith.constant dense<0.000000e+00> : vector<2x128xf32>
    %204 = tpu.matmul %201, %203, %cst_142 {dimension_numbers = #tpu.dot_dimension_numbers<[1], [0], [0], [1], [0, 0, 1, 1], [], []>} : vector<2x256xbf16>, vector<256x128xbf16>, vector<2x128xf32> -> vector<2x128xf32>
    %c6_143 = arith.constant 6 : index
    %c0_144 = arith.constant 0 : index
    %c0_145 = arith.constant 0 : index
    %205 = vector.load %arg7[%c6_143, %c0_144, %c0_145] : memref<8x1x128xf32, #tpu.memory_space<vmem>>, vector<1x1x128xf32>
    %206 = vector.shape_cast %205 : vector<1x1x128xf32> to vector<1x128xf32>
    %207 = vector.broadcast %206 : vector<1x128xf32> to vector<2x128xf32>
    %208 = arith.mulf %204, %207 : vector<2x128xf32>
    %c6_146 = arith.constant 6 : index
    %c0_147 = arith.constant 0 : index
    %c0_148 = arith.constant 0 : index
    %209 = vector.load %arg8[%c6_146, %c0_147, %c0_148] : memref<8x1x128xf32, #tpu.memory_space<vmem>>, vector<1x1x128xf32>
    %210 = vector.shape_cast %209 : vector<1x1x128xf32> to vector<1x128xf32>
    %211 = vector.broadcast %210 : vector<1x128xf32> to vector<2x128xf32>
    %212 = arith.addf %208, %211 : vector<2x128xf32>
    %cst_149 = arith.constant 0.000000e+00 : f32
    %213 = vector.broadcast %cst_149 : f32 to vector<2x128xf32>
    %214 = arith.cmpf oge, %212, %213 : vector<2x128xf32>
    %c6_150 = arith.constant 6 : index
    %c0_151 = arith.constant 0 : index
    %c0_152 = arith.constant 0 : index
    %215 = vector.load %arg9[%c6_150, %c0_151, %c0_152] : memref<8x1x128xf32, #tpu.memory_space<vmem>>, vector<1x1x128xf32>
    %216 = vector.shape_cast %215 : vector<1x1x128xf32> to vector<1x128xf32>
    %217 = vector.broadcast %216 : vector<1x128xf32> to vector<2x128xf32>
    %218 = arith.mulf %217, %212 : vector<2x128xf32>
    %219 = arith.select %214, %212, %218 : vector<2x128xi1>, vector<2x128xf32>
    %c14_153 = arith.constant 14 : index
    %c0_154 = arith.constant 0 : index
    %220 = vector.load %arg14[%c14_153, %c0_154] : memref<16x256xf32, #tpu.memory_space<vmem>>, vector<2x256xf32>
    %221 = arith.truncf %220 : vector<2x256xf32> to vector<2x256xbf16>
    %c7_155 = arith.constant 7 : index
    %c0_156 = arith.constant 0 : index
    %c0_157 = arith.constant 0 : index
    %222 = vector.load %arg6[%c7_155, %c0_156, %c0_157] : memref<8x256x128xbf16, #tpu.memory_space<vmem>>, vector<1x256x128xbf16>
    %223 = vector.shape_cast %222 : vector<1x256x128xbf16> to vector<256x128xbf16>
    %cst_158 = arith.constant dense<0.000000e+00> : vector<2x128xf32>
    %224 = tpu.matmul %221, %223, %cst_158 {dimension_numbers = #tpu.dot_dimension_numbers<[1], [0], [0], [1], [0, 0, 1, 1], [], []>} : vector<2x256xbf16>, vector<256x128xbf16>, vector<2x128xf32> -> vector<2x128xf32>
    %c7_159 = arith.constant 7 : index
    %c0_160 = arith.constant 0 : index
    %c0_161 = arith.constant 0 : index
    %225 = vector.load %arg7[%c7_159, %c0_160, %c0_161] : memref<8x1x128xf32, #tpu.memory_space<vmem>>, vector<1x1x128xf32>
    %226 = vector.shape_cast %225 : vector<1x1x128xf32> to vector<1x128xf32>
    %227 = vector.broadcast %226 : vector<1x128xf32> to vector<2x128xf32>
    %228 = arith.mulf %224, %227 : vector<2x128xf32>
    %c7_162 = arith.constant 7 : index
    %c0_163 = arith.constant 0 : index
    %c0_164 = arith.constant 0 : index
    %229 = vector.load %arg8[%c7_162, %c0_163, %c0_164] : memref<8x1x128xf32, #tpu.memory_space<vmem>>, vector<1x1x128xf32>
    %230 = vector.shape_cast %229 : vector<1x1x128xf32> to vector<1x128xf32>
    %231 = vector.broadcast %230 : vector<1x128xf32> to vector<2x128xf32>
    %232 = arith.addf %228, %231 : vector<2x128xf32>
    %cst_165 = arith.constant 0.000000e+00 : f32
    %233 = vector.broadcast %cst_165 : f32 to vector<2x128xf32>
    %234 = arith.cmpf oge, %232, %233 : vector<2x128xf32>
    %c7_166 = arith.constant 7 : index
    %c0_167 = arith.constant 0 : index
    %c0_168 = arith.constant 0 : index
    %235 = vector.load %arg9[%c7_166, %c0_167, %c0_168] : memref<8x1x128xf32, #tpu.memory_space<vmem>>, vector<1x1x128xf32>
    %236 = vector.shape_cast %235 : vector<1x1x128xf32> to vector<1x128xf32>
    %237 = vector.broadcast %236 : vector<1x128xf32> to vector<2x128xf32>
    %238 = arith.mulf %237, %232 : vector<2x128xf32>
    %239 = arith.select %234, %232, %238 : vector<2x128xi1>, vector<2x128xf32>
    %240 = tpu.concatenate %99, %119, %139, %159, %179, %199, %219, %239 in 1 : vector<2x128xf32>, vector<2x128xf32>, vector<2x128xf32>, vector<2x128xf32>, vector<2x128xf32>, vector<2x128xf32>, vector<2x128xf32>, vector<2x128xf32> -> vector<2x1024xf32>
    %c0_169 = arith.constant 0 : index
    %c0_170 = arith.constant 0 : index
    %241 = vector.load %arg12[%c0_169, %c0_170] : memref<2x1024xf32, #tpu.memory_space<vmem>>, vector<2x1024xf32>
    tpu.vector_store %arg12[%c0_169, %c0_170], %240 {strides = array<i32>} : memref<2x1024xf32, #tpu.memory_space<vmem>>, vector<2x1024xf32>,
    %242 = arith.truncf %240 : vector<2x1024xf32> to vector<2x1024xbf16>
    %c0_171 = arith.constant 0 : index
    %c0_172 = arith.constant 0 : index
    %243 = vector.load %arg10[%c0_171, %c0_172] : memref<1024x128xbf16, #tpu.memory_space<vmem>>, vector<1024x128xbf16>
    %cst_173 = arith.constant dense<0.000000e+00> : vector<2x128xf32>
    %244 = tpu.matmul %242, %243, %cst_173 {dimension_numbers = #tpu.dot_dimension_numbers<[1], [0], [0], [1], [0, 0, 1, 1], [], []>} : vector<2x1024xbf16>, vector<1024x128xbf16>, vector<2x128xf32> -> vector<2x128xf32>
    %c0_174 = arith.constant 0 : index
    %c0_175 = arith.constant 0 : index
    %245 = vector.load %arg11[%c0_174, %c0_175] : memref<1x128xf32, #tpu.memory_space<vmem>>, vector<1x128xf32>
    %246 = vector.broadcast %245 : vector<1x128xf32> to vector<2x128xf32>
    %247 = arith.addf %244, %246 : vector<2x128xf32>
    %c0_176 = arith.constant 0 : index
    %c0_177 = arith.constant 0 : index
    %248 = vector.load %arg13[%c0_176, %c0_177] : memref<2x128xf32, #tpu.memory_space<vmem>>, vector<2x128xf32>
    tpu.vector_store %arg13[%c0_176, %c0_177], %247 {strides = array<i32>} : memref<2x128xf32, #tpu.memory_space<vmem>>, vector<2x128xf32>,
    return
  }
  func.func @transform_0(%arg0: i32) -> (i32, i32) {
    %c0_i32 = arith.constant 0 : i32
    %c0_i32_0 = arith.constant 0 : i32
    return %arg0, %c0_i32 : i32, i32
  }
  func.func @transform_1(%arg0: i32) -> (i32, i32) {
    %c0_i32 = arith.constant 0 : i32
    %c0_i32_0 = arith.constant 0 : i32
    %c0_i32_1 = arith.constant 0 : i32
    return %c0_i32, %c0_i32_0 : i32, i32
  }
  func.func @transform_2(%arg0: i32) -> (i32, i32) {
    %c0_i32 = arith.constant 0 : i32
    %c0_i32_0 = arith.constant 0 : i32
    %c0_i32_1 = arith.constant 0 : i32
    return %c0_i32, %c0_i32_0 : i32, i32
  }
  func.func @transform_3(%arg0: i32) -> (i32, i32) {
    %c0_i32 = arith.constant 0 : i32
    %c0_i32_0 = arith.constant 0 : i32
    %c0_i32_1 = arith.constant 0 : i32
    return %c0_i32, %c0_i32_0 : i32, i32
  }
  func.func @transform_4(%arg0: i32) -> (i32, i32) {
    %c0_i32 = arith.constant 0 : i32
    %c0_i32_0 = arith.constant 0 : i32
    %c0_i32_1 = arith.constant 0 : i32
    return %c0_i32, %c0_i32_0 : i32, i32
  }
  func.func @transform_5(%arg0: i32) -> (i32, i32, i32) {
    %c0_i32 = arith.constant 0 : i32
    %c0_i32_0 = arith.constant 0 : i32
    %c0_i32_1 = arith.constant 0 : i32
    %c0_i32_2 = arith.constant 0 : i32
    return %c0_i32, %c0_i32_0, %c0_i32_1 : i32, i32, i32
  }
  func.func @transform_6(%arg0: i32) -> (i32, i32, i32) {
    %c0_i32 = arith.constant 0 : i32
    %c0_i32_0 = arith.constant 0 : i32
    %c0_i32_1 = arith.constant 0 : i32
    %c0_i32_2 = arith.constant 0 : i32
    return %c0_i32, %c0_i32_0, %c0_i32_1 : i32, i32, i32
  }
  func.func @transform_7(%arg0: i32) -> (i32, i32, i32) {
    %c0_i32 = arith.constant 0 : i32
    %c0_i32_0 = arith.constant 0 : i32
    %c0_i32_1 = arith.constant 0 : i32
    %c0_i32_2 = arith.constant 0 : i32
    return %c0_i32, %c0_i32_0, %c0_i32_1 : i32, i32, i32
  }
  func.func @transform_8(%arg0: i32) -> (i32, i32, i32) {
    %c0_i32 = arith.constant 0 : i32
    %c0_i32_0 = arith.constant 0 : i32
    %c0_i32_1 = arith.constant 0 : i32
    %c0_i32_2 = arith.constant 0 : i32
    return %c0_i32, %c0_i32_0, %c0_i32_1 : i32, i32, i32
  }
  func.func @transform_9(%arg0: i32) -> (i32, i32) {
    %c0_i32 = arith.constant 0 : i32
    %c0_i32_0 = arith.constant 0 : i32
    %c0_i32_1 = arith.constant 0 : i32
    return %c0_i32, %c0_i32_0 : i32, i32
  }
  func.func @transform_10(%arg0: i32) -> (i32, i32) {
    %c0_i32 = arith.constant 0 : i32
    %c0_i32_0 = arith.constant 0 : i32
    %c0_i32_1 = arith.constant 0 : i32
    return %c0_i32, %c0_i32_0 : i32, i32
  }
  func.func @transform_11(%arg0: i32) -> (i32, i32) {
    %c0_i32 = arith.constant 0 : i32
    %c0_i32_0 = arith.constant 0 : i32
    return %arg0, %c0_i32 : i32, i32
  }
  func.func @transform_12(%arg0: i32) -> (i32, i32) {
    %c0_i32 = arith.constant 0 : i32
    %c0_i32_0 = arith.constant 0 : i32
    return %arg0, %c0_i32 : i32, i32
  }
}

</mosaic_0001>

<llo_original>
// kernel: tpu_custom_call.1
$region0: #{tpu_custom_call.1}
  #allocation0 [shape = 'u32[]', space=smem, size = 0x4, offset = 0x4, fixed_abs, tag = 'smem constant byte address 0x4 - core index']
  #allocation1 [shape = 'u32[144,128]{1,0:T(1,128)}', space=vmem, size = 0x12000, scoped, tag = 'internal scratch']
  #allocation2 [shape = 'f32[16,256]{1,0:T(8,128)}', space=vmem, size = 0x4000, scoped, tag = 'scratch operand']
  %s0 = inlined_call_operand.vmem [shape: bf16[384,4], index: 0, kind: input, shape index: {}]
  %s1 = inlined_call_operand.vmem [shape: bf16[4,256], index: 1, kind: input, shape index: {}]
  %s2 = inlined_call_operand.vmem [shape: f32[1,256], index: 2, kind: input, shape index: {}]
  %s3 = inlined_call_operand.hbm [shape: bf16[256,768], index: 3, kind: input, shape index: {}]
  %s4 = inlined_call_operand.vmem [shape: f32[1,768], index: 4, kind: input, shape index: {}]
  %s5 = inlined_call_operand.hbm [shape: bf16[8,256,128], index: 5, kind: input, shape index: {}]
  %s6 = inlined_call_operand.vmem [shape: f32[8,1,128], index: 6, kind: input, shape index: {}]
  %s7 = inlined_call_operand.vmem [shape: f32[8,1,128], index: 7, kind: input, shape index: {}]
  %s8 = inlined_call_operand.vmem [shape: f32[8,1,128], index: 8, kind: input, shape index: {}]
  %s9 = inlined_call_operand.hbm [shape: bf16[1024,128], index: 9, kind: input, shape index: {}]
  %s10 = inlined_call_operand.vmem [shape: f32[1,128], index: 10, kind: input, shape index: {}]
  %s11 = inlined_call_operand.hbm [shape: f32[2,1024], index: 11, kind: output, shape index: {0}]
  %s12 = inlined_call_operand.hbm [shape: f32[2,128], index: 12, kind: output, shape index: {1}]
  %13 = xla_tuple %s11, %s12
  %s14 = sld [smem:[#allocation0]]
  $region74: #{tpu_custom_call.1} parent=0
    _
  %s16 = ssub.s32 1, %s14
  %s17 = scalar_select 0, %s16, %s14
  $region1: #{tpu_custom_call.1} parent=0
    #allocation3 [shape = 'u8[393216]{0}', space=vmem, size = 0x60000, scoped, tag = 'input window, operand 3, single buffered']
    #allocation4 [shape = 's32[1]{0}', space=sflag, size = 0x4, scoped, tag = 'scoped memory for tpu_custom_call.1']
    #allocation5 [shape = 's32[1]{0}', space=sflag, size = 0x4, scoped, tag = 'scoped memory for tpu_custom_call.1']
    #allocation6 [shape = 'u8[524288]{0}', space=vmem, size = 0x80000, scoped, tag = 'input window, operand 5, single buffered']
    #allocation7 [shape = 's32[1]{0}', space=sflag, size = 0x4, scoped, tag = 'scoped memory for tpu_custom_call.1']
    #allocation8 [shape = 'u8[262144]{0}', space=vmem, size = 0x40000, scoped, tag = 'input window, operand 9, single buffered']
    #allocation9 [shape = 'u8[8192]{0}', space=vmem, size = 0x2000, scoped, tag = 'output window, operand 0, single buffered']
    #allocation10 [shape = 'u8[1024]{0}', space=vmem, size = 0x400, scoped, tag = 'output window, operand 1, single buffered']
    #allocation11 [shape = 's32[1]{0}', space=sflag, size = 0x4, scoped, tag = 'scoped memory for tpu_custom_call.1']
    %18 = vsyncpa [#allocation4], 0
    %19 = vsyncpa [#allocation7], 0
    %20 = vsyncpa [#allocation5], 0
    %21 = vsyncpa [#allocation11], 0
    // Predicated region
    $region2: #{tpu_custom_call.1} parent=1 // pred_check
      _
    $region3: #{tpu_custom_call.1} parent=1 // pred_check_branch
      %23 = sbr.rel (0) target = $region5
    $region4: #{tpu_custom_call.1} parent=1 // pred_region
      _
    $region5: #{tpu_custom_call.1} parent=1 // pred_fallthru
      _
    // Predicated region
    $region6: #{tpu_custom_call.1} parent=1 // pred_check
      _
    $region7: #{tpu_custom_call.1} parent=1 // pred_check_branch
      %25 = sbr.rel (0) target = $region9
    $region8: #{tpu_custom_call.1} parent=1 // pred_region
      _
    $region9: #{tpu_custom_call.1} parent=1 // pred_fallthru
      _
    // Predicated region
    $region10: #{tpu_custom_call.1} parent=1 // pred_check
      _
    $region11: #{tpu_custom_call.1} parent=1 // pred_check_branch
      %27 = sbr.rel (0) target = $region13
    $region12: #{tpu_custom_call.1} parent=1 // pred_region
      _
    $region13: #{tpu_custom_call.1} parent=1 // pred_fallthru
      _
    // Predicated region
    $region14: #{tpu_custom_call.1} parent=1 // pred_check
      _
    $region15: #{tpu_custom_call.1} parent=1 // pred_check_branch
      %29 = sbr.rel (0) target = $region17
    $region16: #{tpu_custom_call.1} parent=1 // pred_region
      %s31 = ssub.s32 12288, 12288
      %32 = vsyncadd [#allocation4], %s31
      %s33 = sshll.u32 [#allocation3], 4
      %s34 = int_to_ptr.vmem [resolvable:$true] %s33
      %39 = dma.hbm_to_vmem [thread:$0]  %s3, 12288, %s34, [#allocation4], 384, 384, 24
    $region17: #{tpu_custom_call.1} parent=1 // pred_fallthru
      _
    // Predicated region
    $region18: #{tpu_custom_call.1} parent=1 // pred_check
      _
    $region19: #{tpu_custom_call.1} parent=1 // pred_check_branch
      %41 = sbr.rel (0) target = $region21
    $region20: #{tpu_custom_call.1} parent=1 // pred_region
      _
    $region21: #{tpu_custom_call.1} parent=1 // pred_fallthru
      _
    // Predicated region
    $region22: #{tpu_custom_call.1} parent=1 // pred_check
      _
    $region23: #{tpu_custom_call.1} parent=1 // pred_check_branch
      %43 = sbr.rel (0) target = $region25
    $region24: #{tpu_custom_call.1} parent=1 // pred_region
      %s45 = ssub.s32 16384, 16384
      %46 = vsyncadd [#allocation7], %s45
      %s47 = sshll.u32 [#allocation6], 4
      %s48 = int_to_ptr.vmem [resolvable:$true] %s47
      %53 = dma.hbm_to_vmem [thread:$0]  %s5, 16384, %s48, [#allocation7], 64, 64, 4
    $region25: #{tpu_custom_call.1} parent=1 // pred_fallthru
      _
    // Predicated region
    $region26: #{tpu_custom_call.1} parent=1 // pred_check
      _
    $region27: #{tpu_custom_call.1} parent=1 // pred_check_branch
      %55 = sbr.rel (0) target = $region29
    $region28: #{tpu_custom_call.1} parent=1 // pred_region
      _
    $region29: #{tpu_custom_call.1} parent=1 // pred_fallthru
      _
    // Predicated region
    $region30: #{tpu_custom_call.1} parent=1 // pred_check
      _
    $region31: #{tpu_custom_call.1} parent=1 // pred_check_branch
      %57 = sbr.rel (0) target = $region33
    $region32: #{tpu_custom_call.1} parent=1 // pred_region
      _
    $region33: #{tpu_custom_call.1} parent=1 // pred_fallthru
      _
    // Predicated region
    $region34: #{tpu_custom_call.1} parent=1 // pred_check
      _
    $region35: #{tpu_custom_call.1} parent=1 // pred_check_branch
      %59 = sbr.rel (0) target = $region37
    $region36: #{tpu_custom_call.1} parent=1 // pred_region
      _
    $region37: #{tpu_custom_call.1} parent=1 // pred_fallthru
      _
    // Predicated region
    $region38: #{tpu_custom_call.1} parent=1 // pred_check
      _
    $region39: #{tpu_custom_call.1} parent=1 // pred_check_branch
      %61 = sbr.rel (0) target = $region41
    $region40: #{tpu_custom_call.1} parent=1 // pred_region
      %s63 = ssub.s32 8192, 8192
      %64 = vsyncadd [#allocation7], %s63
      %s65 = sshll.u32 [#allocation8], 4
      %s66 = int_to_ptr.vmem [resolvable:$true] %s65
      %71 = dma.hbm_to_vmem [thread:$0]  %s9, 8192, %s66, [#allocation7], 64, 64, 4
    $region41: #{tpu_custom_call.1} parent=1 // pred_fallthru
      _
    // Predicated region
    $region42: #{tpu_custom_call.1} parent=1 // pred_check
      _
    $region43: #{tpu_custom_call.1} parent=1 // pred_check_branch
      %73 = sbr.rel (0) target = $region45
    $region44: #{tpu_custom_call.1} parent=1 // pred_region
      _
    $region45: #{tpu_custom_call.1} parent=1 // pred_fallthru
      _
    // Predicated region
    $region46: #{tpu_custom_call.1} parent=1 // pred_check
      _
    $region47: #{tpu_custom_call.1} parent=1 // pred_check_branch
      %75 = sbr.rel (0) target = $region49
    $region48: #{tpu_custom_call.1} parent=1 // pred_region
      %76 = dma.done [#allocation4], 12288
    $region49: #{tpu_custom_call.1} parent=1 // pred_fallthru
      _
    // Predicated region
    $region50: #{tpu_custom_call.1} parent=1 // pred_check
      _
    $region51: #{tpu_custom_call.1} parent=1 // pred_check_branch
      %78 = sbr.rel (0) target = $region53
    $region52: #{tpu_custom_call.1} parent=1 // pred_region
      %79 = dma.done [#allocation7], 16384
    $region53: #{tpu_custom_call.1} parent=1 // pred_fallthru
      _
    // Predicated region
    $region54: #{tpu_custom_call.1} parent=1 // pred_check
      _
    $region55: #{tpu_custom_call.1} parent=1 // pred_check_branch
      %81 = sbr.rel (0) target = $region57
    $region56: #{tpu_custom_call.1} parent=1 // pred_region
      %82 = dma.done [#allocation7], 8192
    $region57: #{tpu_custom_call.1} parent=1 // pred_fallthru
      _
    %v84 = vld [vmem:[%s0] sm:$0xf]
    %v85 = vld [vmem:[%s0 + $0x4] sm:$0xf]
    %v86 = vld [vmem:[%s0 + $0x8] sm:$0xf]
    %v87 = vld [vmem:[%s0 + $0xc] sm:$0xf]
    %v88 = vld [vmem:[%s0 + $0x10] sm:$0xf]
    %v89 = vld [vmem:[%s0 + $0x14] sm:$0xf]
    %v90 = vld [vmem:[%s0 + $0x18] sm:$0xf]
    %v91 = vld [vmem:[%s0 + $0x1c] sm:$0xf]
    %v92 = vld [vmem:[%s0 + $0x20] sm:$0xf]
    %v93 = vld [vmem:[%s0 + $0x24] sm:$0xf]
    %v94 = vld [vmem:[%s0 + $0x28] sm:$0xf]
    %v95 = vld [vmem:[%s0 + $0x2c] sm:$0xf]
    %v96 = vld [vmem:[%s0 + $0x30] sm:$0xf]
    %v97 = vld [vmem:[%s0 + $0x34] sm:$0xf]
    %v98 = vld [vmem:[%s0 + $0x38] sm:$0xf]
    %v99 = vld [vmem:[%s0 + $0x3c] sm:$0xf]
    %v100 = vld [vmem:[%s0 + $0x40] sm:$0xf]
    %v101 = vld [vmem:[%s0 + $0x44] sm:$0xf]
    %v102 = vld [vmem:[%s0 + $0x48] sm:$0xf]
    %v103 = vld [vmem:[%s0 + $0x4c] sm:$0xf]
    %v104 = vld [vmem:[%s0 + $0x50] sm:$0xf]
    %v105 = vld [vmem:[%s0 + $0x54] sm:$0xf]
    %v106 = vld [vmem:[%s0 + $0x58] sm:$0xf]
    %v107 = vld [vmem:[%s0 + $0x5c] sm:$0xf]
    %v108 = vld [vmem:[%s0 + $0x60] sm:$0xf]
    %v109 = vld [vmem:[%s0 + $0x64] sm:$0xf]
    %v110 = vld [vmem:[%s0 + $0x68] sm:$0xf]
    %v111 = vld [vmem:[%s0 + $0x6c] sm:$0xf]
    %v112 = vld [vmem:[%s0 + $0x70] sm:$0xf]
    %v113 = vld [vmem:[%s0 + $0x74] sm:$0xf]
    %v114 = vld [vmem:[%s0 + $0x78] sm:$0xf]
    %v115 = vld [vmem:[%s0 + $0x7c] sm:$0xf]
    %v116 = vld [vmem:[%s0 + $0x80] sm:$0xf]
    %v117 = vld [vmem:[%s0 + $0x84] sm:$0xf]
    %v118 = vld [vmem:[%s0 + $0x88] sm:$0xf]
    %v119 = vld [vmem:[%s0 + $0x8c] sm:$0xf]
    %v120 = vld [vmem:[%s0 + $0x90] sm:$0xf]
    %v121 = vld [vmem:[%s0 + $0x94] sm:$0xf]
    %v122 = vld [vmem:[%s0 + $0x98] sm:$0xf]
    %v123 = vld [vmem:[%s0 + $0x9c] sm:$0xf]
    %v124 = vld [vmem:[%s0 + $0xa0] sm:$0xf]
    %v125 = vld [vmem:[%s0 + $0xa4] sm:$0xf]
    %v126 = vld [vmem:[%s0 + $0xa8] sm:$0xf]
    %v127 = vld [vmem:[%s0 + $0xac] sm:$0xf]
    %v128 = vld [vmem:[%s0 + $0xb0] sm:$0xf]
    %v129 = vld [vmem:[%s0 + $0xb4] sm:$0xf]
    %v130 = vld [vmem:[%s0 + $0xb8] sm:$0xf]
    %v131 = vld [vmem:[%s0 + $0xbc] sm:$0xf]
    %v132 = vld [vmem:[%s1] sm:$0xf]
    %v133 = vld [vmem:[%s2] sm:$0x3]
    %v135 = vlaneseq
    %v136 = vshrl.u32 %v135, 7
    %v137 = vsub.s32 0, %v136
    %v138 = vrot.slane %v133, %v137
    %v139 = vlaneseq
    %v140 = vshrl.u32 %v139, 7
    %v141 = vsub.s32 1, %v140
    %v142 = vrot.slane %v133, %v141
    %v193 = vunpack.c.l.b16 %v84
    %v194 = vunpack.c.l.b16 %v85
    %v195 = vunpack.c.l.b16 %v86
    %v196 = vunpack.c.l.b16 %v87
    %v197 = vunpack.c.l.b16 %v88
    %v198 = vunpack.c.l.b16 %v89
    %v199 = vunpack.c.l.b16 %v90
    %v200 = vunpack.c.l.b16 %v91
    %v201 = vunpack.c.l.b16 %v92
    %v202 = vunpack.c.l.b16 %v93
    %v203 = vunpack.c.l.b16 %v94
    %v204 = vunpack.c.l.b16 %v95
    %v205 = vunpack.c.l.b16 %v96
    %v206 = vunpack.c.l.b16 %v97
    %v207 = vunpack.c.l.b16 %v98
    %v208 = vunpack.c.l.b16 %v99
    %v209 = vunpack.c.l.b16 %v100
    %v210 = vunpack.c.l.b16 %v101
    %v211 = vunpack.c.l.b16 %v102
    %v212 = vunpack.c.l.b16 %v103
    %v213 = vunpack.c.l.b16 %v104
    %v214 = vunpack.c.l.b16 %v105
    %v215 = vunpack.c.l.b16 %v106
    %v216 = vunpack.c.l.b16 %v107
    %v217 = vunpack.c.l.b16 %v108
    %v218 = vunpack.c.l.b16 %v109
    %v219 = vunpack.c.l.b16 %v110
    %v220 = vunpack.c.l.b16 %v111
    %v221 = vunpack.c.l.b16 %v112
    %v222 = vunpack.c.l.b16 %v113
    %v223 = vunpack.c.l.b16 %v114
    %v224 = vunpack.c.l.b16 %v115
    %v225 = vunpack.c.l.b16 %v116
    %v226 = vunpack.c.l.b16 %v117
    %v227 = vunpack.c.l.b16 %v118
    %v228 = vunpack.c.l.b16 %v119
    %v229 = vunpack.c.l.b16 %v120
    %v230 = vunpack.c.l.b16 %v121
    %v231 = vunpack.c.l.b16 %v122
    %v232 = vunpack.c.l.b16 %v123
    %v233 = vunpack.c.l.b16 %v124
    %v234 = vunpack.c.l.b16 %v125
    %v235 = vunpack.c.l.b16 %v126
    %v236 = vunpack.c.l.b16 %v127
    %v237 = vunpack.c.l.b16 %v128
    %v238 = vunpack.c.l.b16 %v129
    %v239 = vunpack.c.l.b16 %v130
    %v240 = vunpack.c.l.b16 %v131
    %v241 = vpack.c.b16 %v194, %v193
    %v242 = vpack.c.b16 %v196, %v195
    %v243 = vpack.c.b16 %v198, %v197
    %v244 = vpack.c.b16 %v200, %v199
    %v245 = vpack.c.b16 %v202, %v201
    %v246 = vpack.c.b16 %v204, %v203
    %v247 = vpack.c.b16 %v206, %v205
    %v248 = vpack.c.b16 %v208, %v207
    %v249 = vpack.c.b16 %v210, %v209
    %v250 = vpack.c.b16 %v212, %v211
    %v251 = vpack.c.b16 %v214, %v213
    %v252 = vpack.c.b16 %v216, %v215
    %v253 = vpack.c.b16 %v218, %v217
    %v254 = vpack.c.b16 %v220, %v219
    %v255 = vpack.c.b16 %v222, %v221
    %v256 = vpack.c.b16 %v224, %v223
    %v257 = vpack.c.b16 %v226, %v225
    %v258 = vpack.c.b16 %v228, %v227
    %v259 = vpack.c.b16 %v230, %v229
    %v260 = vpack.c.b16 %v232, %v231
    %v261 = vpack.c.b16 %v234, %v233
    %v262 = vpack.c.b16 %v236, %v235
    %v263 = vpack.c.b16 %v238, %v237
    %v264 = vpack.c.b16 %v240, %v239
    %v267 = vunpack.c.l.s4 1983009808
    %v268 = vunpack.c.0.s8 %v267
    %v269 = vlaneseq
    %v270 = vshrl.u32 %v269, 7
    %v271 = vsub.s32 %v268, %v270
    %v272 = vrot.slane %v132, %v271
    %v273 = vcombine.high %v272, %v272
    %vm274 = vcmask 31744
    %v276 = vsel %vm274, %v241, 0
    %v279 = vsel %vm274, %v242, 0
    %v282 = vsel %vm274, %v243, 0
    %v285 = vsel %vm274, %v244, 0
    %v288 = vsel %vm274, %v245, 0
    %v291 = vsel %vm274, %v246, 0
    %v294 = vsel %vm274, %v247, 0
    %v297 = vsel %vm274, %v248, 0
    %v300 = vsel %vm274, %v249, 0
    %v303 = vsel %vm274, %v250, 0
    %v306 = vsel %vm274, %v251, 0
    %v309 = vsel %vm274, %v252, 0
    %v312 = vsel %vm274, %v253, 0
    %v315 = vsel %vm274, %v254, 0
    %v318 = vsel %vm274, %v255, 0
    %v321 = vsel %vm274, %v256, 0
    %v324 = vsel %vm274, %v257, 0
    %v327 = vsel %vm274, %v258, 0
    %v330 = vsel %vm274, %v259, 0
    %v333 = vsel %vm274, %v260, 0
    %v336 = vsel %vm274, %v261, 0
    %v339 = vsel %vm274, %v262, 0
    %v342 = vsel %vm274, %v263, 0
    %v345 = vsel %vm274, %v264, 0
    %vm347 = vcmask 1041408
    %v349 = vsel %vm347, %v272, 0
    %v352 = vsel %vm347, %v273, 0
    %354 = vmatprep.subr.bf16.mxu0 0
    %355 = vmatpush1.bf16.msra.mxu0 0
    %356 = vmatprep.subr.bf16.mxu0 0
    %357 = vmatpush1.bf16.msra.mxu0 0
    %358 = vmatprep.subr.bf16.mxu0 0
    %359 = vmatpush1.bf16.msra.mxu0 0
    %360 = vmatprep.subr.bf16.mxu0 0
    %361 = vmatpush1.bf16.msra.mxu0 0
    %362 = vmatprep.subr.bf16.mxu0 0
    %363 = vmatpush1.bf16.msra.mxu0 0
    %364 = vmatprep.subr.bf16.mxu0 0
    %365 = vmatpush1.bf16.msra.mxu0 0
    %366 = vmatprep.subr.bf16.mxu0 0
    %367 = vmatpush1.bf16.msra.mxu0 0
    %368 = vmatprep.subr.bf16.mxu0 %v352
    %369 = vmatpush1.bf16.msra.mxu0 %v349
    %370 = vmatprep.subr.bf16.mxu0 0
    %371 = vmatpush2.bf16.msra.mxu0 0
    %372 = vmatprep.subr.bf16.mxu0 0
    %373 = vmatpush2.bf16.msra.mxu0 0
    %374 = vmatprep.subr.bf16.mxu0 0
    %375 = vmatpush2.bf16.msra.mxu0 0
    %376 = vmatprep.subr.bf16.mxu0 0
    %377 = vmatpush2.bf16.msra.mxu0 0
    %378 = vmatprep.subr.bf16.mxu0 0
    %379 = vmatpush2.bf16.msra.mxu0 0
    %380 = vmatprep.subr.bf16.mxu0 0
    %381 = vmatpush2.bf16.msra.mxu0 0
    %382 = vmatprep.subr.bf16.mxu0 0
    %383 = vmatpush2.bf16.msra.mxu0 0
    %384 = vmatprep.subr.bf16.mxu0 0
    %385 = vmatpush2.bf16.msra.mxu0 0
    %386 = vmatprep.mubr.bf16.mxu0 0
    %387 = vmatmul.mubr.bf16.gmra.mxu0 %v276
    %v388 = vpop.f32.mrf.mxu0
    %v389 = vadd.f32 %v138, %v388
    %v390 = vpop.f32.mrf.mxu0
    %v391 = vadd.f32 %v142, %v390
    %v392 = vpop.f32.mrf.mxu0
    %v393 = vadd.f32 %v138, %v392
    %v394 = vpop.f32.mrf.mxu0
    %v395 = vadd.f32 %v142, %v394
    %396 = vmatprep.mubr.bf16.mxu0 0
    %397 = vmatmul.mubr.bf16.gmra.mxu0 %v279
    %v398 = vpop.f32.mrf.mxu0
    %v399 = vadd.f32 %v138, %v398
    %v400 = vpop.f32.mrf.mxu0
    %v401 = vadd.f32 %v142, %v400
    %v402 = vpop.f32.mrf.mxu0
    %v403 = vadd.f32 %v138, %v402
    %v404 = vpop.f32.mrf.mxu0
    %v405 = vadd.f32 %v142, %v404
    %406 = vmatprep.mubr.bf16.mxu0 0
    %407 = vmatmul.mubr.bf16.gmra.mxu0 %v282
    %v408 = vpop.f32.mrf.mxu0
    %v409 = vadd.f32 %v138, %v408
    %v410 = vpop.f32.mrf.mxu0
    %v411 = vadd.f32 %v142, %v410
    %v412 = vpop.f32.mrf.mxu0
    %v413 = vadd.f32 %v138, %v412
    %v414 = vpop.f32.mrf.mxu0
    %v415 = vadd.f32 %v142, %v414
    %416 = vmatprep.mubr.bf16.mxu0 0
    %417 = vmatmul.mubr.bf16.gmra.mxu0 %v285
    %v418 = vpop.f32.mrf.mxu0
    %v419 = vadd.f32 %v138, %v418
    %v420 = vpop.f32.mrf.mxu0
    %v421 = vadd.f32 %v142, %v420
    %v422 = vpop.f32.mrf.mxu0
    %v423 = vadd.f32 %v138, %v422
    %v424 = vpop.f32.mrf.mxu0
    %v425 = vadd.f32 %v142, %v424
    %426 = vmatprep.mubr.bf16.mxu0 0
    %427 = vmatmul.mubr.bf16.gmra.mxu0 %v288
    %v428 = vpop.f32.mrf.mxu0
    %v429 = vadd.f32 %v138, %v428
    %v430 = vpop.f32.mrf.mxu0
    %v431 = vadd.f32 %v142, %v430
    %v432 = vpop.f32.mrf.mxu0
    %v433 = vadd.f32 %v138, %v432
    %v434 = vpop.f32.mrf.mxu0
    %v435 = vadd.f32 %v142, %v434
    %436 = vmatprep.mubr.bf16.mxu0 0
    %437 = vmatmul.mubr.bf16.gmra.mxu0 %v291
    %v438 = vpop.f32.mrf.mxu0
    %v439 = vadd.f32 %v138, %v438
    %v440 = vpop.f32.mrf.mxu0
    %v441 = vadd.f32 %v142, %v440
    %v442 = vpop.f32.mrf.mxu0
    %v443 = vadd.f32 %v138, %v442
    %v444 = vpop.f32.mrf.mxu0
    %v445 = vadd.f32 %v142, %v444
    %446 = vmatprep.mubr.bf16.mxu0 0
    %447 = vmatmul.mubr.bf16.gmra.mxu0 %v294
    %v448 = vpop.f32.mrf.mxu0
    %v449 = vadd.f32 %v138, %v448
    %v450 = vpop.f32.mrf.mxu0
    %v451 = vadd.f32 %v142, %v450
    %v452 = vpop.f32.mrf.mxu0
    %v453 = vadd.f32 %v138, %v452
    %v454 = vpop.f32.mrf.mxu0
    %v455 = vadd.f32 %v142, %v454
    %456 = vmatprep.mubr.bf16.mxu0 0
    %457 = vmatmul.mubr.bf16.gmra.mxu0 %v297
    %v458 = vpop.f32.mrf.mxu0
    %v459 = vadd.f32 %v138, %v458
    %v460 = vpop.f32.mrf.mxu0
    %v461 = vadd.f32 %v142, %v460
    %v462 = vpop.f32.mrf.mxu0
    %v463 = vadd.f32 %v138, %v462
    %v464 = vpop.f32.mrf.mxu0
    %v465 = vadd.f32 %v142, %v464
    %466 = vmatprep.mubr.bf16.mxu0 0
    %467 = vmatmul.mubr.bf16.gmra.mxu0 %v300
    %v468 = vpop.f32.mrf.mxu0
    %v469 = vadd.f32 %v138, %v468
    %v470 = vpop.f32.mrf.mxu0
    %v471 = vadd.f32 %v142, %v470
    %v472 = vpop.f32.mrf.mxu0
    %v473 = vadd.f32 %v138, %v472
    %v474 = vpop.f32.mrf.mxu0
    %v475 = vadd.f32 %v142, %v474
    %476 = vmatprep.mubr.bf16.mxu0 0
    %477 = vmatmul.mubr.bf16.gmra.mxu0 %v303
    %v478 = vpop.f32.mrf.mxu0
    %v479 = vadd.f32 %v138, %v478
    %v480 = vpop.f32.mrf.mxu0
    %v481 = vadd.f32 %v142, %v480
    %v482 = vpop.f32.mrf.mxu0
    %v483 = vadd.f32 %v138, %v482
    %v484 = vpop.f32.mrf.mxu0
    %v485 = vadd.f32 %v142, %v484
    %486 = vmatprep.mubr.bf16.mxu0 0
    %487 = vmatmul.mubr.bf16.gmra.mxu0 %v306
    %v488 = vpop.f32.mrf.mxu0
    %v489 = vadd.f32 %v138, %v488
    %v490 = vpop.f32.mrf.mxu0
    %v491 = vadd.f32 %v142, %v490
    %v492 = vpop.f32.mrf.mxu0
    %v493 = vadd.f32 %v138, %v492
    %v494 = vpop.f32.mrf.mxu0
    %v495 = vadd.f32 %v142, %v494
    %496 = vmatprep.mubr.bf16.mxu0 0
    %497 = vmatmul.mubr.bf16.gmra.mxu0 %v309
    %v498 = vpop.f32.mrf.mxu0
    %v499 = vadd.f32 %v138, %v498
    %v500 = vpop.f32.mrf.mxu0
    %v501 = vadd.f32 %v142, %v500
    %v502 = vpop.f32.mrf.mxu0
    %v503 = vadd.f32 %v138, %v502
    %v504 = vpop.f32.mrf.mxu0
    %v505 = vadd.f32 %v142, %v504
    %506 = vmatprep.mubr.bf16.mxu0 0
    %507 = vmatmul.mubr.bf16.gmra.mxu0 %v312
    %v508 = vpop.f32.mrf.mxu0
    %v509 = vadd.f32 %v138, %v508
    %v510 = vpop.f32.mrf.mxu0
    %v511 = vadd.f32 %v142, %v510
    %v512 = vpop.f32.mrf.mxu0
    %v513 = vadd.f32 %v138, %v512
    %v514 = vpop.f32.mrf.mxu0
    %v515 = vadd.f32 %v142, %v514
    %516 = vmatprep.mubr.bf16.mxu0 0
    %517 = vmatmul.mubr.bf16.gmra.mxu0 %v315
    %v518 = vpop.f32.mrf.mxu0
    %v519 = vadd.f32 %v138, %v518
    %v520 = vpop.f32.mrf.mxu0
    %v521 = vadd.f32 %v142, %v520
    %v522 = vpop.f32.mrf.mxu0
    %v523 = vadd.f32 %v138, %v522
    %v524 = vpop.f32.mrf.mxu0
    %v525 = vadd.f32 %v142, %v524
    %526 = vmatprep.mubr.bf16.mxu0 0
    %527 = vmatmul.mubr.bf16.gmra.mxu0 %v318
    %v528 = vpop.f32.mrf.mxu0
    %v529 = vadd.f32 %v138, %v528
    %v530 = vpop.f32.mrf.mxu0
    %v531 = vadd.f32 %v142, %v530
    %v532 = vpop.f32.mrf.mxu0
    %v533 = vadd.f32 %v138, %v532
    %v534 = vpop.f32.mrf.mxu0
    %v535 = vadd.f32 %v142, %v534
    %536 = vmatprep.mubr.bf16.mxu0 0
    %537 = vmatmul.mubr.bf16.gmra.mxu0 %v321
    %v538 = vpop.f32.mrf.mxu0
    %v539 = vadd.f32 %v138, %v538
    %v540 = vpop.f32.mrf.mxu0
    %v541 = vadd.f32 %v142, %v540
    %v542 = vpop.f32.mrf.mxu0
    %v543 = vadd.f32 %v138, %v542
    %v544 = vpop.f32.mrf.mxu0
    %v545 = vadd.f32 %v142, %v544
    %546 = vmatprep.mubr.bf16.mxu0 0
    %547 = vmatmul.mubr.bf16.gmra.mxu0 %v324
    %v548 = vpop.f32.mrf.mxu0
    %v549 = vadd.f32 %v138, %v548
    %v550 = vpop.f32.mrf.mxu0
    %v551 = vadd.f32 %v142, %v550
    %v552 = vpop.f32.mrf.mxu0
    %v553 = vadd.f32 %v138, %v552
    %v554 = vpop.f32.mrf.mxu0
    %v555 = vadd.f32 %v142, %v554
    %556 = vmatprep.mubr.bf16.mxu0 0
    %557 = vmatmul.mubr.bf16.gmra.mxu0 %v327
    %v558 = vpop.f32.mrf.mxu0
    %v559 = vadd.f32 %v138, %v558
    %v560 = vpop.f32.mrf.mxu0
    %v561 = vadd.f32 %v142, %v560
    %v562 = vpop.f32.mrf.mxu0
    %v563 = vadd.f32 %v138, %v562
    %v564 = vpop.f32.mrf.mxu0
    %v565 = vadd.f32 %v142, %v564
    %566 = vmatprep.mubr.bf16.mxu0 0
    %567 = vmatmul.mubr.bf16.gmra.mxu0 %v330
    %v568 = vpop.f32.mrf.mxu0
    %v569 = vadd.f32 %v138, %v568
    %v570 = vpop.f32.mrf.mxu0
    %v571 = vadd.f32 %v142, %v570
    %v572 = vpop.f32.mrf.mxu0
    %v573 = vadd.f32 %v138, %v572
    %v574 = vpop.f32.mrf.mxu0
    %v575 = vadd.f32 %v142, %v574
    %576 = vmatprep.mubr.bf16.mxu0 0
    %577 = vmatmul.mubr.bf16.gmra.mxu0 %v333
    %v578 = vpop.f32.mrf.mxu0
    %v579 = vadd.f32 %v138, %v578
    %v580 = vpop.f32.mrf.mxu0
    %v581 = vadd.f32 %v142, %v580
    %v582 = vpop.f32.mrf.mxu0
    %v583 = vadd.f32 %v138, %v582
    %v584 = vpop.f32.mrf.mxu0
    %v585 = vadd.f32 %v142, %v584
    %586 = vmatprep.mubr.bf16.mxu0 0
    %587 = vmatmul.mubr.bf16.gmra.mxu0 %v336
    %v588 = vpop.f32.mrf.mxu0
    %v589 = vadd.f32 %v138, %v588
    %v590 = vpop.f32.mrf.mxu0
    %v591 = vadd.f32 %v142, %v590
    %v592 = vpop.f32.mrf.mxu0
    %v593 = vadd.f32 %v138, %v592
    %v594 = vpop.f32.mrf.mxu0
    %v595 = vadd.f32 %v142, %v594
    %596 = vmatprep.mubr.bf16.mxu0 0
    %597 = vmatmul.mubr.bf16.gmra.mxu0 %v339
    %v598 = vpop.f32.mrf.mxu0
    %v599 = vadd.f32 %v138, %v598
    %v600 = vpop.f32.mrf.mxu0
    %v601 = vadd.f32 %v142, %v600
    %v602 = vpop.f32.mrf.mxu0
    %v603 = vadd.f32 %v138, %v602
    %v604 = vpop.f32.mrf.mxu0
    %v605 = vadd.f32 %v142, %v604
    %606 = vmatprep.mubr.bf16.mxu0 0
    %607 = vmatmul.mubr.bf16.gmra.mxu0 %v342
    %v608 = vpop.f32.mrf.mxu0
    %v609 = vadd.f32 %v138, %v608
    %v610 = vpop.f32.mrf.mxu0
    %v611 = vadd.f32 %v142, %v610
    %v612 = vpop.f32.mrf.mxu0
    %v613 = vadd.f32 %v138, %v612
    %v614 = vpop.f32.mrf.mxu0
    %v615 = vadd.f32 %v142, %v614
    %616 = vmatprep.mubr.bf16.mxu0 0
    %617 = vmatmul.mubr.bf16.gmra.mxu0 %v345
    %v618 = vpop.f32.mrf.mxu0
    %v619 = vadd.f32 %v138, %v618
    %v620 = vpop.f32.mrf.mxu0
    %v621 = vadd.f32 %v142, %v620
    %v622 = vpop.f32.mrf.mxu0
    %v623 = vadd.f32 %v138, %v622
    %v624 = vpop.f32.mrf.mxu0
    %v625 = vadd.f32 %v142, %v624
    %626 = vdwg.mxu0
    %v627 = vmax.f32 %v389, 0.0
    %v628 = vmax.f32 %v391, 0.0
    %v629 = vmax.f32 %v393, 0.0
    %v630 = vmax.f32 %v395, 0.0
    %v631 = vmax.f32 %v399, 0.0
    %v632 = vmax.f32 %v401, 0.0
    %v633 = vmax.f32 %v403, 0.0
    %v634 = vmax.f32 %v405, 0.0
    %v635 = vmax.f32 %v409, 0.0
    %v636 = vmax.f32 %v411, 0.0
    %v637 = vmax.f32 %v413, 0.0
    %v638 = vmax.f32 %v415, 0.0
    %v639 = vmax.f32 %v419, 0.0
    %v640 = vmax.f32 %v421, 0.0
    %v641 = vmax.f32 %v423, 0.0
    %v642 = vmax.f32 %v425, 0.0
    %v643 = vmax.f32 %v429, 0.0
    %v644 = vmax.f32 %v431, 0.0
    %v645 = vmax.f32 %v433, 0.0
    %v646 = vmax.f32 %v435, 0.0
    %v647 = vmax.f32 %v439, 0.0
    %v648 = vmax.f32 %v441, 0.0
    %v649 = vmax.f32 %v443, 0.0
    %v650 = vmax.f32 %v445, 0.0
    %v651 = vmax.f32 %v449, 0.0
    %v652 = vmax.f32 %v451, 0.0
    %v653 = vmax.f32 %v453, 0.0
    %v654 = vmax.f32 %v455, 0.0
    %v655 = vmax.f32 %v459, 0.0
    %v656 = vmax.f32 %v461, 0.0
    %v657 = vmax.f32 %v463, 0.0
    %v658 = vmax.f32 %v465, 0.0
    %v659 = vmax.f32 %v469, 0.0
    %v660 = vmax.f32 %v471, 0.0
    %v661 = vmax.f32 %v473, 0.0
    %v662 = vmax.f32 %v475, 0.0
    %v663 = vmax.f32 %v479, 0.0
    %v664 = vmax.f32 %v481, 0.0
    %v665 = vmax.f32 %v483, 0.0
    %v666 = vmax.f32 %v485, 0.0
    %v667 = vmax.f32 %v489, 0.0
    %v668 = vmax.f32 %v491, 0.0
    %v669 = vmax.f32 %v493, 0.0
    %v670 = vmax.f32 %v495, 0.0
    %v671 = vmax.f32 %v499, 0.0
    %v672 = vmax.f32 %v501, 0.0
    %v673 = vmax.f32 %v503, 0.0
    %v674 = vmax.f32 %v505, 0.0
    %v675 = vmax.f32 %v509, 0.0
    %v676 = vmax.f32 %v511, 0.0
    %v677 = vmax.f32 %v513, 0.0
    %v678 = vmax.f32 %v515, 0.0
    %v679 = vmax.f32 %v519, 0.0
    %v680 = vmax.f32 %v521, 0.0
    %v681 = vmax.f32 %v523, 0.0
    %v682 = vmax.f32 %v525, 0.0
    %v683 = vmax.f32 %v529, 0.0
    %v684 = vmax.f32 %v531, 0.0
    %v685 = vmax.f32 %v533, 0.0
    %v686 = vmax.f32 %v535, 0.0
    %v687 = vmax.f32 %v539, 0.0
    %v688 = vmax.f32 %v541, 0.0
    %v689 = vmax.f32 %v543, 0.0
    %v690 = vmax.f32 %v545, 0.0
    %v691 = vmax.f32 %v549, 0.0
    %v692 = vmax.f32 %v551, 0.0
    %v693 = vmax.f32 %v553, 0.0
    %v694 = vmax.f32 %v555, 0.0
    %v695 = vmax.f32 %v559, 0.0
    %v696 = vmax.f32 %v561, 0.0
    %v697 = vmax.f32 %v563, 0.0
    %v698 = vmax.f32 %v565, 0.0
    %v699 = vmax.f32 %v569, 0.0
    %v700 = vmax.f32 %v571, 0.0
    %v701 = vmax.f32 %v573, 0.0
    %v702 = vmax.f32 %v575, 0.0
    %v703 = vmax.f32 %v579, 0.0
    %v704 = vmax.f32 %v581, 0.0
    %v705 = vmax.f32 %v583, 0.0
    %v706 = vmax.f32 %v585, 0.0
    %v707 = vmax.f32 %v589, 0.0
    %v708 = vmax.f32 %v591, 0.0
    %v709 = vmax.f32 %v593, 0.0
    %v710 = vmax.f32 %v595, 0.0
    %v711 = vmax.f32 %v599, 0.0
    %v712 = vmax.f32 %v601, 0.0
    %v713 = vmax.f32 %v603, 0.0
    %v714 = vmax.f32 %v605, 0.0
    %v715 = vmax.f32 %v609, 0.0
    %v716 = vmax.f32 %v611, 0.0
    %v717 = vmax.f32 %v613, 0.0
    %v718 = vmax.f32 %v615, 0.0
    %v719 = vmax.f32 %v619, 0.0
    %v720 = vmax.f32 %v621, 0.0
    %v721 = vmax.f32 %v623, 0.0
    %v722 = vmax.f32 %v625, 0.0
    %v723 = vpack.c.bf16 %v629, %v627
    %v724 = vpack.c.bf16 %v630, %v628
    %v725 = vpack.c.bf16 %v633, %v631
    %v726 = vpack.c.bf16 %v634, %v632
    %v727 = vpack.c.bf16 %v637, %v635
    %v728 = vpack.c.bf16 %v638, %v636
    %v729 = vpack.c.bf16 %v641, %v639
    %v730 = vpack.c.bf16 %v642, %v640
    %v731 = vpack.c.bf16 %v645, %v643
    %v732 = vpack.c.bf16 %v646, %v644
    %v733 = vpack.c.bf16 %v649, %v647
    %v734 = vpack.c.bf16 %v650, %v648
    %v735 = vpack.c.bf16 %v653, %v651
    %v736 = vpack.c.bf16 %v654, %v652
    %v737 = vpack.c.bf16 %v657, %v655
    %v738 = vpack.c.bf16 %v658, %v656
    %v739 = vpack.c.bf16 %v661, %v659
    %v740 = vpack.c.bf16 %v662, %v660
    %v741 = vpack.c.bf16 %v665, %v663
    %v742 = vpack.c.bf16 %v666, %v664
    %v743 = vpack.c.bf16 %v669, %v667
    %v744 = vpack.c.bf16 %v670, %v668
    %v745 = vpack.c.bf16 %v673, %v671
    %v746 = vpack.c.bf16 %v674, %v672
    %v747 = vpack.c.bf16 %v677, %v675
    %v748 = vpack.c.bf16 %v678, %v676
    %v749 = vpack.c.bf16 %v681, %v679
    %v750 = vpack.c.bf16 %v682, %v680
    %v751 = vpack.c.bf16 %v685, %v683
    %v752 = vpack.c.bf16 %v686, %v684
    %v753 = vpack.c.bf16 %v689, %v687
    %v754 = vpack.c.bf16 %v690, %v688
    %v755 = vpack.c.bf16 %v693, %v691
    %v756 = vpack.c.bf16 %v694, %v692
    %v757 = vpack.c.bf16 %v697, %v695
    %v758 = vpack.c.bf16 %v698, %v696
    %v759 = vpack.c.bf16 %v701, %v699
    %v760 = vpack.c.bf16 %v702, %v700
    %v761 = vpack.c.bf16 %v705, %v703
    %v762 = vpack.c.bf16 %v706, %v704
    %v763 = vpack.c.bf16 %v709, %v707
    %v764 = vpack.c.bf16 %v710, %v708
    %v765 = vpack.c.bf16 %v713, %v711
    %v766 = vpack.c.bf16 %v714, %v712
    %v767 = vpack.c.bf16 %v717, %v715
    %v768 = vpack.c.bf16 %v718, %v716
    %v769 = vpack.c.bf16 %v721, %v719
    %v770 = vpack.c.bf16 %v722, %v720
    %v771 = vld [vmem:[#allocation3] sm:$0xff]
    %v772 = vld [vmem:[#allocation3 + $0x8] sm:$0xff]
    %v773 = vld [vmem:[#allocation3 + $0x10] sm:$0xff]
    %v774 = vld [vmem:[#allocation3 + $0x18] sm:$0xff]
    %v775 = vld [vmem:[#allocation3 + $0x20] sm:$0xff]
    %v776 = vld [vmem:[#allocation3 + $0x28] sm:$0xff]
    %v777 = vld [vmem:[#allocation3 + $0x30] sm:$0xff]
    %v778 = vld [vmem:[#allocation3 + $0x38] sm:$0xff]
    %v779 = vld [vmem:[#allocation3 + $0x40] sm:$0xff]
    %v780 = vld [vmem:[#allocation3 + $0x48] sm:$0xff]
    %v781 = vld [vmem:[#allocation3 + $0x50] sm:$0xff]
    %v782 = vld [vmem:[#allocation3 + $0x58] sm:$0xff]
    %v783 = vld [vmem:[#allocation3 + $0x60] sm:$0xff]
    %v784 = vld [vmem:[#allocation3 + $0x68] sm:$0xff]
    %v785 = vld [vmem:[#allocation3 + $0x70] sm:$0xff]
    %v786 = vld [vmem:[#allocation3 + $0x78] sm:$0xff]
    %v787 = vld [vmem:[#allocation3 + $0x80] sm:$0xff]
    %v788 = vld [vmem:[#allocation3 + $0x88] sm:$0xff]
    %v789 = vld [vmem:[#allocation3 + $0x90] sm:$0xff]
    %v790 = vld [vmem:[#allocation3 + $0x98] sm:$0xff]
    %v791 = vld [vmem:[#allocation3 + $0xa0] sm:$0xff]
    %v792 = vld [vmem:[#allocation3 + $0xa8] sm:$0xff]
    %v793 = vld [vmem:[#allocation3 + $0xb0] sm:$0xff]
    %v794 = vld [vmem:[#allocation3 + $0xb8] sm:$0xff]
    %v795 = vld [vmem:[#allocation3 + $0xc0] sm:$0xff]
    %v796 = vld [vmem:[#allocation3 + $0xc8] sm:$0xff]
    %v797 = vld [vmem:[#allocation3 + $0xd0] sm:$0xff]
    %v798 = vld [vmem:[#allocation3 + $0xd8] sm:$0xff]
    %v799 = vld [vmem:[#allocation3 + $0xe0] sm:$0xff]
    %v800 = vld [vmem:[#allocation3 + $0xe8] sm:$0xff]
    %v801 = vld [vmem:[#allocation3 + $0xf0] sm:$0xff]
    %v802 = vld [vmem:[#allocation3 + $0xf8] sm:$0xff]
    %v803 = vld [vmem:[#allocation3 + $0x100] sm:$0xff]
    %v804 = vld [vmem:[#allocation3 + $0x108] sm:$0xff]
    %v805 = vld [vmem:[#allocation3 + $0x110] sm:$0xff]
    %v806 = vld [vmem:[#allocation3 + $0x118] sm:$0xff]
    %v807 = vld [vmem:[#allocation3 + $0x120] sm:$0xff]
    %v808 = vld [vmem:[#allocation3 + $0x128] sm:$0xff]
    %v809 = vld [vmem:[#allocation3 + $0x130] sm:$0xff]
    %v810 = vld [vmem:[#allocation3 + $0x138] sm:$0xff]
    %v811 = vld [vmem:[#allocation3 + $0x140] sm:$0xff]
    %v812 = vld [vmem:[#allocation3 + $0x148] sm:$0xff]
    %v813 = vld [vmem:[#allocation3 + $0x150] sm:$0xff]
    %v814 = vld [vmem:[#allocation3 + $0x158] sm:$0xff]
    %v815 = vld [vmem:[#allocation3 + $0x160] sm:$0xff]
    %v816 = vld [vmem:[#allocation3 + $0x168] sm:$0xff]
    %v817 = vld [vmem:[#allocation3 + $0x170] sm:$0xff]
    %v818 = vld [vmem:[#allocation3 + $0x178] sm:$0xff]
    %v819 = vld [vmem:[#allocation3 + $0x180] sm:$0xff]
    %v820 = vld [vmem:[#allocation3 + $0x188] sm:$0xff]
    %v821 = vld [vmem:[#allocation3 + $0x190] sm:$0xff]
    %v822 = vld [vmem:[#allocation3 + $0x198] sm:$0xff]
    %v823 = vld [vmem:[#allocation3 + $0x1a0] sm:$0xff]
    %v824 = vld [vmem:[#allocation3 + $0x1a8] sm:$0xff]
    %v825 = vld [vmem:[#allocation3 + $0x1b0] sm:$0xff]
    %v826 = vld [vmem:[#allocation3 + $0x1b8] sm:$0xff]
    %v827 = vld [vmem:[#allocation3 + $0x1c0] sm:$0xff]
    %v828 = vld [vmem:[#allocation3 + $0x1c8] sm:$0xff]
    %v829 = vld [vmem:[#allocation3 + $0x1d0] sm:$0xff]
    %v830 = vld [vmem:[#allocation3 + $0x1d8] sm:$0xff]
    %v831 = vld [vmem:[#allocation3 + $0x1e0] sm:$0xff]
    %v832 = vld [vmem:[#allocation3 + $0x1e8] sm:$0xff]
    %v833 = vld [vmem:[#allocation3 + $0x1f0] sm:$0xff]
    %v834 = vld [vmem:[#allocation3 + $0x1f8] sm:$0xff]
    %v835 = vld [vmem:[#allocation3 + $0x200] sm:$0xff]
    %v836 = vld [vmem:[#allocation3 + $0x208] sm:$0xff]
    %v837 = vld [vmem:[#allocation3 + $0x210] sm:$0xff]
    %v838 = vld [vmem:[#allocation3 + $0x218] sm:$0xff]
    %v839 = vld [vmem:[#allocation3 + $0x220] sm:$0xff]
    %v840 = vld [vmem:[#allocation3 + $0x228] sm:$0xff]
    %v841 = vld [vmem:[#allocation3 + $0x230] sm:$0xff]
    %v842 = vld [vmem:[#allocation3 + $0x238] sm:$0xff]
    %v843 = vld [vmem:[#allocation3 + $0x240] sm:$0xff]
    %v844 = vld [vmem:[#allocation3 + $0x248] sm:$0xff]
    %v845 = vld [vmem:[#allocation3 + $0x250] sm:$0xff]
    %v846 = vld [vmem:[#allocation3 + $0x258] sm:$0xff]
    %v847 = vld [vmem:[#allocation3 + $0x260] sm:$0xff]
    %v848 = vld [vmem:[#allocation3 + $0x268] sm:$0xff]
    %v849 = vld [vmem:[#allocation3 + $0x270] sm:$0xff]
    %v850 = vld [vmem:[#allocation3 + $0x278] sm:$0xff]
    %v851 = vld [vmem:[#allocation3 + $0x280] sm:$0xff]
    %v852 = vld [vmem:[#allocation3 + $0x288] sm:$0xff]
    %v853 = vld [vmem:[#allocation3 + $0x290] sm:$0xff]
    %v854 = vld [vmem:[#allocation3 + $0x298] sm:$0xff]
    %v855 = vld [vmem:[#allocation3 + $0x2a0] sm:$0xff]
    %v856 = vld [vmem:[#allocation3 + $0x2a8] sm:$0xff]
    %v857 = vld [vmem:[#allocation3 + $0x2b0] sm:$0xff]
    %v858 = vld [vmem:[#allocation3 + $0x2b8] sm:$0xff]
    %v859 = vld [vmem:[#allocation3 + $0x2c0] sm:$0xff]
    %v860 = vld [vmem:[#allocation3 + $0x2c8] sm:$0xff]
    %v861 = vld [vmem:[#allocation3 + $0x2d0] sm:$0xff]
    %v862 = vld [vmem:[#allocation3 + $0x2d8] sm:$0xff]
    %v863 = vld [vmem:[#allocation3 + $0x2e0] sm:$0xff]
    %v864 = vld [vmem:[#allocation3 + $0x2e8] sm:$0xff]
    %v865 = vld [vmem:[#allocation3 + $0x2f0] sm:$0xff]
    %v866 = vld [vmem:[#allocation3 + $0x2f8] sm:$0xff]
    %v867 = vld [vmem:[%s4] sm:$0x3f]
    %v869 = vlaneseq
    %v870 = vshrl.u32 %v869, 7
    %v871 = vsub.s32 0, %v870
    %v872 = vrot.slane %v867, %v871
    %v873 = vlaneseq
    %v874 = vshrl.u32 %v873, 7
    %v875 = vsub.s32 1, %v874
    %v876 = vrot.slane %v867, %v875
    %v877 = vlaneseq
    %v878 = vshrl.u32 %v877, 7
    %v879 = vsub.s32 2, %v878
    %v880 = vrot.slane %v867, %v879
    %v881 = vlaneseq
    %v882 = vshrl.u32 %v881, 7
    %v883 = vsub.s32 3, %v882
    %v884 = vrot.slane %v867, %v883
    %v885 = vlaneseq
    %v886 = vshrl.u32 %v885, 7
    %v887 = vsub.s32 4, %v886
    %v888 = vrot.slane %v867, %v887
    %v889 = vlaneseq
    %v890 = vshrl.u32 %v889, 7
    %v891 = vsub.s32 5, %v890
    %v892 = vrot.slane %v867, %v891
    %v995 = vunpack.c.l.b16 %v771
    %v996 = vunpack.c.h.b16 %v771
    %v997 = vunpack.c.l.b16 %v772
    %v998 = vunpack.c.h.b16 %v772
    %v999 = vunpack.c.l.b16 %v773
    %v1000 = vunpack.c.h.b16 %v773
    %v1001 = vunpack.c.l.b16 %v774
    %v1002 = vunpack.c.h.b16 %v774
    %v1003 = vunpack.c.l.b16 %v775
    %v1004 = vunpack.c.h.b16 %v775
    %v1005 = vunpack.c.l.b16 %v776
    %v1006 = vunpack.c.h.b16 %v776
    %v1007 = vunpack.c.l.b16 %v777
    %v1008 = vunpack.c.h.b16 %v777
    %v1009 = vunpack.c.l.b16 %v778
    %v1010 = vunpack.c.h.b16 %v778
    %v1011 = vunpack.c.l.b16 %v779
    %v1012 = vunpack.c.h.b16 %v779
    %v1013 = vunpack.c.l.b16 %v780
    %v1014 = vunpack.c.h.b16 %v780
    %v1015 = vunpack.c.l.b16 %v781
    %v1016 = vunpack.c.h.b16 %v781
    %v1017 = vunpack.c.l.b16 %v782
    %v1018 = vunpack.c.h.b16 %v782
    %v1019 = vunpack.c.l.b16 %v783
    %v1020 = vunpack.c.h.b16 %v783
    %v1021 = vunpack.c.l.b16 %v784
    %v1022 = vunpack.c.h.b16 %v784
    %v1023 = vunpack.c.l.b16 %v785
    %v1024 = vunpack.c.h.b16 %v785
    %v1025 = vunpack.c.l.b16 %v786
    %v1026 = vunpack.c.h.b16 %v786
    %v1027 = vunpack.c.l.b16 %v787
    %v1028 = vunpack.c.h.b16 %v787
    %v1029 = vunpack.c.l.b16 %v788
    %v1030 = vunpack.c.h.b16 %v788
    %v1031 = vunpack.c.l.b16 %v789
    %v1032 = vunpack.c.h.b16 %v789
    %v1033 = vunpack.c.l.b16 %v790
    %v1034 = vunpack.c.h.b16 %v790
    %v1035 = vunpack.c.l.b16 %v791
    %v1036 = vunpack.c.h.b16 %v791
    %v1037 = vunpack.c.l.b16 %v792
    %v1038 = vunpack.c.h.b16 %v792
    %v1039 = vunpack.c.l.b16 %v793
    %v1040 = vunpack.c.h.b16 %v793
    %v1041 = vunpack.c.l.b16 %v794
    %v1042 = vunpack.c.h.b16 %v794
    %v1043 = vunpack.c.l.b16 %v795
    %v1044 = vunpack.c.h.b16 %v795
    %v1045 = vunpack.c.l.b16 %v796
    %v1046 = vunpack.c.h.b16 %v796
    %v1047 = vunpack.c.l.b16 %v797
    %v1048 = vunpack.c.h.b16 %v797
    %v1049 = vunpack.c.l.b16 %v798
    %v1050 = vunpack.c.h.b16 %v798
    %v1051 = vunpack.c.l.b16 %v799
    %v1052 = vunpack.c.h.b16 %v799
    %v1053 = vunpack.c.l.b16 %v800
    %v1054 = vunpack.c.h.b16 %v800
    %v1055 = vunpack.c.l.b16 %v801
    %v1056 = vunpack.c.h.b16 %v801
    %v1057 = vunpack.c.l.b16 %v802
    %v1058 = vunpack.c.h.b16 %v802
    %v1059 = vunpack.c.l.b16 %v803
    %v1060 = vunpack.c.h.b16 %v803
    %v1061 = vunpack.c.l.b16 %v804
    %v1062 = vunpack.c.h.b16 %v804
    %v1063 = vunpack.c.l.b16 %v805
    %v1064 = vunpack.c.h.b16 %v805
    %v1065 = vunpack.c.l.b16 %v806
    %v1066 = vunpack.c.h.b16 %v806
    %v1067 = vunpack.c.l.b16 %v807
    %v1068 = vunpack.c.h.b16 %v807
    %v1069 = vunpack.c.l.b16 %v808
    %v1070 = vunpack.c.h.b16 %v808
    %v1071 = vunpack.c.l.b16 %v809
    %v1072 = vunpack.c.h.b16 %v809
    %v1073 = vunpack.c.l.b16 %v810
    %v1074 = vunpack.c.h.b16 %v810
    %v1075 = vunpack.c.l.b16 %v811
    %v1076 = vunpack.c.h.b16 %v811
    %v1077 = vunpack.c.l.b16 %v812
    %v1078 = vunpack.c.h.b16 %v812
    %v1079 = vunpack.c.l.b16 %v813
    %v1080 = vunpack.c.h.b16 %v813
    %v1081 = vunpack.c.l.b16 %v814
    %v1082 = vunpack.c.h.b16 %v814
    %v1083 = vunpack.c.l.b16 %v815
    %v1084 = vunpack.c.h.b16 %v815
    %v1085 = vunpack.c.l.b16 %v816
    %v1086 = vunpack.c.h.b16 %v816
    %v1087 = vunpack.c.l.b16 %v817
    %v1088 = vunpack.c.h.b16 %v817
    %v1089 = vunpack.c.l.b16 %v818
    %v1090 = vunpack.c.h.b16 %v818
    %v1091 = vunpack.c.l.b16 %v819
    %v1092 = vunpack.c.h.b16 %v819
    %v1093 = vunpack.c.l.b16 %v820
    %v1094 = vunpack.c.h.b16 %v820
    %v1095 = vunpack.c.l.b16 %v821
    %v1096 = vunpack.c.h.b16 %v821
    %v1097 = vunpack.c.l.b16 %v822
    %v1098 = vunpack.c.h.b16 %v822
    %v1099 = vunpack.c.l.b16 %v823
    %v1100 = vunpack.c.h.b16 %v823
    %v1101 = vunpack.c.l.b16 %v824
    %v1102 = vunpack.c.h.b16 %v824
    %v1103 = vunpack.c.l.b16 %v825
    %v1104 = vunpack.c.h.b16 %v825
    %v1105 = vunpack.c.l.b16 %v826
    %v1106 = vunpack.c.h.b16 %v826
    %v1107 = vunpack.c.l.b16 %v827
    %v1108 = vunpack.c.h.b16 %v827
    %v1109 = vunpack.c.l.b16 %v828
    %v1110 = vunpack.c.h.b16 %v828
    %v1111 = vunpack.c.l.b16 %v829
    %v1112 = vunpack.c.h.b16 %v829
    %v1113 = vunpack.c.l.b16 %v830
    %v1114 = vunpack.c.h.b16 %v830
    %v1115 = vunpack.c.l.b16 %v831
    %v1116 = vunpack.c.h.b16 %v831
    %v1117 = vunpack.c.l.b16 %v832
    %v1118 = vunpack.c.h.b16 %v832
    %v1119 = vunpack.c.l.b16 %v833
    %v1120 = vunpack.c.h.b16 %v833
    %v1121 = vunpack.c.l.b16 %v834
    %v1122 = vunpack.c.h.b16 %v834
    %v1123 = vunpack.c.l.b16 %v835
    %v1124 = vunpack.c.h.b16 %v835
    %v1125 = vunpack.c.l.b16 %v836
    %v1126 = vunpack.c.h.b16 %v836
    %v1127 = vunpack.c.l.b16 %v837
    %v1128 = vunpack.c.h.b16 %v837
    %v1129 = vunpack.c.l.b16 %v838
    %v1130 = vunpack.c.h.b16 %v838
    %v1131 = vunpack.c.l.b16 %v839
    %v1132 = vunpack.c.h.b16 %v839
    %v1133 = vunpack.c.l.b16 %v840
    %v1134 = vunpack.c.h.b16 %v840
    %v1135 = vunpack.c.l.b16 %v841
    %v1136 = vunpack.c.h.b16 %v841
    %v1137 = vunpack.c.l.b16 %v842
    %v1138 = vunpack.c.h.b16 %v842
    %v1139 = vunpack.c.l.b16 %v843
    %v1140 = vunpack.c.h.b16 %v843
    %v1141 = vunpack.c.l.b16 %v844
    %v1142 = vunpack.c.h.b16 %v844
    %v1143 = vunpack.c.l.b16 %v845
    %v1144 = vunpack.c.h.b16 %v845
    %v1145 = vunpack.c.l.b16 %v846
    %v1146 = vunpack.c.h.b16 %v846
    %v1147 = vunpack.c.l.b16 %v847
    %v1148 = vunpack.c.h.b16 %v847
    %v1149 = vunpack.c.l.b16 %v848
    %v1150 = vunpack.c.h.b16 %v848
    %v1151 = vunpack.c.l.b16 %v849
    %v1152 = vunpack.c.h.b16 %v849
    %v1153 = vunpack.c.l.b16 %v850
    %v1154 = vunpack.c.h.b16 %v850
    %v1155 = vunpack.c.l.b16 %v851
    %v1156 = vunpack.c.h.b16 %v851
    %v1157 = vunpack.c.l.b16 %v852
    %v1158 = vunpack.c.h.b16 %v852
    %v1159 = vunpack.c.l.b16 %v853
    %v1160 = vunpack.c.h.b16 %v853
    %v1161 = vunpack.c.l.b16 %v854
    %v1162 = vunpack.c.h.b16 %v854
    %v1163 = vunpack.c.l.b16 %v855
    %v1164 = vunpack.c.h.b16 %v855
    %v1165 = vunpack.c.l.b16 %v856
    %v1166 = vunpack.c.h.b16 %v856
    %v1167 = vunpack.c.l.b16 %v857
    %v1168 = vunpack.c.h.b16 %v857
    %v1169 = vunpack.c.l.b16 %v858
    %v1170 = vunpack.c.h.b16 %v858
    %v1171 = vunpack.c.l.b16 %v859
    %v1172 = vunpack.c.h.b16 %v859
    %v1173 = vunpack.c.l.b16 %v860
    %v1174 = vunpack.c.h.b16 %v860
    %v1175 = vunpack.c.l.b16 %v861
    %v1176 = vunpack.c.h.b16 %v861
    %v1177 = vunpack.c.l.b16 %v862
    %v1178 = vunpack.c.h.b16 %v862
    %v1179 = vunpack.c.l.b16 %v863
    %v1180 = vunpack.c.h.b16 %v863
    %v1181 = vunpack.c.l.b16 %v864
    %v1182 = vunpack.c.h.b16 %v864
    %v1183 = vunpack.c.l.b16 %v865
    %v1184 = vunpack.c.h.b16 %v865
    %v1185 = vunpack.c.l.b16 %v866
    %v1186 = vunpack.c.h.b16 %v866
    %v1187 = vpack.c.b16 %v1001, %v995
    %v1188 = vpack.c.b16 %v1002, %v996
    %v1189 = vpack.c.b16 %v1003, %v997
    %v1190 = vpack.c.b16 %v1004, %v998
    %v1191 = vpack.c.b16 %v1005, %v999
    %v1192 = vpack.c.b16 %v1006, %v1000
    %v1193 = vpack.c.b16 %v1013, %v1007
    %v1194 = vpack.c.b16 %v1014, %v1008
    %v1195 = vpack.c.b16 %v1015, %v1009
    %v1196 = vpack.c.b16 %v1016, %v1010
    %v1197 = vpack.c.b16 %v1017, %v1011
    %v1198 = vpack.c.b16 %v1018, %v1012
    %v1199 = vpack.c.b16 %v1025, %v1019
    %v1200 = vpack.c.b16 %v1026, %v1020
    %v1201 = vpack.c.b16 %v1027, %v1021
    %v1202 = vpack.c.b16 %v1028, %v1022
    %v1203 = vpack.c.b16 %v1029, %v1023
    %v1204 = vpack.c.b16 %v1030, %v1024
    %v1205 = vpack.c.b16 %v1037, %v1031
    %v1206 = vpack.c.b16 %v1038, %v1032
    %v1207 = vpack.c.b16 %v1039, %v1033
    %v1208 = vpack.c.b16 %v1040, %v1034
    %v1209 = vpack.c.b16 %v1041, %v1035
    %v1210 = vpack.c.b16 %v1042, %v1036
    %v1211 = vpack.c.b16 %v1049, %v1043
    %v1212 = vpack.c.b16 %v1050, %v1044
    %v1213 = vpack.c.b16 %v1051, %v1045
    %v1214 = vpack.c.b16 %v1052, %v1046
    %v1215 = vpack.c.b16 %v1053, %v1047
    %v1216 = vpack.c.b16 %v1054, %v1048
    %v1217 = vpack.c.b16 %v1061, %v1055
    %v1218 = vpack.c.b16 %v1062, %v1056
    %v1219 = vpack.c.b16 %v1063, %v1057
    %v1220 = vpack.c.b16 %v1064, %v1058
    %v1221 = vpack.c.b16 %v1065, %v1059
    %v1222 = vpack.c.b16 %v1066, %v1060
    %v1223 = vpack.c.b16 %v1073, %v1067
    %v1224 = vpack.c.b16 %v1074, %v1068
    %v1225 = vpack.c.b16 %v1075, %v1069
    %v1226 = vpack.c.b16 %v1076, %v1070
    %v1227 = vpack.c.b16 %v1077, %v1071
    %v1228 = vpack.c.b16 %v1078, %v1072
    %v1229 = vpack.c.b16 %v1085, %v1079
    %v1230 = vpack.c.b16 %v1086, %v1080
    %v1231 = vpack.c.b16 %v1087, %v1081
    %v1232 = vpack.c.b16 %v1088, %v1082
    %v1233 = vpack.c.b16 %v1089, %v1083
    %v1234 = vpack.c.b16 %v1090, %v1084
    %v1235 = vpack.c.b16 %v1097, %v1091
    %v1236 = vpack.c.b16 %v1098, %v1092
    %v1237 = vpack.c.b16 %v1099, %v1093
    %v1238 = vpack.c.b16 %v1100, %v1094
    %v1239 = vpack.c.b16 %v1101, %v1095
    %v1240 = vpack.c.b16 %v1102, %v1096
    %v1241 = vpack.c.b16 %v1109, %v1103
    %v1242 = vpack.c.b16 %v1110, %v1104
    %v1243 = vpack.c.b16 %v1111, %v1105
    %v1244 = vpack.c.b16 %v1112, %v1106
    %v1245 = vpack.c.b16 %v1113, %v1107
    %v1246 = vpack.c.b16 %v1114, %v1108
    %v1247 = vpack.c.b16 %v1121, %v1115
    %v1248 = vpack.c.b16 %v1122, %v1116
    %v1249 = vpack.c.b16 %v1123, %v1117
    %v1250 = vpack.c.b16 %v1124, %v1118
    %v1251 = vpack.c.b16 %v1125, %v1119
    %v1252 = vpack.c.b16 %v1126, %v1120
    %v1253 = vpack.c.b16 %v1133, %v1127
    %v1254 = vpack.c.b16 %v1134, %v1128
    %v1255 = vpack.c.b16 %v1135, %v1129
    %v1256 = vpack.c.b16 %v1136, %v1130
    %v1257 = vpack.c.b16 %v1137, %v1131
    %v1258 = vpack.c.b16 %v1138, %v1132
    %v1259 = vpack.c.b16 %v1145, %v1139
    %v1260 = vpack.c.b16 %v1146, %v1140
    %v1261 = vpack.c.b16 %v1147, %v1141
    %v1262 = vpack.c.b16 %v1148, %v1142
    %v1263 = vpack.c.b16 %v1149, %v1143
    %v1264 = vpack.c.b16 %v1150, %v1144
    %v1265 = vpack.c.b16 %v1157, %v1151
    %v1266 = vpack.c.b16 %v1158, %v1152
    %v1267 = vpack.c.b16 %v1159, %v1153
    %v1268 = vpack.c.b16 %v1160, %v1154
    %v1269 = vpack.c.b16 %v1161, %v1155
    %v1270 = vpack.c.b16 %v1162, %v1156
    %v1271 = vpack.c.b16 %v1169, %v1163
    %v1272 = vpack.c.b16 %v1170, %v1164
    %v1273 = vpack.c.b16 %v1171, %v1165
    %v1274 = vpack.c.b16 %v1172, %v1166
    %v1275 = vpack.c.b16 %v1173, %v1167
    %v1276 = vpack.c.b16 %v1174, %v1168
    %v1277 = vpack.c.b16 %v1181, %v1175
    %v1278 = vpack.c.b16 %v1182, %v1176
    %v1279 = vpack.c.b16 %v1183, %v1177
    %v1280 = vpack.c.b16 %v1184, %v1178
    %v1281 = vpack.c.b16 %v1185, %v1179
    %v1282 = vpack.c.b16 %v1186, %v1180
    %1379 = vmatprep.subr.bf16.mxu0 %v1230
    %1380 = vmatpush1.bf16.msra.mxu0 %v1229
    %1381 = vmatprep.subr.bf16.mxu0 %v1224
    %1382 = vmatpush1.bf16.msra.mxu0 %v1223
    %1383 = vmatprep.subr.bf16.mxu0 %v1218
    %1384 = vmatpush1.bf16.msra.mxu0 %v1217
    %1385 = vmatprep.subr.bf16.mxu0 %v1212
    %1386 = vmatpush1.bf16.msra.mxu0 %v1211
    %1387 = vmatprep.subr.bf16.mxu0 %v1206
    %1388 = vmatpush1.bf16.msra.mxu0 %v1205
    %1389 = vmatprep.subr.bf16.mxu0 %v1200
    %1390 = vmatpush1.bf16.msra.mxu0 %v1199
    %1391 = vmatprep.subr.bf16.mxu0 %v1194
    %1392 = vmatpush1.bf16.msra.mxu0 %v1193
    %1393 = vmatprep.subr.bf16.mxu0 %v1188
    %1394 = vmatpush1.bf16.msra.mxu0 %v1187
    %1395 = vmatprep.subr.bf16.mxu0 %v1278
    %1396 = vmatpush2.bf16.msra.mxu0 %v1277
    %1397 = vmatprep.subr.bf16.mxu0 %v1272
    %1398 = vmatpush2.bf16.msra.mxu0 %v1271
    %1399 = vmatprep.subr.bf16.mxu0 %v1266
    %1400 = vmatpush2.bf16.msra.mxu0 %v1265
    %1401 = vmatprep.subr.bf16.mxu0 %v1260
    %1402 = vmatpush2.bf16.msra.mxu0 %v1259
    %1403 = vmatprep.subr.bf16.mxu0 %v1254
    %1404 = vmatpush2.bf16.msra.mxu0 %v1253
    %1405 = vmatprep.subr.bf16.mxu0 %v1248
    %1406 = vmatpush2.bf16.msra.mxu0 %v1247
    %1407 = vmatprep.subr.bf16.mxu0 %v1242
    %1408 = vmatpush2.bf16.msra.mxu0 %v1241
    %1409 = vmatprep.subr.bf16.mxu0 %v1236
    %1410 = vmatpush2.bf16.msra.mxu0 %v1235
    %1411 = vmatprep.mubr.bf16.mxu0 %v724
    %1412 = vmatmul.mubr.bf16.gmra.mxu0 %v723
    %v1413 = vpop.f32.mrf.mxu0
    %v1414 = vadd.f32 %v872, %v1413
    %v1415 = vpop.f32.mrf.mxu0
    %v1416 = vadd.f32 %v876, %v1415
    %v1417 = vpop.f32.mrf.mxu0
    %v1418 = vadd.f32 %v872, %v1417
    %v1419 = vpop.f32.mrf.mxu0
    %v1420 = vadd.f32 %v876, %v1419
    %1421 = vmatprep.mubr.bf16.mxu0 %v726
    %1422 = vmatmul.mubr.bf16.gmra.mxu0 %v725
    %v1423 = vpop.f32.mrf.mxu0
    %v1424 = vadd.f32 %v872, %v1423
    %v1425 = vpop.f32.mrf.mxu0
    %v1426 = vadd.f32 %v876, %v1425
    %v1427 = vpop.f32.mrf.mxu0
    %v1428 = vadd.f32 %v872, %v1427
    %v1429 = vpop.f32.mrf.mxu0
    %v1430 = vadd.f32 %v876, %v1429
    %1431 = vmatprep.mubr.bf16.mxu0 %v728
    %1432 = vmatmul.mubr.bf16.gmra.mxu0 %v727
    %v1433 = vpop.f32.mrf.mxu0
    %v1434 = vadd.f32 %v872, %v1433
    %v1435 = vpop.f32.mrf.mxu0
    %v1436 = vadd.f32 %v876, %v1435
    %v1437 = vpop.f32.mrf.mxu0
    %v1438 = vadd.f32 %v872, %v1437
    %v1439 = vpop.f32.mrf.mxu0
    %v1440 = vadd.f32 %v876, %v1439
    %1441 = vmatprep.mubr.bf16.mxu0 %v730
    %1442 = vmatmul.mubr.bf16.gmra.mxu0 %v729
    %v1443 = vpop.f32.mrf.mxu0
    %v1444 = vadd.f32 %v872, %v1443
    %v1445 = vpop.f32.mrf.mxu0
    %v1446 = vadd.f32 %v876, %v1445
    %v1447 = vpop.f32.mrf.mxu0
    %v1448 = vadd.f32 %v872, %v1447
    %v1449 = vpop.f32.mrf.mxu0
    %v1450 = vadd.f32 %v876, %v1449
    %1451 = vmatprep.mubr.bf16.mxu0 %v732
    %1452 = vmatmul.mubr.bf16.gmra.mxu0 %v731
    %v1453 = vpop.f32.mrf.mxu0
    %v1454 = vadd.f32 %v872, %v1453
    %v1455 = vpop.f32.mrf.mxu0
    %v1456 = vadd.f32 %v876, %v1455
    %v1457 = vpop.f32.mrf.mxu0
    %v1458 = vadd.f32 %v872, %v1457
    %v1459 = vpop.f32.mrf.mxu0
    %v1460 = vadd.f32 %v876, %v1459
    %1461 = vmatprep.mubr.bf16.mxu0 %v734
    %1462 = vmatmul.mubr.bf16.gmra.mxu0 %v733
    %v1463 = vpop.f32.mrf.mxu0
    %v1464 = vadd.f32 %v872, %v1463
    %v1465 = vpop.f32.mrf.mxu0
    %v1466 = vadd.f32 %v876, %v1465
    %v1467 = vpop.f32.mrf.mxu0
    %v1468 = vadd.f32 %v872, %v1467
    %v1469 = vpop.f32.mrf.mxu0
    %v1470 = vadd.f32 %v876, %v1469
    %1471 = vmatprep.mubr.bf16.mxu0 %v736
    %1472 = vmatmul.mubr.bf16.gmra.mxu0 %v735
    %v1473 = vpop.f32.mrf.mxu0
    %v1474 = vadd.f32 %v872, %v1473
    %v1475 = vpop.f32.mrf.mxu0
    %v1476 = vadd.f32 %v876, %v1475
    %v1477 = vpop.f32.mrf.mxu0
    %v1478 = vadd.f32 %v872, %v1477
    %v1479 = vpop.f32.mrf.mxu0
    %v1480 = vadd.f32 %v876, %v1479
    %1481 = vmatprep.mubr.bf16.mxu0 %v738
    %1482 = vmatmul.mubr.bf16.gmra.mxu0 %v737
    %v1483 = vpop.f32.mrf.mxu0
    %v1484 = vadd.f32 %v872, %v1483
    %v1485 = vpop.f32.mrf.mxu0
    %v1486 = vadd.f32 %v876, %v1485
    %v1487 = vpop.f32.mrf.mxu0
    %v1488 = vadd.f32 %v872, %v1487
    %v1489 = vpop.f32.mrf.mxu0
    %v1490 = vadd.f32 %v876, %v1489
    %1491 = vmatprep.mubr.bf16.mxu0 %v740
    %1492 = vmatmul.mubr.bf16.gmra.mxu0 %v739
    %v1493 = vpop.f32.mrf.mxu0
    %v1494 = vadd.f32 %v872, %v1493
    %v1495 = vpop.f32.mrf.mxu0
    %v1496 = vadd.f32 %v876, %v1495
    %v1497 = vpop.f32.mrf.mxu0
    %v1498 = vadd.f32 %v872, %v1497
    %v1499 = vpop.f32.mrf.mxu0
    %v1500 = vadd.f32 %v876, %v1499
    %1501 = vmatprep.mubr.bf16.mxu0 %v742
    %1502 = vmatmul.mubr.bf16.gmra.mxu0 %v741
    %v1503 = vpop.f32.mrf.mxu0
    %v1504 = vadd.f32 %v872, %v1503
    %v1505 = vpop.f32.mrf.mxu0
    %v1506 = vadd.f32 %v876, %v1505
    %v1507 = vpop.f32.mrf.mxu0
    %v1508 = vadd.f32 %v872, %v1507
    %v1509 = vpop.f32.mrf.mxu0
    %v1510 = vadd.f32 %v876, %v1509
    %1511 = vmatprep.mubr.bf16.mxu0 %v744
    %1512 = vmatmul.mubr.bf16.gmra.mxu0 %v743
    %v1513 = vpop.f32.mrf.mxu0
    %v1514 = vadd.f32 %v872, %v1513
    %v1515 = vpop.f32.mrf.mxu0
    %v1516 = vadd.f32 %v876, %v1515
    %v1517 = vpop.f32.mrf.mxu0
    %v1518 = vadd.f32 %v872, %v1517
    %v1519 = vpop.f32.mrf.mxu0
    %v1520 = vadd.f32 %v876, %v1519
    %1521 = vmatprep.mubr.bf16.mxu0 %v746
    %1522 = vmatmul.mubr.bf16.gmra.mxu0 %v745
    %v1523 = vpop.f32.mrf.mxu0
    %v1524 = vadd.f32 %v872, %v1523
    %v1525 = vpop.f32.mrf.mxu0
    %v1526 = vadd.f32 %v876, %v1525
    %v1527 = vpop.f32.mrf.mxu0
    %v1528 = vadd.f32 %v872, %v1527
    %v1529 = vpop.f32.mrf.mxu0
    %v1530 = vadd.f32 %v876, %v1529
    %1531 = vmatprep.mubr.bf16.mxu0 %v748
    %1532 = vmatmul.mubr.bf16.gmra.mxu0 %v747
    %v1533 = vpop.f32.mrf.mxu0
    %v1534 = vadd.f32 %v872, %v1533
    %v1535 = vpop.f32.mrf.mxu0
    %v1536 = vadd.f32 %v876, %v1535
    %v1537 = vpop.f32.mrf.mxu0
    %v1538 = vadd.f32 %v872, %v1537
    %v1539 = vpop.f32.mrf.mxu0
    %v1540 = vadd.f32 %v876, %v1539
    %1541 = vmatprep.mubr.bf16.mxu0 %v750
    %1542 = vmatmul.mubr.bf16.gmra.mxu0 %v749
    %v1543 = vpop.f32.mrf.mxu0
    %v1544 = vadd.f32 %v872, %v1543
    %v1545 = vpop.f32.mrf.mxu0
    %v1546 = vadd.f32 %v876, %v1545
    %v1547 = vpop.f32.mrf.mxu0
    %v1548 = vadd.f32 %v872, %v1547
    %v1549 = vpop.f32.mrf.mxu0
    %v1550 = vadd.f32 %v876, %v1549
    %1551 = vmatprep.mubr.bf16.mxu0 %v752
    %1552 = vmatmul.mubr.bf16.gmra.mxu0 %v751
    %v1553 = vpop.f32.mrf.mxu0
    %v1554 = vadd.f32 %v872, %v1553
    %v1555 = vpop.f32.mrf.mxu0
    %v1556 = vadd.f32 %v876, %v1555
    %v1557 = vpop.f32.mrf.mxu0
    %v1558 = vadd.f32 %v872, %v1557
    %v1559 = vpop.f32.mrf.mxu0
    %v1560 = vadd.f32 %v876, %v1559
    %1561 = vmatprep.mubr.bf16.mxu0 %v754
    %1562 = vmatmul.mubr.bf16.gmra.mxu0 %v753
    %v1563 = vpop.f32.mrf.mxu0
    %v1564 = vadd.f32 %v872, %v1563
    %v1565 = vpop.f32.mrf.mxu0
    %v1566 = vadd.f32 %v876, %v1565
    %v1567 = vpop.f32.mrf.mxu0
    %v1568 = vadd.f32 %v872, %v1567
    %v1569 = vpop.f32.mrf.mxu0
    %v1570 = vadd.f32 %v876, %v1569
    %1571 = vmatprep.mubr.bf16.mxu0 %v756
    %1572 = vmatmul.mubr.bf16.gmra.mxu0 %v755
    %v1573 = vpop.f32.mrf.mxu0
    %v1574 = vadd.f32 %v872, %v1573
    %v1575 = vpop.f32.mrf.mxu0
    %v1576 = vadd.f32 %v876, %v1575
    %v1577 = vpop.f32.mrf.mxu0
    %v1578 = vadd.f32 %v872, %v1577
    %v1579 = vpop.f32.mrf.mxu0
    %v1580 = vadd.f32 %v876, %v1579
    %1581 = vmatprep.mubr.bf16.mxu0 %v758
    %1582 = vmatmul.mubr.bf16.gmra.mxu0 %v757
    %v1583 = vpop.f32.mrf.mxu0
    %v1584 = vadd.f32 %v872, %v1583
    %v1585 = vpop.f32.mrf.mxu0
    %v1586 = vadd.f32 %v876, %v1585
    %v1587 = vpop.f32.mrf.mxu0
    %v1588 = vadd.f32 %v872, %v1587
    %v1589 = vpop.f32.mrf.mxu0
    %v1590 = vadd.f32 %v876, %v1589
    %1591 = vmatprep.mubr.bf16.mxu0 %v760
    %1592 = vmatmul.mubr.bf16.gmra.mxu0 %v759
    %v1593 = vpop.f32.mrf.mxu0
    %v1594 = vadd.f32 %v872, %v1593
    %v1595 = vpop.f32.mrf.mxu0
    %v1596 = vadd.f32 %v876, %v1595
    %v1597 = vpop.f32.mrf.mxu0
    %v1598 = vadd.f32 %v872, %v1597
    %v1599 = vpop.f32.mrf.mxu0
    %v1600 = vadd.f32 %v876, %v1599
    %1601 = vmatprep.mubr.bf16.mxu0 %v762
    %1602 = vmatmul.mubr.bf16.gmra.mxu0 %v761
    %v1603 = vpop.f32.mrf.mxu0
    %v1604 = vadd.f32 %v872, %v1603
    %v1605 = vpop.f32.mrf.mxu0
    %v1606 = vadd.f32 %v876, %v1605
    %v1607 = vpop.f32.mrf.mxu0
    %v1608 = vadd.f32 %v872, %v1607
    %v1609 = vpop.f32.mrf.mxu0
    %v1610 = vadd.f32 %v876, %v1609
    %1611 = vmatprep.mubr.bf16.mxu0 %v764
    %1612 = vmatmul.mubr.bf16.gmra.mxu0 %v763
    %v1613 = vpop.f32.mrf.mxu0
    %v1614 = vadd.f32 %v872, %v1613
    %v1615 = vpop.f32.mrf.mxu0
    %v1616 = vadd.f32 %v876, %v1615
    %v1617 = vpop.f32.mrf.mxu0
    %v1618 = vadd.f32 %v872, %v1617
    %v1619 = vpop.f32.mrf.mxu0
    %v1620 = vadd.f32 %v876, %v1619
    %1621 = vmatprep.mubr.bf16.mxu0 %v766
    %1622 = vmatmul.mubr.bf16.gmra.mxu0 %v765
    %v1623 = vpop.f32.mrf.mxu0
    %v1624 = vadd.f32 %v872, %v1623
    %v1625 = vpop.f32.mrf.mxu0
    %v1626 = vadd.f32 %v876, %v1625
    %v1627 = vpop.f32.mrf.mxu0
    %v1628 = vadd.f32 %v872, %v1627
    %v1629 = vpop.f32.mrf.mxu0
    %v1630 = vadd.f32 %v876, %v1629
    %1631 = vmatprep.mubr.bf16.mxu0 %v768
    %1632 = vmatmul.mubr.bf16.gmra.mxu0 %v767
    %v1633 = vpop.f32.mrf.mxu0
    %v1634 = vadd.f32 %v872, %v1633
    %v1635 = vpop.f32.mrf.mxu0
    %v1636 = vadd.f32 %v876, %v1635
    %v1637 = vpop.f32.mrf.mxu0
    %v1638 = vadd.f32 %v872, %v1637
    %v1639 = vpop.f32.mrf.mxu0
    %v1640 = vadd.f32 %v876, %v1639
    %1641 = vmatprep.mubr.bf16.mxu0 %v770
    %1642 = vmatmul.mubr.bf16.gmra.mxu0 %v769
    %v1643 = vpop.f32.mrf.mxu0
    %v1644 = vadd.f32 %v872, %v1643
    %v1645 = vpop.f32.mrf.mxu0
    %v1646 = vadd.f32 %v876, %v1645
    %v1647 = vpop.f32.mrf.mxu0
    %v1648 = vadd.f32 %v872, %v1647
    %v1649 = vpop.f32.mrf.mxu0
    %v1650 = vadd.f32 %v876, %v1649
    %1651 = vdwg.mxu0
    %1652 = vmatprep.subr.bf16.mxu0 %v1232
    %1653 = vmatpush1.bf16.msra.mxu0 %v1231
    %1654 = vmatprep.subr.bf16.mxu0 %v1226
    %1655 = vmatpush1.bf16.msra.mxu0 %v1225
    %1656 = vmatprep.subr.bf16.mxu0 %v1220
    %1657 = vmatpush1.bf16.msra.mxu0 %v1219
    %1658 = vmatprep.subr.bf16.mxu0 %v1214
    %1659 = vmatpush1.bf16.msra.mxu0 %v1213
    %1660 = vmatprep.subr.bf16.mxu0 %v1208
    %1661 = vmatpush1.bf16.msra.mxu0 %v1207
    %1662 = vmatprep.subr.bf16.mxu0 %v1202
    %1663 = vmatpush1.bf16.msra.mxu0 %v1201
    %1664 = vmatprep.subr.bf16.mxu0 %v1196
    %1665 = vmatpush1.bf16.msra.mxu0 %v1195
    %1666 = vmatprep.subr.bf16.mxu0 %v1190
    %1667 = vmatpush1.bf16.msra.mxu0 %v1189
    %1668 = vmatprep.subr.bf16.mxu0 %v1280
    %1669 = vmatpush2.bf16.msra.mxu0 %v1279
    %1670 = vmatprep.subr.bf16.mxu0 %v1274
    %1671 = vmatpush2.bf16.msra.mxu0 %v1273
    %1672 = vmatprep.subr.bf16.mxu0 %v1268
    %1673 = vmatpush2.bf16.msra.mxu0 %v1267
    %1674 = vmatprep.subr.bf16.mxu0 %v1262
    %1675 = vmatpush2.bf16.msra.mxu0 %v1261
    %1676 = vmatprep.subr.bf16.mxu0 %v1256
    %1677 = vmatpush2.bf16.msra.mxu0 %v1255
    %1678 = vmatprep.subr.bf16.mxu0 %v1250
    %1679 = vmatpush2.bf16.msra.mxu0 %v1249
    %1680 = vmatprep.subr.bf16.mxu0 %v1244
    %1681 = vmatpush2.bf16.msra.mxu0 %v1243
    %1682 = vmatprep.subr.bf16.mxu0 %v1238
    %1683 = vmatpush2.bf16.msra.mxu0 %v1237
    %1684 = vmatprep.mubr.bf16.mxu0 %v724
    %1685 = vmatmul.mubr.bf16.gmra.mxu0 %v723
    %v1686 = vpop.f32.mrf.mxu0
    %v1687 = vadd.f32 %v880, %v1686
    %v1688 = vpop.f32.mrf.mxu0
    %v1689 = vadd.f32 %v884, %v1688
    %v1690 = vpop.f32.mrf.mxu0
    %v1691 = vadd.f32 %v880, %v1690
    %v1692 = vpop.f32.mrf.mxu0
    %v1693 = vadd.f32 %v884, %v1692
    %1694 = vmatprep.mubr.bf16.mxu0 %v726
    %1695 = vmatmul.mubr.bf16.gmra.mxu0 %v725
    %v1696 = vpop.f32.mrf.mxu0
    %v1697 = vadd.f32 %v880, %v1696
    %v1698 = vpop.f32.mrf.mxu0
    %v1699 = vadd.f32 %v884, %v1698
    %v1700 = vpop.f32.mrf.mxu0
    %v1701 = vadd.f32 %v880, %v1700
    %v1702 = vpop.f32.mrf.mxu0
    %v1703 = vadd.f32 %v884, %v1702
    %1704 = vmatprep.mubr.bf16.mxu0 %v728
    %1705 = vmatmul.mubr.bf16.gmra.mxu0 %v727
    %v1706 = vpop.f32.mrf.mxu0
    %v1707 = vadd.f32 %v880, %v1706
    %v1708 = vpop.f32.mrf.mxu0
    %v1709 = vadd.f32 %v884, %v1708
    %v1710 = vpop.f32.mrf.mxu0
    %v1711 = vadd.f32 %v880, %v1710
    %v1712 = vpop.f32.mrf.mxu0
    %v1713 = vadd.f32 %v884, %v1712
    %1714 = vmatprep.mubr.bf16.mxu0 %v730
    %1715 = vmatmul.mubr.bf16.gmra.mxu0 %v729
    %v1716 = vpop.f32.mrf.mxu0
    %v1717 = vadd.f32 %v880, %v1716
    %v1718 = vpop.f32.mrf.mxu0
    %v1719 = vadd.f32 %v884, %v1718
    %v1720 = vpop.f32.mrf.mxu0
    %v1721 = vadd.f32 %v880, %v1720
    %v1722 = vpop.f32.mrf.mxu0
    %v1723 = vadd.f32 %v884, %v1722
    %1724 = vmatprep.mubr.bf16.mxu0 %v732
    %1725 = vmatmul.mubr.bf16.gmra.mxu0 %v731
    %v1726 = vpop.f32.mrf.mxu0
    %v1727 = vadd.f32 %v880, %v1726
    %v1728 = vpop.f32.mrf.mxu0
    %v1729 = vadd.f32 %v884, %v1728
    %v1730 = vpop.f32.mrf.mxu0
    %v1731 = vadd.f32 %v880, %v1730
    %v1732 = vpop.f32.mrf.mxu0
    %v1733 = vadd.f32 %v884, %v1732
    %1734 = vmatprep.mubr.bf16.mxu0 %v734
    %1735 = vmatmul.mubr.bf16.gmra.mxu0 %v733
    %v1736 = vpop.f32.mrf.mxu0
    %v1737 = vadd.f32 %v880, %v1736
    %v1738 = vpop.f32.mrf.mxu0
    %v1739 = vadd.f32 %v884, %v1738
    %v1740 = vpop.f32.mrf.mxu0
    %v1741 = vadd.f32 %v880, %v1740
    %v1742 = vpop.f32.mrf.mxu0
    %v1743 = vadd.f32 %v884, %v1742
    %1744 = vmatprep.mubr.bf16.mxu0 %v736
    %1745 = vmatmul.mubr.bf16.gmra.mxu0 %v735
    %v1746 = vpop.f32.mrf.mxu0
    %v1747 = vadd.f32 %v880, %v1746
    %v1748 = vpop.f32.mrf.mxu0
    %v1749 = vadd.f32 %v884, %v1748
    %v1750 = vpop.f32.mrf.mxu0
    %v1751 = vadd.f32 %v880, %v1750
    %v1752 = vpop.f32.mrf.mxu0
    %v1753 = vadd.f32 %v884, %v1752
    %1754 = vmatprep.mubr.bf16.mxu0 %v738
    %1755 = vmatmul.mubr.bf16.gmra.mxu0 %v737
    %v1756 = vpop.f32.mrf.mxu0
    %v1757 = vadd.f32 %v880, %v1756
    %v1758 = vpop.f32.mrf.mxu0
    %v1759 = vadd.f32 %v884, %v1758
    %v1760 = vpop.f32.mrf.mxu0
    %v1761 = vadd.f32 %v880, %v1760
    %v1762 = vpop.f32.mrf.mxu0
    %v1763 = vadd.f32 %v884, %v1762
    %1764 = vmatprep.mubr.bf16.mxu0 %v740
    %1765 = vmatmul.mubr.bf16.gmra.mxu0 %v739
    %v1766 = vpop.f32.mrf.mxu0
    %v1767 = vadd.f32 %v880, %v1766
    %v1768 = vpop.f32.mrf.mxu0
    %v1769 = vadd.f32 %v884, %v1768
    %v1770 = vpop.f32.mrf.mxu0
    %v1771 = vadd.f32 %v880, %v1770
    %v1772 = vpop.f32.mrf.mxu0
    %v1773 = vadd.f32 %v884, %v1772
    %1774 = vmatprep.mubr.bf16.mxu0 %v742
    %1775 = vmatmul.mubr.bf16.gmra.mxu0 %v741
    %v1776 = vpop.f32.mrf.mxu0
    %v1777 = vadd.f32 %v880, %v1776
    %v1778 = vpop.f32.mrf.mxu0
    %v1779 = vadd.f32 %v884, %v1778
    %v1780 = vpop.f32.mrf.mxu0
    %v1781 = vadd.f32 %v880, %v1780
    %v1782 = vpop.f32.mrf.mxu0
    %v1783 = vadd.f32 %v884, %v1782
    %1784 = vmatprep.mubr.bf16.mxu0 %v744
    %1785 = vmatmul.mubr.bf16.gmra.mxu0 %v743
    %v1786 = vpop.f32.mrf.mxu0
    %v1787 = vadd.f32 %v880, %v1786
    %v1788 = vpop.f32.mrf.mxu0
    %v1789 = vadd.f32 %v884, %v1788
    %v1790 = vpop.f32.mrf.mxu0
    %v1791 = vadd.f32 %v880, %v1790
    %v1792 = vpop.f32.mrf.mxu0
    %v1793 = vadd.f32 %v884, %v1792
    %1794 = vmatprep.mubr.bf16.mxu0 %v746
    %1795 = vmatmul.mubr.bf16.gmra.mxu0 %v745
    %v1796 = vpop.f32.mrf.mxu0
    %v1797 = vadd.f32 %v880, %v1796
    %v1798 = vpop.f32.mrf.mxu0
    %v1799 = vadd.f32 %v884, %v1798
    %v1800 = vpop.f32.mrf.mxu0
    %v1801 = vadd.f32 %v880, %v1800
    %v1802 = vpop.f32.mrf.mxu0
    %v1803 = vadd.f32 %v884, %v1802
    %1804 = vmatprep.mubr.bf16.mxu0 %v748
    %1805 = vmatmul.mubr.bf16.gmra.mxu0 %v747
    %v1806 = vpop.f32.mrf.mxu0
    %v1807 = vadd.f32 %v880, %v1806
    %v1808 = vpop.f32.mrf.mxu0
    %v1809 = vadd.f32 %v884, %v1808
    %v1810 = vpop.f32.mrf.mxu0
    %v1811 = vadd.f32 %v880, %v1810
    %v1812 = vpop.f32.mrf.mxu0
    %v1813 = vadd.f32 %v884, %v1812
    %1814 = vmatprep.mubr.bf16.mxu0 %v750
    %1815 = vmatmul.mubr.bf16.gmra.mxu0 %v749
    %v1816 = vpop.f32.mrf.mxu0
    %v1817 = vadd.f32 %v880, %v1816
    %v1818 = vpop.f32.mrf.mxu0
    %v1819 = vadd.f32 %v884, %v1818
    %v1820 = vpop.f32.mrf.mxu0
    %v1821 = vadd.f32 %v880, %v1820
    %v1822 = vpop.f32.mrf.mxu0
    %v1823 = vadd.f32 %v884, %v1822
    %1824 = vmatprep.mubr.bf16.mxu0 %v752
    %1825 = vmatmul.mubr.bf16.gmra.mxu0 %v751
    %v1826 = vpop.f32.mrf.mxu0
    %v1827 = vadd.f32 %v880, %v1826
    %v1828 = vpop.f32.mrf.mxu0
    %v1829 = vadd.f32 %v884, %v1828
    %v1830 = vpop.f32.mrf.mxu0
    %v1831 = vadd.f32 %v880, %v1830
    %v1832 = vpop.f32.mrf.mxu0
    %v1833 = vadd.f32 %v884, %v1832
    %1834 = vmatprep.mubr.bf16.mxu0 %v754
    %1835 = vmatmul.mubr.bf16.gmra.mxu0 %v753
    %v1836 = vpop.f32.mrf.mxu0
    %v1837 = vadd.f32 %v880, %v1836
    %v1838 = vpop.f32.mrf.mxu0
    %v1839 = vadd.f32 %v884, %v1838
    %v1840 = vpop.f32.mrf.mxu0
    %v1841 = vadd.f32 %v880, %v1840
    %v1842 = vpop.f32.mrf.mxu0
    %v1843 = vadd.f32 %v884, %v1842
    %1844 = vmatprep.mubr.bf16.mxu0 %v756
    %1845 = vmatmul.mubr.bf16.gmra.mxu0 %v755
    %v1846 = vpop.f32.mrf.mxu0
    %v1847 = vadd.f32 %v880, %v1846
    %v1848 = vpop.f32.mrf.mxu0
    %v1849 = vadd.f32 %v884, %v1848
    %v1850 = vpop.f32.mrf.mxu0
    %v1851 = vadd.f32 %v880, %v1850
    %v1852 = vpop.f32.mrf.mxu0
    %v1853 = vadd.f32 %v884, %v1852
    %1854 = vmatprep.mubr.bf16.mxu0 %v758
    %1855 = vmatmul.mubr.bf16.gmra.mxu0 %v757
    %v1856 = vpop.f32.mrf.mxu0
    %v1857 = vadd.f32 %v880, %v1856
    %v1858 = vpop.f32.mrf.mxu0
    %v1859 = vadd.f32 %v884, %v1858
    %v1860 = vpop.f32.mrf.mxu0
    %v1861 = vadd.f32 %v880, %v1860
    %v1862 = vpop.f32.mrf.mxu0
    %v1863 = vadd.f32 %v884, %v1862
    %1864 = vmatprep.mubr.bf16.mxu0 %v760
    %1865 = vmatmul.mubr.bf16.gmra.mxu0 %v759
    %v1866 = vpop.f32.mrf.mxu0
    %v1867 = vadd.f32 %v880, %v1866
    %v1868 = vpop.f32.mrf.mxu0
    %v1869 = vadd.f32 %v884, %v1868
    %v1870 = vpop.f32.mrf.mxu0
    %v1871 = vadd.f32 %v880, %v1870
    %v1872 = vpop.f32.mrf.mxu0
    %v1873 = vadd.f32 %v884, %v1872
    %1874 = vmatprep.mubr.bf16.mxu0 %v762
    %1875 = vmatmul.mubr.bf16.gmra.mxu0 %v761
    %v1876 = vpop.f32.mrf.mxu0
    %v1877 = vadd.f32 %v880, %v1876
    %v1878 = vpop.f32.mrf.mxu0
    %v1879 = vadd.f32 %v884, %v1878
    %v1880 = vpop.f32.mrf.mxu0
    %v1881 = vadd.f32 %v880, %v1880
    %v1882 = vpop.f32.mrf.mxu0
    %v1883 = vadd.f32 %v884, %v1882
    %1884 = vmatprep.mubr.bf16.mxu0 %v764
    %1885 = vmatmul.mubr.bf16.gmra.mxu0 %v763
    %v1886 = vpop.f32.mrf.mxu0
    %v1887 = vadd.f32 %v880, %v1886
    %v1888 = vpop.f32.mrf.mxu0
    %v1889 = vadd.f32 %v884, %v1888
    %v1890 = vpop.f32.mrf.mxu0
    %v1891 = vadd.f32 %v880, %v1890
    %v1892 = vpop.f32.mrf.mxu0
    %v1893 = vadd.f32 %v884, %v1892
    %1894 = vmatprep.mubr.bf16.mxu0 %v766
    %1895 = vmatmul.mubr.bf16.gmra.mxu0 %v765
    %v1896 = vpop.f32.mrf.mxu0
    %v1897 = vadd.f32 %v880, %v1896
    %v1898 = vpop.f32.mrf.mxu0
    %v1899 = vadd.f32 %v884, %v1898
    %v1900 = vpop.f32.mrf.mxu0
    %v1901 = vadd.f32 %v880, %v1900
    %v1902 = vpop.f32.mrf.mxu0
    %v1903 = vadd.f32 %v884, %v1902
    %1904 = vmatprep.mubr.bf16.mxu0 %v768
    %1905 = vmatmul.mubr.bf16.gmra.mxu0 %v767
    %v1906 = vpop.f32.mrf.mxu0
    %v1907 = vadd.f32 %v880, %v1906
    %v1908 = vpop.f32.mrf.mxu0
    %v1909 = vadd.f32 %v884, %v1908
    %v1910 = vpop.f32.mrf.mxu0
    %v1911 = vadd.f32 %v880, %v1910
    %v1912 = vpop.f32.mrf.mxu0
    %v1913 = vadd.f32 %v884, %v1912
    %1914 = vmatprep.mubr.bf16.mxu0 %v770
    %1915 = vmatmul.mubr.bf16.gmra.mxu0 %v769
    %v1916 = vpop.f32.mrf.mxu0
    %v1917 = vadd.f32 %v880, %v1916
    %v1918 = vpop.f32.mrf.mxu0
    %v1919 = vadd.f32 %v884, %v1918
    %v1920 = vpop.f32.mrf.mxu0
    %v1921 = vadd.f32 %v880, %v1920
    %v1922 = vpop.f32.mrf.mxu0
    %v1923 = vadd.f32 %v884, %v1922
    %1924 = vdwg.mxu0
    %1925 = vmatprep.subr.bf16.mxu0 %v1234
    %1926 = vmatpush1.bf16.msra.mxu0 %v1233
    %1927 = vmatprep.subr.bf16.mxu0 %v1228
    %1928 = vmatpush1.bf16.msra.mxu0 %v1227
    %1929 = vmatprep.subr.bf16.mxu0 %v1222
    %1930 = vmatpush1.bf16.msra.mxu0 %v1221
    %1931 = vmatprep.subr.bf16.mxu0 %v1216
    %1932 = vmatpush1.bf16.msra.mxu0 %v1215
    %1933 = vmatprep.subr.bf16.mxu0 %v1210
    %1934 = vmatpush1.bf16.msra.mxu0 %v1209
    %1935 = vmatprep.subr.bf16.mxu0 %v1204
    %1936 = vmatpush1.bf16.msra.mxu0 %v1203
    %1937 = vmatprep.subr.bf16.mxu0 %v1198
    %1938 = vmatpush1.bf16.msra.mxu0 %v1197
    %1939 = vmatprep.subr.bf16.mxu0 %v1192
    %1940 = vmatpush1.bf16.msra.mxu0 %v1191
    %1941 = vmatprep.subr.bf16.mxu0 %v1282
    %1942 = vmatpush2.bf16.msra.mxu0 %v1281
    %1943 = vmatprep.subr.bf16.mxu0 %v1276
    %1944 = vmatpush2.bf16.msra.mxu0 %v1275
    %1945 = vmatprep.subr.bf16.mxu0 %v1270
    %1946 = vmatpush2.bf16.msra.mxu0 %v1269
    %1947 = vmatprep.subr.bf16.mxu0 %v1264
    %1948 = vmatpush2.bf16.msra.mxu0 %v1263
    %1949 = vmatprep.subr.bf16.mxu0 %v1258
    %1950 = vmatpush2.bf16.msra.mxu0 %v1257
    %1951 = vmatprep.subr.bf16.mxu0 %v1252
    %1952 = vmatpush2.bf16.msra.mxu0 %v1251
    %1953 = vmatprep.subr.bf16.mxu0 %v1246
    %1954 = vmatpush2.bf16.msra.mxu0 %v1245
    %1955 = vmatprep.subr.bf16.mxu0 %v1240
    %1956 = vmatpush2.bf16.msra.mxu0 %v1239
    %1957 = vmatprep.mubr.bf16.mxu0 %v724
    %1958 = vmatmul.mubr.bf16.gmra.mxu0 %v723
    %v1959 = vpop.f32.mrf.mxu0
    %v1960 = vadd.f32 %v888, %v1959
    %v1961 = vpop.f32.mrf.mxu0
    %v1962 = vadd.f32 %v892, %v1961
    %v1963 = vpop.f32.mrf.mxu0
    %v1964 = vadd.f32 %v888, %v1963
    %v1965 = vpop.f32.mrf.mxu0
    %v1966 = vadd.f32 %v892, %v1965
    %1967 = vmatprep.mubr.bf16.mxu0 %v726
    %1968 = vmatmul.mubr.bf16.gmra.mxu0 %v725
    %v1969 = vpop.f32.mrf.mxu0
    %v1970 = vadd.f32 %v888, %v1969
    %v1971 = vpop.f32.mrf.mxu0
    %v1972 = vadd.f32 %v892, %v1971
    %v1973 = vpop.f32.mrf.mxu0
    %v1974 = vadd.f32 %v888, %v1973
    %v1975 = vpop.f32.mrf.mxu0
    %v1976 = vadd.f32 %v892, %v1975
    %1977 = vmatprep.mubr.bf16.mxu0 %v728
    %1978 = vmatmul.mubr.bf16.gmra.mxu0 %v727
    %v1979 = vpop.f32.mrf.mxu0
    %v1980 = vadd.f32 %v888, %v1979
    %v1981 = vpop.f32.mrf.mxu0
    %v1982 = vadd.f32 %v892, %v1981
    %v1983 = vpop.f32.mrf.mxu0
    %v1984 = vadd.f32 %v888, %v1983
    %v1985 = vpop.f32.mrf.mxu0
    %v1986 = vadd.f32 %v892, %v1985
    %1987 = vmatprep.mubr.bf16.mxu0 %v730
    %1988 = vmatmul.mubr.bf16.gmra.mxu0 %v729
    %v1989 = vpop.f32.mrf.mxu0
    %v1990 = vadd.f32 %v888, %v1989
    %v1991 = vpop.f32.mrf.mxu0
    %v1992 = vadd.f32 %v892, %v1991
    %v1993 = vpop.f32.mrf.mxu0
    %v1994 = vadd.f32 %v888, %v1993
    %v1995 = vpop.f32.mrf.mxu0
    %v1996 = vadd.f32 %v892, %v1995
    %1997 = vmatprep.mubr.bf16.mxu0 %v732
    %1998 = vmatmul.mubr.bf16.gmra.mxu0 %v731
    %v1999 = vpop.f32.mrf.mxu0
    %v2000 = vadd.f32 %v888, %v1999
    %v2001 = vpop.f32.mrf.mxu0
    %v2002 = vadd.f32 %v892, %v2001
    %v2003 = vpop.f32.mrf.mxu0
    %v2004 = vadd.f32 %v888, %v2003
    %v2005 = vpop.f32.mrf.mxu0
    %v2006 = vadd.f32 %v892, %v2005
    %2007 = vmatprep.mubr.bf16.mxu0 %v734
    %2008 = vmatmul.mubr.bf16.gmra.mxu0 %v733
    %v2009 = vpop.f32.mrf.mxu0
    %v2010 = vadd.f32 %v888, %v2009
    %v2011 = vpop.f32.mrf.mxu0
    %v2012 = vadd.f32 %v892, %v2011
    %v2013 = vpop.f32.mrf.mxu0
    %v2014 = vadd.f32 %v888, %v2013
    %v2015 = vpop.f32.mrf.mxu0
    %v2016 = vadd.f32 %v892, %v2015
    %2017 = vmatprep.mubr.bf16.mxu0 %v736
    %2018 = vmatmul.mubr.bf16.gmra.mxu0 %v735
    %v2019 = vpop.f32.mrf.mxu0
    %v2020 = vadd.f32 %v888, %v2019
    %v2021 = vpop.f32.mrf.mxu0
    %v2022 = vadd.f32 %v892, %v2021
    %v2023 = vpop.f32.mrf.mxu0
    %v2024 = vadd.f32 %v888, %v2023
    %v2025 = vpop.f32.mrf.mxu0
    %v2026 = vadd.f32 %v892, %v2025
    %2027 = vmatprep.mubr.bf16.mxu0 %v738
    %2028 = vmatmul.mubr.bf16.gmra.mxu0 %v737
    %v2029 = vpop.f32.mrf.mxu0
    %v2030 = vadd.f32 %v888, %v2029
    %v2031 = vpop.f32.mrf.mxu0
    %v2032 = vadd.f32 %v892, %v2031
    %v2033 = vpop.f32.mrf.mxu0
    %v2034 = vadd.f32 %v888, %v2033
    %v2035 = vpop.f32.mrf.mxu0
    %v2036 = vadd.f32 %v892, %v2035
    %2037 = vmatprep.mubr.bf16.mxu0 %v740
    %2038 = vmatmul.mubr.bf16.gmra.mxu0 %v739
    %v2039 = vpop.f32.mrf.mxu0
    %v2040 = vadd.f32 %v888, %v2039
    %v2041 = vpop.f32.mrf.mxu0
    %v2042 = vadd.f32 %v892, %v2041
    %v2043 = vpop.f32.mrf.mxu0
    %v2044 = vadd.f32 %v888, %v2043
    %v2045 = vpop.f32.mrf.mxu0
    %v2046 = vadd.f32 %v892, %v2045
    %2047 = vmatprep.mubr.bf16.mxu0 %v742
    %2048 = vmatmul.mubr.bf16.gmra.mxu0 %v741
    %v2049 = vpop.f32.mrf.mxu0
    %v2050 = vadd.f32 %v888, %v2049
    %v2051 = vpop.f32.mrf.mxu0
    %v2052 = vadd.f32 %v892, %v2051
    %v2053 = vpop.f32.mrf.mxu0
    %v2054 = vadd.f32 %v888, %v2053
    %v2055 = vpop.f32.mrf.mxu0
    %v2056 = vadd.f32 %v892, %v2055
    %2057 = vmatprep.mubr.bf16.mxu0 %v744
    %2058 = vmatmul.mubr.bf16.gmra.mxu0 %v743
    %v2059 = vpop.f32.mrf.mxu0
    %v2060 = vadd.f32 %v888, %v2059
    %v2061 = vpop.f32.mrf.mxu0
    %v2062 = vadd.f32 %v892, %v2061
    %v2063 = vpop.f32.mrf.mxu0
    %v2064 = vadd.f32 %v888, %v2063
    %v2065 = vpop.f32.mrf.mxu0
    %v2066 = vadd.f32 %v892, %v2065
    %2067 = vmatprep.mubr.bf16.mxu0 %v746
    %2068 = vmatmul.mubr.bf16.gmra.mxu0 %v745
    %v2069 = vpop.f32.mrf.mxu0
    %v2070 = vadd.f32 %v888, %v2069
    %v2071 = vpop.f32.mrf.mxu0
    %v2072 = vadd.f32 %v892, %v2071
    %v2073 = vpop.f32.mrf.mxu0
    %v2074 = vadd.f32 %v888, %v2073
    %v2075 = vpop.f32.mrf.mxu0
    %v2076 = vadd.f32 %v892, %v2075
    %2077 = vmatprep.mubr.bf16.mxu0 %v748
    %2078 = vmatmul.mubr.bf16.gmra.mxu0 %v747
    %v2079 = vpop.f32.mrf.mxu0
    %v2080 = vadd.f32 %v888, %v2079
    %v2081 = vpop.f32.mrf.mxu0
    %v2082 = vadd.f32 %v892, %v2081
    %v2083 = vpop.f32.mrf.mxu0
    %v2084 = vadd.f32 %v888, %v2083
    %v2085 = vpop.f32.mrf.mxu0
    %v2086 = vadd.f32 %v892, %v2085
    %2087 = vmatprep.mubr.bf16.mxu0 %v750
    %2088 = vmatmul.mubr.bf16.gmra.mxu0 %v749
    %v2089 = vpop.f32.mrf.mxu0
    %v2090 = vadd.f32 %v888, %v2089
    %v2091 = vpop.f32.mrf.mxu0
    %v2092 = vadd.f32 %v892, %v2091
    %v2093 = vpop.f32.mrf.mxu0
    %v2094 = vadd.f32 %v888, %v2093
    %v2095 = vpop.f32.mrf.mxu0
    %v2096 = vadd.f32 %v892, %v2095
    %2097 = vmatprep.mubr.bf16.mxu0 %v752
    %2098 = vmatmul.mubr.bf16.gmra.mxu0 %v751
    %v2099 = vpop.f32.mrf.mxu0
    %v2100 = vadd.f32 %v888, %v2099
    %v2101 = vpop.f32.mrf.mxu0
    %v2102 = vadd.f32 %v892, %v2101
    %v2103 = vpop.f32.mrf.mxu0
    %v2104 = vadd.f32 %v888, %v2103
    %v2105 = vpop.f32.mrf.mxu0
    %v2106 = vadd.f32 %v892, %v2105
    %2107 = vmatprep.mubr.bf16.mxu0 %v754
    %2108 = vmatmul.mubr.bf16.gmra.mxu0 %v753
    %v2109 = vpop.f32.mrf.mxu0
    %v2110 = vadd.f32 %v888, %v2109
    %v2111 = vpop.f32.mrf.mxu0
    %v2112 = vadd.f32 %v892, %v2111
    %v2113 = vpop.f32.mrf.mxu0
    %v2114 = vadd.f32 %v888, %v2113
    %v2115 = vpop.f32.mrf.mxu0
    %v2116 = vadd.f32 %v892, %v2115
    %2117 = vmatprep.mubr.bf16.mxu0 %v756
    %2118 = vmatmul.mubr.bf16.gmra.mxu0 %v755
    %v2119 = vpop.f32.mrf.mxu0
    %v2120 = vadd.f32 %v888, %v2119
    %v2121 = vpop.f32.mrf.mxu0
    %v2122 = vadd.f32 %v892, %v2121
    %v2123 = vpop.f32.mrf.mxu0
    %v2124 = vadd.f32 %v888, %v2123
    %v2125 = vpop.f32.mrf.mxu0
    %v2126 = vadd.f32 %v892, %v2125
    %2127 = vmatprep.mubr.bf16.mxu0 %v758
    %2128 = vmatmul.mubr.bf16.gmra.mxu0 %v757
    %v2129 = vpop.f32.mrf.mxu0
    %v2130 = vadd.f32 %v888, %v2129
    %v2131 = vpop.f32.mrf.mxu0
    %v2132 = vadd.f32 %v892, %v2131
    %v2133 = vpop.f32.mrf.mxu0
    %v2134 = vadd.f32 %v888, %v2133
    %v2135 = vpop.f32.mrf.mxu0
    %v2136 = vadd.f32 %v892, %v2135
    %2137 = vmatprep.mubr.bf16.mxu0 %v760
    %2138 = vmatmul.mubr.bf16.gmra.mxu0 %v759
    %v2139 = vpop.f32.mrf.mxu0
    %v2140 = vadd.f32 %v888, %v2139
    %v2141 = vpop.f32.mrf.mxu0
    %v2142 = vadd.f32 %v892, %v2141
    %v2143 = vpop.f32.mrf.mxu0
    %v2144 = vadd.f32 %v888, %v2143
    %v2145 = vpop.f32.mrf.mxu0
    %v2146 = vadd.f32 %v892, %v2145
    %2147 = vmatprep.mubr.bf16.mxu0 %v762
    %2148 = vmatmul.mubr.bf16.gmra.mxu0 %v761
    %v2149 = vpop.f32.mrf.mxu0
    %v2150 = vadd.f32 %v888, %v2149
    %v2151 = vpop.f32.mrf.mxu0
    %v2152 = vadd.f32 %v892, %v2151
    %v2153 = vpop.f32.mrf.mxu0
    %v2154 = vadd.f32 %v888, %v2153
    %v2155 = vpop.f32.mrf.mxu0
    %v2156 = vadd.f32 %v892, %v2155
    %2157 = vmatprep.mubr.bf16.mxu0 %v764
    %2158 = vmatmul.mubr.bf16.gmra.mxu0 %v763
    %v2159 = vpop.f32.mrf.mxu0
    %v2160 = vadd.f32 %v888, %v2159
    %v2161 = vpop.f32.mrf.mxu0
    %v2162 = vadd.f32 %v892, %v2161
    %v2163 = vpop.f32.mrf.mxu0
    %v2164 = vadd.f32 %v888, %v2163
    %v2165 = vpop.f32.mrf.mxu0
    %v2166 = vadd.f32 %v892, %v2165
    %2167 = vmatprep.mubr.bf16.mxu0 %v766
    %2168 = vmatmul.mubr.bf16.gmra.mxu0 %v765
    %v2169 = vpop.f32.mrf.mxu0
    %v2170 = vadd.f32 %v888, %v2169
    %v2171 = vpop.f32.mrf.mxu0
    %v2172 = vadd.f32 %v892, %v2171
    %v2173 = vpop.f32.mrf.mxu0
    %v2174 = vadd.f32 %v888, %v2173
    %v2175 = vpop.f32.mrf.mxu0
    %v2176 = vadd.f32 %v892, %v2175
    %2177 = vmatprep.mubr.bf16.mxu0 %v768
    %2178 = vmatmul.mubr.bf16.gmra.mxu0 %v767
    %v2179 = vpop.f32.mrf.mxu0
    %v2180 = vadd.f32 %v888, %v2179
    %v2181 = vpop.f32.mrf.mxu0
    %v2182 = vadd.f32 %v892, %v2181
    %v2183 = vpop.f32.mrf.mxu0
    %v2184 = vadd.f32 %v888, %v2183
    %v2185 = vpop.f32.mrf.mxu0
    %v2186 = vadd.f32 %v892, %v2185
    %2187 = vmatprep.mubr.bf16.mxu0 %v770
    %2188 = vmatmul.mubr.bf16.gmra.mxu0 %v769
    %v2189 = vpop.f32.mrf.mxu0
    %v2190 = vadd.f32 %v888, %v2189
    %v2191 = vpop.f32.mrf.mxu0
    %v2192 = vadd.f32 %v892, %v2191
    %v2193 = vpop.f32.mrf.mxu0
    %v2194 = vadd.f32 %v888, %v2193
    %v2195 = vpop.f32.mrf.mxu0
    %v2196 = vadd.f32 %v892, %v2195
    %2197 = vdwg.mxu0
    %v2198 = vmax.f32 %v1414, 0.0
    %v2199 = vmax.f32 %v1416, 0.0
    %v2200 = vmax.f32 %v1687, 0.0
    %v2201 = vmax.f32 %v1689, 0.0
    %v2202 = vmax.f32 %v1960, 0.0
    %v2203 = vmax.f32 %v1962, 0.0
    %v2204 = vmax.f32 %v1418, 0.0
    %v2205 = vmax.f32 %v1420, 0.0
    %v2206 = vmax.f32 %v1691, 0.0
    %v2207 = vmax.f32 %v1693, 0.0
    %v2208 = vmax.f32 %v1964, 0.0
    %v2209 = vmax.f32 %v1966, 0.0
    %v2210 = vmax.f32 %v1424, 0.0
    %v2211 = vmax.f32 %v1426, 0.0
    %v2212 = vmax.f32 %v1697, 0.0
    %v2213 = vmax.f32 %v1699, 0.0
    %v2214 = vmax.f32 %v1970, 0.0
    %v2215 = vmax.f32 %v1972, 0.0
    %v2216 = vmax.f32 %v1428, 0.0
    %v2217 = vmax.f32 %v1430, 0.0
    %v2218 = vmax.f32 %v1701, 0.0
    %v2219 = vmax.f32 %v1703, 0.0
    %v2220 = vmax.f32 %v1974, 0.0
    %v2221 = vmax.f32 %v1976, 0.0
    %v2222 = vmax.f32 %v1434, 0.0
    %v2223 = vmax.f32 %v1436, 0.0
    %v2224 = vmax.f32 %v1707, 0.0
    %v2225 = vmax.f32 %v1709, 0.0
    %v2226 = vmax.f32 %v1980, 0.0
    %v2227 = vmax.f32 %v1982, 0.0
    %v2228 = vmax.f32 %v1438, 0.0
    %v2229 = vmax.f32 %v1440, 0.0
    %v2230 = vmax.f32 %v1711, 0.0
    %v2231 = vmax.f32 %v1713, 0.0
    %v2232 = vmax.f32 %v1984, 0.0
    %v2233 = vmax.f32 %v1986, 0.0
    %v2234 = vmax.f32 %v1444, 0.0
    %v2235 = vmax.f32 %v1446, 0.0
    %v2236 = vmax.f32 %v1717, 0.0
    %v2237 = vmax.f32 %v1719, 0.0
    %v2238 = vmax.f32 %v1990, 0.0
    %v2239 = vmax.f32 %v1992, 0.0
    %v2240 = vmax.f32 %v1448, 0.0
    %v2241 = vmax.f32 %v1450, 0.0
    %v2242 = vmax.f32 %v1721, 0.0
    %v2243 = vmax.f32 %v1723, 0.0
    %v2244 = vmax.f32 %v1994, 0.0
    %v2245 = vmax.f32 %v1996, 0.0
    %v2246 = vmax.f32 %v1454, 0.0
    %v2247 = vmax.f32 %v1456, 0.0
    %v2248 = vmax.f32 %v1727, 0.0
    %v2249 = vmax.f32 %v1729, 0.0
    %v2250 = vmax.f32 %v2000, 0.0
    %v2251 = vmax.f32 %v2002, 0.0
    %v2252 = vmax.f32 %v1458, 0.0
    %v2253 = vmax.f32 %v1460, 0.0
    %v2254 = vmax.f32 %v1731, 0.0
    %v2255 = vmax.f32 %v1733, 0.0
    %v2256 = vmax.f32 %v2004, 0.0
    %v2257 = vmax.f32 %v2006, 0.0
    %v2258 = vmax.f32 %v1464, 0.0
    %v2259 = vmax.f32 %v1466, 0.0
    %v2260 = vmax.f32 %v1737, 0.0
    %v2261 = vmax.f32 %v1739, 0.0
    %v2262 = vmax.f32 %v2010, 0.0
    %v2263 = vmax.f32 %v2012, 0.0
    %v2264 = vmax.f32 %v1468, 0.0
    %v2265 = vmax.f32 %v1470, 0.0
    %v2266 = vmax.f32 %v1741, 0.0
    %v2267 = vmax.f32 %v1743, 0.0
    %v2268 = vmax.f32 %v2014, 0.0
    %v2269 = vmax.f32 %v2016, 0.0
    %v2270 = vmax.f32 %v1474, 0.0
    %v2271 = vmax.f32 %v1476, 0.0
    %v2272 = vmax.f32 %v1747, 0.0
    %v2273 = vmax.f32 %v1749, 0.0
    %v2274 = vmax.f32 %v2020, 0.0
    %v2275 = vmax.f32 %v2022, 0.0
    %v2276 = vmax.f32 %v1478, 0.0
    %v2277 = vmax.f32 %v1480, 0.0
    %v2278 = vmax.f32 %v1751, 0.0
    %v2279 = vmax.f32 %v1753, 0.0
    %v2280 = vmax.f32 %v2024, 0.0
    %v2281 = vmax.f32 %v2026, 0.0
    %v2282 = vmax.f32 %v1484, 0.0
    %v2283 = vmax.f32 %v1486, 0.0
    %v2284 = vmax.f32 %v1757, 0.0
    %v2285 = vmax.f32 %v1759, 0.0
    %v2286 = vmax.f32 %v2030, 0.0
    %v2287 = vmax.f32 %v2032, 0.0
    %v2288 = vmax.f32 %v1488, 0.0
    %v2289 = vmax.f32 %v1490, 0.0
    %v2290 = vmax.f32 %v1761, 0.0
    %v2291 = vmax.f32 %v1763, 0.0
    %v2292 = vmax.f32 %v2034, 0.0
    %v2293 = vmax.f32 %v2036, 0.0
    %v2294 = vmax.f32 %v1494, 0.0
    %v2295 = vmax.f32 %v1496, 0.0
    %v2296 = vmax.f32 %v1767, 0.0
    %v2297 = vmax.f32 %v1769, 0.0
    %v2298 = vmax.f32 %v2040, 0.0
    %v2299 = vmax.f32 %v2042, 0.0
    %v2300 = vmax.f32 %v1498, 0.0
    %v2301 = vmax.f32 %v1500, 0.0
    %v2302 = vmax.f32 %v1771, 0.0
    %v2303 = vmax.f32 %v1773, 0.0
    %v2304 = vmax.f32 %v2044, 0.0
    %v2305 = vmax.f32 %v2046, 0.0
    %v2306 = vmax.f32 %v1504, 0.0
    %v2307 = vmax.f32 %v1506, 0.0
    %v2308 = vmax.f32 %v1777, 0.0
    %v2309 = vmax.f32 %v1779, 0.0
    %v2310 = vmax.f32 %v2050, 0.0
    %v2311 = vmax.f32 %v2052, 0.0
    %v2312 = vmax.f32 %v1508, 0.0
    %v2313 = vmax.f32 %v1510, 0.0
    %v2314 = vmax.f32 %v1781, 0.0
    %v2315 = vmax.f32 %v1783, 0.0
    %v2316 = vmax.f32 %v2054, 0.0
    %v2317 = vmax.f32 %v2056, 0.0
    %v2318 = vmax.f32 %v1514, 0.0
    %v2319 = vmax.f32 %v1516, 0.0
    %v2320 = vmax.f32 %v1787, 0.0
    %v2321 = vmax.f32 %v1789, 0.0
    %v2322 = vmax.f32 %v2060, 0.0
    %v2323 = vmax.f32 %v2062, 0.0
    %v2324 = vmax.f32 %v1518, 0.0
    %v2325 = vmax.f32 %v1520, 0.0
    %v2326 = vmax.f32 %v1791, 0.0
    %v2327 = vmax.f32 %v1793, 0.0
    %v2328 = vmax.f32 %v2064, 0.0
    %v2329 = vmax.f32 %v2066, 0.0
    %v2330 = vmax.f32 %v1524, 0.0
    %v2331 = vmax.f32 %v1526, 0.0
    %v2332 = vmax.f32 %v1797, 0.0
    %v2333 = vmax.f32 %v1799, 0.0
    %v2334 = vmax.f32 %v2070, 0.0
    %v2335 = vmax.f32 %v2072, 0.0
    %v2336 = vmax.f32 %v1528, 0.0
    %v2337 = vmax.f32 %v1530, 0.0
    %v2338 = vmax.f32 %v1801, 0.0
    %v2339 = vmax.f32 %v1803, 0.0
    %v2340 = vmax.f32 %v2074, 0.0
    %v2341 = vmax.f32 %v2076, 0.0
    %v2342 = vmax.f32 %v1534, 0.0
    %v2343 = vmax.f32 %v1536, 0.0
    %v2344 = vmax.f32 %v1807, 0.0
    %v2345 = vmax.f32 %v1809, 0.0
    %v2346 = vmax.f32 %v2080, 0.0
    %v2347 = vmax.f32 %v2082, 0.0
    %v2348 = vmax.f32 %v1538, 0.0
    %v2349 = vmax.f32 %v1540, 0.0
    %v2350 = vmax.f32 %v1811, 0.0
    %v2351 = vmax.f32 %v1813, 0.0
    %v2352 = vmax.f32 %v2084, 0.0
    %v2353 = vmax.f32 %v2086, 0.0
    %v2354 = vmax.f32 %v1544, 0.0
    %v2355 = vmax.f32 %v1546, 0.0
    %v2356 = vmax.f32 %v1817, 0.0
    %v2357 = vmax.f32 %v1819, 0.0
    %v2358 = vmax.f32 %v2090, 0.0
    %v2359 = vmax.f32 %v2092, 0.0
    %v2360 = vmax.f32 %v1548, 0.0
    %v2361 = vmax.f32 %v1550, 0.0
    %v2362 = vmax.f32 %v1821, 0.0
    %v2363 = vmax.f32 %v1823, 0.0
    %v2364 = vmax.f32 %v2094, 0.0
    %v2365 = vmax.f32 %v2096, 0.0
    %v2366 = vmax.f32 %v1554, 0.0
    %v2367 = vmax.f32 %v1556, 0.0
    %v2368 = vmax.f32 %v1827, 0.0
    %v2369 = vmax.f32 %v1829, 0.0
    %v2370 = vmax.f32 %v2100, 0.0
    %v2371 = vmax.f32 %v2102, 0.0
    %v2372 = vmax.f32 %v1558, 0.0
    %v2373 = vmax.f32 %v1560, 0.0
    %v2374 = vmax.f32 %v1831, 0.0
    %v2375 = vmax.f32 %v1833, 0.0
    %v2376 = vmax.f32 %v2104, 0.0
    %v2377 = vmax.f32 %v2106, 0.0
    %v2378 = vmax.f32 %v1564, 0.0
    %v2379 = vmax.f32 %v1566, 0.0
    %v2380 = vmax.f32 %v1837, 0.0
    %v2381 = vmax.f32 %v1839, 0.0
    %v2382 = vmax.f32 %v2110, 0.0
    %v2383 = vmax.f32 %v2112, 0.0
    %v2384 = vmax.f32 %v1568, 0.0
    %v2385 = vmax.f32 %v1570, 0.0
    %v2386 = vmax.f32 %v1841, 0.0
    %v2387 = vmax.f32 %v1843, 0.0
    %v2388 = vmax.f32 %v2114, 0.0
    %v2389 = vmax.f32 %v2116, 0.0
    %v2390 = vmax.f32 %v1574, 0.0
    %v2391 = vmax.f32 %v1576, 0.0
    %v2392 = vmax.f32 %v1847, 0.0
    %v2393 = vmax.f32 %v1849, 0.0
    %v2394 = vmax.f32 %v2120, 0.0
    %v2395 = vmax.f32 %v2122, 0.0
    %v2396 = vmax.f32 %v1578, 0.0
    %v2397 = vmax.f32 %v1580, 0.0
    %v2398 = vmax.f32 %v1851, 0.0
    %v2399 = vmax.f32 %v1853, 0.0
    %v2400 = vmax.f32 %v2124, 0.0
    %v2401 = vmax.f32 %v2126, 0.0
    %v2402 = vmax.f32 %v1584, 0.0
    %v2403 = vmax.f32 %v1586, 0.0
    %v2404 = vmax.f32 %v1857, 0.0
    %v2405 = vmax.f32 %v1859, 0.0
    %v2406 = vmax.f32 %v2130, 0.0
    %v2407 = vmax.f32 %v2132, 0.0
    %v2408 = vmax.f32 %v1588, 0.0
    %v2409 = vmax.f32 %v1590, 0.0
    %v2410 = vmax.f32 %v1861, 0.0
    %v2411 = vmax.f32 %v1863, 0.0
    %v2412 = vmax.f32 %v2134, 0.0
    %v2413 = vmax.f32 %v2136, 0.0
    %v2414 = vmax.f32 %v1594, 0.0
    %v2415 = vmax.f32 %v1596, 0.0
    %v2416 = vmax.f32 %v1867, 0.0
    %v2417 = vmax.f32 %v1869, 0.0
    %v2418 = vmax.f32 %v2140, 0.0
    %v2419 = vmax.f32 %v2142, 0.0
    %v2420 = vmax.f32 %v1598, 0.0
    %v2421 = vmax.f32 %v1600, 0.0
    %v2422 = vmax.f32 %v1871, 0.0
    %v2423 = vmax.f32 %v1873, 0.0
    %v2424 = vmax.f32 %v2144, 0.0
    %v2425 = vmax.f32 %v2146, 0.0
    %v2426 = vmax.f32 %v1604, 0.0
    %v2427 = vmax.f32 %v1606, 0.0
    %v2428 = vmax.f32 %v1877, 0.0
    %v2429 = vmax.f32 %v1879, 0.0
    %v2430 = vmax.f32 %v2150, 0.0
    %v2431 = vmax.f32 %v2152, 0.0
    %v2432 = vmax.f32 %v1608, 0.0
    %v2433 = vmax.f32 %v1610, 0.0
    %v2434 = vmax.f32 %v1881, 0.0
    %v2435 = vmax.f32 %v1883, 0.0
    %v2436 = vmax.f32 %v2154, 0.0
    %v2437 = vmax.f32 %v2156, 0.0
    %v2438 = vmax.f32 %v1614, 0.0
    %v2439 = vmax.f32 %v1616, 0.0
    %v2440 = vmax.f32 %v1887, 0.0
    %v2441 = vmax.f32 %v1889, 0.0
    %v2442 = vmax.f32 %v2160, 0.0
    %v2443 = vmax.f32 %v2162, 0.0
    %v2444 = vmax.f32 %v1618, 0.0
    %v2445 = vmax.f32 %v1620, 0.0
    %v2446 = vmax.f32 %v1891, 0.0
    %v2447 = vmax.f32 %v1893, 0.0
    %v2448 = vmax.f32 %v2164, 0.0
    %v2449 = vmax.f32 %v2166, 0.0
    %v2450 = vmax.f32 %v1624, 0.0
    %v2451 = vmax.f32 %v1626, 0.0
    %v2452 = vmax.f32 %v1897, 0.0
    %v2453 = vmax.f32 %v1899, 0.0
    %v2454 = vmax.f32 %v2170, 0.0
    %v2455 = vmax.f32 %v2172, 0.0
    %v2456 = vmax.f32 %v1628, 0.0
    %v2457 = vmax.f32 %v1630, 0.0
    %v2458 = vmax.f32 %v1901, 0.0
    %v2459 = vmax.f32 %v1903, 0.0
    %v2460 = vmax.f32 %v2174, 0.0
    %v2461 = vmax.f32 %v2176, 0.0
    %v2462 = vmax.f32 %v1634, 0.0
    %v2463 = vmax.f32 %v1636, 0.0
    %v2464 = vmax.f32 %v1907, 0.0
    %v2465 = vmax.f32 %v1909, 0.0
    %v2466 = vmax.f32 %v2180, 0.0
    %v2467 = vmax.f32 %v2182, 0.0
    %v2468 = vmax.f32 %v1638, 0.0
    %v2469 = vmax.f32 %v1640, 0.0
    %v2470 = vmax.f32 %v1911, 0.0
    %v2471 = vmax.f32 %v1913, 0.0
    %v2472 = vmax.f32 %v2184, 0.0
    %v2473 = vmax.f32 %v2186, 0.0
    %v2474 = vmax.f32 %v1644, 0.0
    %v2475 = vmax.f32 %v1646, 0.0
    %v2476 = vmax.f32 %v1917, 0.0
    %v2477 = vmax.f32 %v1919, 0.0
    %v2478 = vmax.f32 %v2190, 0.0
    %v2479 = vmax.f32 %v2192, 0.0
    %v2480 = vmax.f32 %v1648, 0.0
    %v2481 = vmax.f32 %v1650, 0.0
    %v2482 = vmax.f32 %v1921, 0.0
    %v2483 = vmax.f32 %v1923, 0.0
    %v2484 = vmax.f32 %v2194, 0.0
    %v2485 = vmax.f32 %v2196, 0.0
    %v2486 = vmax.f32 %v2198, %v2210
    %v2487 = vmax.f32 %v2204, %v2216
    %v2488 = vmax.f32 %v2486, %v2222
    %v2489 = vmax.f32 %v2487, %v2228
    %v2490 = vmax.f32 %v2488, %v2234
    %v2491 = vmax.f32 %v2489, %v2240
    %v2492 = vmax.f32 %v2490, %v2246
    %v2493 = vmax.f32 %v2491, %v2252
    %v2494 = vmax.f32 %v2492, %v2258
    %v2495 = vmax.f32 %v2493, %v2264
    %v2496 = vmax.f32 %v2494, %v2270
    %v2497 = vmax.f32 %v2495, %v2276
    %v2498 = vmax.f32 %v2496, %v2282
    %v2499 = vmax.f32 %v2497, %v2288
    %v2500 = vmax.f32 %v2498, %v2294
    %v2501 = vmax.f32 %v2499, %v2300
    %v2502 = vmax.f32 %v2500, %v2306
    %v2503 = vmax.f32 %v2501, %v2312
    %v2504 = vmax.f32 %v2502, %v2318
    %v2505 = vmax.f32 %v2503, %v2324
    %v2506 = vmax.f32 %v2504, %v2330
    %v2507 = vmax.f32 %v2505, %v2336
    %v2508 = vmax.f32 %v2506, %v2507
    %v2509 = vrot.slane %v2508, 4
    %v2510 = vmax.f32 %v2508, %v2509
    %v2511 = vrot.slane %v2510, 2
    %v2512 = vmax.f32 %v2510, %v2511
    %v2513 = vrot.slane %v2512, 1
    %v2514 = vmax.f32 %v2512, %v2513
    %v2515 = vmax.f32 %v2199, %v2211
    %v2516 = vmax.f32 %v2205, %v2217
    %v2517 = vmax.f32 %v2515, %v2223
    %v2518 = vmax.f32 %v2516, %v2229
    %v2519 = vmax.f32 %v2517, %v2235
    %v2520 = vmax.f32 %v2518, %v2241
    %v2521 = vmax.f32 %v2519, %v2247
    %v2522 = vmax.f32 %v2520, %v2253
    %v2523 = vmax.f32 %v2521, %v2259
    %v2524 = vmax.f32 %v2522, %v2265
    %v2525 = vmax.f32 %v2523, %v2271
    %v2526 = vmax.f32 %v2524, %v2277
    %v2527 = vmax.f32 %v2525, %v2283
    %v2528 = vmax.f32 %v2526, %v2289
    %v2529 = vmax.f32 %v2527, %v2295
    %v2530 = vmax.f32 %v2528, %v2301
    %v2531 = vmax.f32 %v2529, %v2307
    %v2532 = vmax.f32 %v2530, %v2313
    %v2533 = vmax.f32 %v2531, %v2319
    %v2534 = vmax.f32 %v2532, %v2325
    %v2535 = vmax.f32 %v2533, %v2331
    %v2536 = vmax.f32 %v2534, %v2337
    %v2537 = vmax.f32 %v2535, %v2536
    %v2538 = vrot.slane %v2537, 4
    %v2539 = vmax.f32 %v2537, %v2538
    %v2540 = vrot.slane %v2539, 2
    %v2541 = vmax.f32 %v2539, %v2540
    %v2542 = vrot.slane %v2541, 1
    %v2543 = vmax.f32 %v2541, %v2542
    %v2544 = vmax.f32 %v2200, %v2212
    %v2545 = vmax.f32 %v2206, %v2218
    %v2546 = vmax.f32 %v2544, %v2224
    %v2547 = vmax.f32 %v2545, %v2230
    %v2548 = vmax.f32 %v2546, %v2236
    %v2549 = vmax.f32 %v2547, %v2242
    %v2550 = vmax.f32 %v2548, %v2248
    %v2551 = vmax.f32 %v2549, %v2254
    %v2552 = vmax.f32 %v2550, %v2260
    %v2553 = vmax.f32 %v2551, %v2266
    %v2554 = vmax.f32 %v2552, %v2553
    %v2555 = vrot.slane %v2554, 4
    %v2556 = vmax.f32 %v2554, %v2555
    %v2557 = vrot.slane %v2556, 2
    %v2558 = vmax.f32 %v2556, %v2557
    %v2559 = vrot.slane %v2558, 1
    %v2560 = vmax.f32 %v2558, %v2559
    %v2561 = vmax.f32 %v2201, %v2213
    %v2562 = vmax.f32 %v2207, %v2219
    %v2563 = vmax.f32 %v2561, %v2225
    %v2564 = vmax.f32 %v2562, %v2231
    %v2565 = vmax.f32 %v2563, %v2237
    %v2566 = vmax.f32 %v2564, %v2243
    %v2567 = vmax.f32 %v2565, %v2249
    %v2568 = vmax.f32 %v2566, %v2255
    %v2569 = vmax.f32 %v2567, %v2261
    %v2570 = vmax.f32 %v2568, %v2267
    %v2571 = vmax.f32 %v2569, %v2570
    %v2572 = vrot.slane %v2571, 4
    %v2573 = vmax.f32 %v2571, %v2572
    %v2574 = vrot.slane %v2573, 2
    %v2575 = vmax.f32 %v2573, %v2574
    %v2576 = vrot.slane %v2575, 1
    %v2577 = vmax.f32 %v2575, %v2576
    %v2578 = vmax.f32 %v2272, %v2284
    %v2579 = vmax.f32 %v2278, %v2290
    %v2580 = vmax.f32 %v2578, %v2296
    %v2581 = vmax.f32 %v2579, %v2302
    %v2582 = vmax.f32 %v2580, %v2308
    %v2583 = vmax.f32 %v2581, %v2314
    %v2584 = vmax.f32 %v2582, %v2320
    %v2585 = vmax.f32 %v2583, %v2326
    %v2586 = vmax.f32 %v2584, %v2332
    %v2587 = vmax.f32 %v2585, %v2338
    %v2588 = vmax.f32 %v2586, %v2587
    %v2589 = vrot.slane %v2588, 4
    %v2590 = vmax.f32 %v2588, %v2589
    %v2591 = vrot.slane %v2590, 2
    %v2592 = vmax.f32 %v2590, %v2591
    %v2593 = vrot.slane %v2592, 1
    %v2594 = vmax.f32 %v2592, %v2593
    %v2595 = vmax.f32 %v2273, %v2285
    %v2596 = vmax.f32 %v2279, %v2291
    %v2597 = vmax.f32 %v2595, %v2297
    %v2598 = vmax.f32 %v2596, %v2303
    %v2599 = vmax.f32 %v2597, %v2309
    %v2600 = vmax.f32 %v2598, %v2315
    %v2601 = vmax.f32 %v2599, %v2321
    %v2602 = vmax.f32 %v2600, %v2327
    %v2603 = vmax.f32 %v2601, %v2333
    %v2604 = vmax.f32 %v2602, %v2339
    %v2605 = vmax.f32 %v2603, %v2604
    %v2606 = vrot.slane %v2605, 4
    %v2607 = vmax.f32 %v2605, %v2606
    %v2608 = vrot.slane %v2607, 2
    %v2609 = vmax.f32 %v2607, %v2608
    %v2610 = vrot.slane %v2609, 1
    %v2611 = vmax.f32 %v2609, %v2610
    %v2612 = vmax.f32 %v2202, %v2214
    %v2613 = vmax.f32 %v2208, %v2220
    %v2614 = vmax.f32 %v2612, %v2226
    %v2615 = vmax.f32 %v2613, %v2232
    %v2616 = vmax.f32 %v2614, %v2238
    %v2617 = vmax.f32 %v2615, %v2244
    %v2618 = vmax.f32 %v2616, %v2617
    %v2619 = vrot.slane %v2618, 4
    %v2620 = vmax.f32 %v2618, %v2619
    %v2621 = vrot.slane %v2620, 2
    %v2622 = vmax.f32 %v2620, %v2621
    %v2623 = vrot.slane %v2622, 1
    %v2624 = vmax.f32 %v2622, %v2623
    %v2625 = vmax.f32 %v2203, %v2215
    %v2626 = vmax.f32 %v2209, %v2221
    %v2627 = vmax.f32 %v2625, %v2227
    %v2628 = vmax.f32 %v2626, %v2233
    %v2629 = vmax.f32 %v2627, %v2239
    %v2630 = vmax.f32 %v2628, %v2245
    %v2631 = vmax.f32 %v2629, %v2630
    %v2632 = vrot.slane %v2631, 4
    %v2633 = vmax.f32 %v2631, %v2632
    %v2634 = vrot.slane %v2633, 2
    %v2635 = vmax.f32 %v2633, %v2634
    %v2636 = vrot.slane %v2635, 1
    %v2637 = vmax.f32 %v2635, %v2636
    %v2638 = vmax.f32 %v2250, %v2262
    %v2639 = vmax.f32 %v2256, %v2268
    %v2640 = vmax.f32 %v2638, %v2274
    %v2641 = vmax.f32 %v2639, %v2280
    %v2642 = vmax.f32 %v2640, %v2286
    %v2643 = vmax.f32 %v2641, %v2292
    %v2644 = vmax.f32 %v2642, %v2643
    %v2645 = vrot.slane %v2644, 4
    %v2646 = vmax.f32 %v2644, %v2645
    %v2647 = vrot.slane %v2646, 2
    %v2648 = vmax.f32 %v2646, %v2647
    %v2649 = vrot.slane %v2648, 1
    %v2650 = vmax.f32 %v2648, %v2649
    %v2651 = vmax.f32 %v2251, %v2263
    %v2652 = vmax.f32 %v2257, %v2269
    %v2653 = vmax.f32 %v2651, %v2275
    %v2654 = vmax.f32 %v2652, %v2281
    %v2655 = vmax.f32 %v2653, %v2287
    %v2656 = vmax.f32 %v2654, %v2293
    %v2657 = vmax.f32 %v2655, %v2656
    %v2658 = vrot.slane %v2657, 4
    %v2659 = vmax.f32 %v2657, %v2658
    %v2660 = vrot.slane %v2659, 2
    %v2661 = vmax.f32 %v2659, %v2660
    %v2662 = vrot.slane %v2661, 1
    %v2663 = vmax.f32 %v2661, %v2662
    %v2664 = vmax.f32 %v2298, %v2310
    %v2665 = vmax.f32 %v2304, %v2316
    %v2666 = vmax.f32 %v2664, %v2322
    %v2667 = vmax.f32 %v2665, %v2328
    %v2668 = vmax.f32 %v2666, %v2334
    %v2669 = vmax.f32 %v2667, %v2340
    %v2670 = vmax.f32 %v2668, %v2669
    %v2671 = vrot.slane %v2670, 4
    %v2672 = vmax.f32 %v2670, %v2671
    %v2673 = vrot.slane %v2672, 2
    %v2674 = vmax.f32 %v2672, %v2673
    %v2675 = vrot.slane %v2674, 1
    %v2676 = vmax.f32 %v2674, %v2675
    %v2677 = vmax.f32 %v2299, %v2311
    %v2678 = vmax.f32 %v2305, %v2317
    %v2679 = vmax.f32 %v2677, %v2323
    %v2680 = vmax.f32 %v2678, %v2329
    %v2681 = vmax.f32 %v2679, %v2335
    %v2682 = vmax.f32 %v2680, %v2341
    %v2683 = vmax.f32 %v2681, %v2682
    %v2684 = vrot.slane %v2683, 4
    %v2685 = vmax.f32 %v2683, %v2684
    %v2686 = vrot.slane %v2685, 2
    %v2687 = vmax.f32 %v2685, %v2686
    %v2688 = vrot.slane %v2687, 1
    %v2689 = vmax.f32 %v2687, %v2688
    %v2690 = vmax.f32 %v2560, %v2594
    %v2691 = vmax.f32 %v2577, %v2611
    %v2692 = vmax.f32 %v2624, %v2650
    %v2693 = vmax.f32 %v2637, %v2663
    %v2694 = vmax.f32 %v2692, %v2676
    %v2695 = vmax.f32 %v2693, %v2689
    %v2698 = vcombine.low %v2514, %v2543
    %v2700 = vunpack.c.l.s4 1966171168
    %v2701 = vunpack.c.0.s8 %v2700
    %v2702 = vlaneseq
    %v2703 = vshrl.u32 %v2702, 7
    %v2704 = vsub.s32 %v2701, %v2703
    %v2705 = vrot.slane %v2698, %v2704
    %v2707 = vunpack.c.l.s4 1966171168
    %v2708 = vunpack.c.0.s8 %v2707
    %v2709 = vlaneseq
    %v2710 = vshrl.u32 %v2709, 7
    %v2711 = vsub.s32 %v2708, %v2710
    %v2712 = vrot.slane %v2705, %v2711
    %v2714 = vlaneseq
    %vm2715 = vcmp.ge.s32.totalorder %v2714, 0
    %vm2716 = vcmp.lt.s32.totalorder %v2714, 256
    %vm2717 = vmand %vm2715, %vm2716
    %2718 = vst.msk [vmem:[#allocation2] ss:$8 sm:$0x3] %vm2717, %v2712
    %2719 = vst.msk [vmem:[#allocation2] ss:$8 sm:$0x0] %vm2717, %v2712
    %v2722 = vcombine.low %v2690, %v2691
    %v2724 = vunpack.c.l.s4 1966171168
    %v2725 = vunpack.c.0.s8 %v2724
    %v2726 = vlaneseq
    %v2727 = vshrl.u32 %v2726, 7
    %v2728 = vsub.s32 %v2725, %v2727
    %v2729 = vrot.slane %v2722, %v2728
    %v2731 = vunpack.c.l.s4 1966171168
    %v2732 = vunpack.c.0.s8 %v2731
    %v2733 = vlaneseq
    %v2734 = vshrl.u32 %v2733, 7
    %v2735 = vsub.s32 %v2732, %v2734
    %v2736 = vrot.slane %v2729, %v2735
    %s2738 = scalar_lea.vmem [#allocation2], 2
    %2739 = vst.msk [vmem:[%s2738] ss:$8 sm:$0x3] %vm2717, %v2736
    %2740 = vst.msk [vmem:[%s2738] ss:$8 sm:$0x0] %vm2717, %v2736
    %v2743 = vcombine.low %v2694, %v2695
    %v2745 = vunpack.c.l.s4 1966171168
    %v2746 = vunpack.c.0.s8 %v2745
    %v2747 = vlaneseq
    %v2748 = vshrl.u32 %v2747, 7
    %v2749 = vsub.s32 %v2746, %v2748
    %v2750 = vrot.slane %v2743, %v2749
    %v2752 = vunpack.c.l.s4 1966171168
    %v2753 = vunpack.c.0.s8 %v2752
    %v2754 = vlaneseq
    %v2755 = vshrl.u32 %v2754, 7
    %v2756 = vsub.s32 %v2753, %v2755
    %v2757 = vrot.slane %v2750, %v2756
    %s2759 = scalar_lea.vmem [#allocation2], 4
    %2760 = vst.msk [vmem:[%s2759] ss:$8 sm:$0x3] %vm2717, %v2757
    %2761 = vst.msk [vmem:[%s2759] ss:$8 sm:$0x0] %vm2717, %v2757
    %v2764 = vcombine.low %v2560, %v2577
    %v2766 = vunpack.c.l.s4 1966171168
    %v2767 = vunpack.c.0.s8 %v2766
    %v2768 = vlaneseq
    %v2769 = vshrl.u32 %v2768, 7
    %v2770 = vsub.s32 %v2767, %v2769
    %v2771 = vrot.slane %v2764, %v2770
    %v2773 = vunpack.c.l.s4 1966171168
    %v2774 = vunpack.c.0.s8 %v2773
    %v2775 = vlaneseq
    %v2776 = vshrl.u32 %v2775, 7
    %v2777 = vsub.s32 %v2774, %v2776
    %v2778 = vrot.slane %v2771, %v2777
    %s2780 = scalar_lea.vmem [#allocation2], 6
    %2781 = vst.msk [vmem:[%s2780] ss:$8 sm:$0x3] %vm2717, %v2778
    %2782 = vst.msk [vmem:[%s2780] ss:$8 sm:$0x0] %vm2717, %v2778
    %v2785 = vcombine.low %v2594, %v2611
    %v2787 = vunpack.c.l.s4 1966171168
    %v2788 = vunpack.c.0.s8 %v2787
    %v2789 = vlaneseq
    %v2790 = vshrl.u32 %v2789, 7
    %v2791 = vsub.s32 %v2788, %v2790
    %v2792 = vrot.slane %v2785, %v2791
    %v2794 = vunpack.c.l.s4 1966171168
    %v2795 = vunpack.c.0.s8 %v2794
    %v2796 = vlaneseq
    %v2797 = vshrl.u32 %v2796, 7
    %v2798 = vsub.s32 %v2795, %v2797
    %v2799 = vrot.slane %v2792, %v2798
    %s2801 = scalar_lea.vmem [#allocation2], 16
    %2802 = vst.msk [vmem:[%s2801] ss:$8 sm:$0x3] %vm2717, %v2799
    %2803 = vst.msk [vmem:[%s2801] ss:$8 sm:$0x0] %vm2717, %v2799
    %v2806 = vcombine.low %v2624, %v2637
    %v2808 = vunpack.c.l.s4 1966171168
    %v2809 = vunpack.c.0.s8 %v2808
    %v2810 = vlaneseq
    %v2811 = vshrl.u32 %v2810, 7
    %v2812 = vsub.s32 %v2809, %v2811
    %v2813 = vrot.slane %v2806, %v2812
    %v2815 = vunpack.c.l.s4 1966171168
    %v2816 = vunpack.c.0.s8 %v2815
    %v2817 = vlaneseq
    %v2818 = vshrl.u32 %v2817, 7
    %v2819 = vsub.s32 %v2816, %v2818
    %v2820 = vrot.slane %v2813, %v2819
    %s2822 = scalar_lea.vmem [#allocation2], 18
    %2823 = vst.msk [vmem:[%s2822] ss:$8 sm:$0x3] %vm2717, %v2820
    %2824 = vst.msk [vmem:[%s2822] ss:$8 sm:$0x0] %vm2717, %v2820
    %v2827 = vcombine.low %v2650, %v2663
    %v2829 = vunpack.c.l.s4 1966171168
    %v2830 = vunpack.c.0.s8 %v2829
    %v2831 = vlaneseq
    %v2832 = vshrl.u32 %v2831, 7
    %v2833 = vsub.s32 %v2830, %v2832
    %v2834 = vrot.slane %v2827, %v2833
    %v2836 = vunpack.c.l.s4 1966171168
    %v2837 = vunpack.c.0.s8 %v2836
    %v2838 = vlaneseq
    %v2839 = vshrl.u32 %v2838, 7
    %v2840 = vsub.s32 %v2837, %v2839
    %v2841 = vrot.slane %v2834, %v2840
    %s2843 = scalar_lea.vmem [#allocation2], 20
    %2844 = vst.msk [vmem:[%s2843] ss:$8 sm:$0x3] %vm2717, %v2841
    %2845 = vst.msk [vmem:[%s2843] ss:$8 sm:$0x0] %vm2717, %v2841
    %v2848 = vcombine.low %v2676, %v2689
    %v2850 = vunpack.c.l.s4 1966171168
    %v2851 = vunpack.c.0.s8 %v2850
    %v2852 = vlaneseq
    %v2853 = vshrl.u32 %v2852, 7
    %v2854 = vsub.s32 %v2851, %v2853
    %v2855 = vrot.slane %v2848, %v2854
    %v2857 = vunpack.c.l.s4 1966171168
    %v2858 = vunpack.c.0.s8 %v2857
    %v2859 = vlaneseq
    %v2860 = vshrl.u32 %v2859, 7
    %v2861 = vsub.s32 %v2858, %v2860
    %v2862 = vrot.slane %v2855, %v2861
    %s2864 = scalar_lea.vmem [#allocation2], 22
    %2865 = vst.msk [vmem:[%s2864] ss:$8 sm:$0x3] %vm2717, %v2862
    %2866 = vst.msk [vmem:[%s2864] ss:$8 sm:$0x0] %vm2717, %v2862
    %v2867 = vmax.f32 %v2342, %v2354
    %v2868 = vmax.f32 %v2348, %v2360
    %v2869 = vmax.f32 %v2867, %v2366
    %v2870 = vmax.f32 %v2868, %v2372
    %v2871 = vmax.f32 %v2869, %v2378
    %v2872 = vmax.f32 %v2870, %v2384
    %v2873 = vmax.f32 %v2871, %v2390
    %v2874 = vmax.f32 %v2872, %v2396
    %v2875 = vmax.f32 %v2873, %v2402
    %v2876 = vmax.f32 %v2874, %v2408
    %v2877 = vmax.f32 %v2875, %v2414
    %v2878 = vmax.f32 %v2876, %v2420
    %v2879 = vmax.f32 %v2877, %v2426
    %v2880 = vmax.f32 %v2878, %v2432
    %v2881 = vmax.f32 %v2879, %v2438
    %v2882 = vmax.f32 %v2880, %v2444
    %v2883 = vmax.f32 %v2881, %v2450
    %v2884 = vmax.f32 %v2882, %v2456
    %v2885 = vmax.f32 %v2883, %v2462
    %v2886 = vmax.f32 %v2884, %v2468
    %v2887 = vmax.f32 %v2885, %v2474
    %v2888 = vmax.f32 %v2886, %v2480
    %v2889 = vmax.f32 %v2887, %v2888
    %v2890 = vrot.slane %v2889, 4
    %v2891 = vmax.f32 %v2889, %v2890
    %v2892 = vrot.slane %v2891, 2
    %v2893 = vmax.f32 %v2891, %v2892
    %v2894 = vrot.slane %v2893, 1
    %v2895 = vmax.f32 %v2893, %v2894
    %v2896 = vmax.f32 %v2343, %v2355
    %v2897 = vmax.f32 %v2349, %v2361
    %v2898 = vmax.f32 %v2896, %v2367
    %v2899 = vmax.f32 %v2897, %v2373
    %v2900 = vmax.f32 %v2898, %v2379
    %v2901 = vmax.f32 %v2899, %v2385
    %v2902 = vmax.f32 %v2900, %v2391
    %v2903 = vmax.f32 %v2901, %v2397
    %v2904 = vmax.f32 %v2902, %v2403
    %v2905 = vmax.f32 %v2903, %v2409
    %v2906 = vmax.f32 %v2904, %v2415
    %v2907 = vmax.f32 %v2905, %v2421
    %v2908 = vmax.f32 %v2906, %v2427
    %v2909 = vmax.f32 %v2907, %v2433
    %v2910 = vmax.f32 %v2908, %v2439
    %v2911 = vmax.f32 %v2909, %v2445
    %v2912 = vmax.f32 %v2910, %v2451
    %v2913 = vmax.f32 %v2911, %v2457
    %v2914 = vmax.f32 %v2912, %v2463
    %v2915 = vmax.f32 %v2913, %v2469
    %v2916 = vmax.f32 %v2914, %v2475
    %v2917 = vmax.f32 %v2915, %v2481
    %v2918 = vmax.f32 %v2916, %v2917
    %v2919 = vrot.slane %v2918, 4
    %v2920 = vmax.f32 %v2918, %v2919
    %v2921 = vrot.slane %v2920, 2
    %v2922 = vmax.f32 %v2920, %v2921
    %v2923 = vrot.slane %v2922, 1
    %v2924 = vmax.f32 %v2922, %v2923
    %v2925 = vmax.f32 %v2344, %v2356
    %v2926 = vmax.f32 %v2350, %v2362
    %v2927 = vmax.f32 %v2925, %v2368
    %v2928 = vmax.f32 %v2926, %v2374
    %v2929 = vmax.f32 %v2927, %v2380
    %v2930 = vmax.f32 %v2928, %v2386
    %v2931 = vmax.f32 %v2929, %v2392
    %v2932 = vmax.f32 %v2930, %v2398
    %v2933 = vmax.f32 %v2931, %v2404
    %v2934 = vmax.f32 %v2932, %v2410
    %v2935 = vmax.f32 %v2933, %v2934
    %v2936 = vrot.slane %v2935, 4
    %v2937 = vmax.f32 %v2935, %v2936
    %v2938 = vrot.slane %v2937, 2
    %v2939 = vmax.f32 %v2937, %v2938
    %v2940 = vrot.slane %v2939, 1
    %v2941 = vmax.f32 %v2939, %v2940
    %v2942 = vmax.f32 %v2345, %v2357
    %v2943 = vmax.f32 %v2351, %v2363
    %v2944 = vmax.f32 %v2942, %v2369
    %v2945 = vmax.f32 %v2943, %v2375
    %v2946 = vmax.f32 %v2944, %v2381
    %v2947 = vmax.f32 %v2945, %v2387
    %v2948 = vmax.f32 %v2946, %v2393
    %v2949 = vmax.f32 %v2947, %v2399
    %v2950 = vmax.f32 %v2948, %v2405
    %v2951 = vmax.f32 %v2949, %v2411
    %v2952 = vmax.f32 %v2950, %v2951
    %v2953 = vrot.slane %v2952, 4
    %v2954 = vmax.f32 %v2952, %v2953
    %v2955 = vrot.slane %v2954, 2
    %v2956 = vmax.f32 %v2954, %v2955
    %v2957 = vrot.slane %v2956, 1
    %v2958 = vmax.f32 %v2956, %v2957
    %v2959 = vmax.f32 %v2416, %v2428
    %v2960 = vmax.f32 %v2422, %v2434
    %v2961 = vmax.f32 %v2959, %v2440
    %v2962 = vmax.f32 %v2960, %v2446
    %v2963 = vmax.f32 %v2961, %v2452
    %v2964 = vmax.f32 %v2962, %v2458
    %v2965 = vmax.f32 %v2963, %v2464
    %v2966 = vmax.f32 %v2964, %v2470
    %v2967 = vmax.f32 %v2965, %v2476
    %v2968 = vmax.f32 %v2966, %v2482
    %v2969 = vmax.f32 %v2967, %v2968
    %v2970 = vrot.slane %v2969, 4
    %v2971 = vmax.f32 %v2969, %v2970
    %v2972 = vrot.slane %v2971, 2
    %v2973 = vmax.f32 %v2971, %v2972
    %v2974 = vrot.slane %v2973, 1
    %v2975 = vmax.f32 %v2973, %v2974
    %v2976 = vmax.f32 %v2417, %v2429
    %v2977 = vmax.f32 %v2423, %v2435
    %v2978 = vmax.f32 %v2976, %v2441
    %v2979 = vmax.f32 %v2977, %v2447
    %v2980 = vmax.f32 %v2978, %v2453
    %v2981 = vmax.f32 %v2979, %v2459
    %v2982 = vmax.f32 %v2980, %v2465
    %v2983 = vmax.f32 %v2981, %v2471
    %v2984 = vmax.f32 %v2982, %v2477
    %v2985 = vmax.f32 %v2983, %v2483
    %v2986 = vmax.f32 %v2984, %v2985
    %v2987 = vrot.slane %v2986, 4
    %v2988 = vmax.f32 %v2986, %v2987
    %v2989 = vrot.slane %v2988, 2
    %v2990 = vmax.f32 %v2988, %v2989
    %v2991 = vrot.slane %v2990, 1
    %v2992 = vmax.f32 %v2990, %v2991
    %v2993 = vmax.f32 %v2346, %v2358
    %v2994 = vmax.f32 %v2352, %v2364
    %v2995 = vmax.f32 %v2993, %v2370
    %v2996 = vmax.f32 %v2994, %v2376
    %v2997 = vmax.f32 %v2995, %v2382
    %v2998 = vmax.f32 %v2996, %v2388
    %v2999 = vmax.f32 %v2997, %v2998
    %v3000 = vrot.slane %v2999, 4
    %v3001 = vmax.f32 %v2999, %v3000
    %v3002 = vrot.slane %v3001, 2
    %v3003 = vmax.f32 %v3001, %v3002
    %v3004 = vrot.slane %v3003, 1
    %v3005 = vmax.f32 %v3003, %v3004
    %v3006 = vmax.f32 %v2347, %v2359
    %v3007 = vmax.f32 %v2353, %v2365
    %v3008 = vmax.f32 %v3006, %v2371
    %v3009 = vmax.f32 %v3007, %v2377
    %v3010 = vmax.f32 %v3008, %v2383
    %v3011 = vmax.f32 %v3009, %v2389
    %v3012 = vmax.f32 %v3010, %v3011
    %v3013 = vrot.slane %v3012, 4
    %v3014 = vmax.f32 %v3012, %v3013
    %v3015 = vrot.slane %v3014, 2
    %v3016 = vmax.f32 %v3014, %v3015
    %v3017 = vrot.slane %v3016, 1
    %v3018 = vmax.f32 %v3016, %v3017
    %v3019 = vmax.f32 %v2394, %v2406
    %v3020 = vmax.f32 %v2400, %v2412
    %v3021 = vmax.f32 %v3019, %v2418
    %v3022 = vmax.f32 %v3020, %v2424
    %v3023 = vmax.f32 %v3021, %v2430
    %v3024 = vmax.f32 %v3022, %v2436
    %v3025 = vmax.f32 %v3023, %v3024
    %v3026 = vrot.slane %v3025, 4
    %v3027 = vmax.f32 %v3025, %v3026
    %v3028 = vrot.slane %v3027, 2
    %v3029 = vmax.f32 %v3027, %v3028
    %v3030 = vrot.slane %v3029, 1
    %v3031 = vmax.f32 %v3029, %v3030
    %v3032 = vmax.f32 %v2395, %v2407
    %v3033 = vmax.f32 %v2401, %v2413
    %v3034 = vmax.f32 %v3032, %v2419
    %v3035 = vmax.f32 %v3033, %v2425
    %v3036 = vmax.f32 %v3034, %v2431
    %v3037 = vmax.f32 %v3035, %v2437
    %v3038 = vmax.f32 %v3036, %v3037
    %v3039 = vrot.slane %v3038, 4
    %v3040 = vmax.f32 %v3038, %v3039
    %v3041 = vrot.slane %v3040, 2
    %v3042 = vmax.f32 %v3040, %v3041
    %v3043 = vrot.slane %v3042, 1
    %v3044 = vmax.f32 %v3042, %v3043
    %v3045 = vmax.f32 %v2442, %v2454
    %v3046 = vmax.f32 %v2448, %v2460
    %v3047 = vmax.f32 %v3045, %v2466
    %v3048 = vmax.f32 %v3046, %v2472
    %v3049 = vmax.f32 %v3047, %v2478
    %v3050 = vmax.f32 %v3048, %v2484
    %v3051 = vmax.f32 %v3049, %v3050
    %v3052 = vrot.slane %v3051, 4
    %v3053 = vmax.f32 %v3051, %v3052
    %v3054 = vrot.slane %v3053, 2
    %v3055 = vmax.f32 %v3053, %v3054
    %v3056 = vrot.slane %v3055, 1
    %v3057 = vmax.f32 %v3055, %v3056
    %v3058 = vmax.f32 %v2443, %v2455
    %v3059 = vmax.f32 %v2449, %v2461
    %v3060 = vmax.f32 %v3058, %v2467
    %v3061 = vmax.f32 %v3059, %v2473
    %v3062 = vmax.f32 %v3060, %v2479
    %v3063 = vmax.f32 %v3061, %v2485
    %v3064 = vmax.f32 %v3062, %v3063
    %v3065 = vrot.slane %v3064, 4
    %v3066 = vmax.f32 %v3064, %v3065
    %v3067 = vrot.slane %v3066, 2
    %v3068 = vmax.f32 %v3066, %v3067
    %v3069 = vrot.slane %v3068, 1
    %v3070 = vmax.f32 %v3068, %v3069
    %v3071 = vmax.f32 %v2941, %v2975
    %v3072 = vmax.f32 %v2958, %v2992
    %v3073 = vmax.f32 %v3005, %v3031
    %v3074 = vmax.f32 %v3018, %v3044
    %v3075 = vmax.f32 %v3073, %v3057
    %v3076 = vmax.f32 %v3074, %v3070
    %v3079 = vcombine.low %v2895, %v2924
    %v3081 = vunpack.c.l.s4 1966171168
    %v3082 = vunpack.c.0.s8 %v3081
    %v3083 = vlaneseq
    %v3084 = vshrl.u32 %v3083, 7
    %v3085 = vsub.s32 %v3082, %v3084
    %v3086 = vrot.slane %v3079, %v3085
    %v3088 = vunpack.c.l.s4 1966171168
    %v3089 = vunpack.c.0.s8 %v3088
    %v3090 = vlaneseq
    %v3091 = vshrl.u32 %v3090, 7
    %v3092 = vsub.s32 %v3089, %v3091
    %v3093 = vrot.slane %v3086, %v3092
    %s3095 = scalar_lea.vmem [#allocation2], 1
    %3096 = vst.msk [vmem:[%s3095] ss:$8 sm:$0x3] %vm2717, %v3093
    %3097 = vst.msk [vmem:[%s3095] ss:$8 sm:$0x0] %vm2717, %v3093
    %v3100 = vcombine.low %v3071, %v3072
    %v3102 = vunpack.c.l.s4 1966171168
    %v3103 = vunpack.c.0.s8 %v3102
    %v3104 = vlaneseq
    %v3105 = vshrl.u32 %v3104, 7
    %v3106 = vsub.s32 %v3103, %v3105
    %v3107 = vrot.slane %v3100, %v3106
    %v3109 = vunpack.c.l.s4 1966171168
    %v3110 = vunpack.c.0.s8 %v3109
    %v3111 = vlaneseq
    %v3112 = vshrl.u32 %v3111, 7
    %v3113 = vsub.s32 %v3110, %v3112
    %v3114 = vrot.slane %v3107, %v3113
    %s3116 = scalar_lea.vmem [#allocation2], 3
    %3117 = vst.msk [vmem:[%s3116] ss:$8 sm:$0x3] %vm2717, %v3114
    %3118 = vst.msk [vmem:[%s3116] ss:$8 sm:$0x0] %vm2717, %v3114
    %v3121 = vcombine.low %v3075, %v3076
    %v3123 = vunpack.c.l.s4 1966171168
    %v3124 = vunpack.c.0.s8 %v3123
    %v3125 = vlaneseq
    %v3126 = vshrl.u32 %v3125, 7
    %v3127 = vsub.s32 %v3124, %v3126
    %v3128 = vrot.slane %v3121, %v3127
    %v3130 = vunpack.c.l.s4 1966171168
    %v3131 = vunpack.c.0.s8 %v3130
    %v3132 = vlaneseq
    %v3133 = vshrl.u32 %v3132, 7
    %v3134 = vsub.s32 %v3131, %v3133
    %v3135 = vrot.slane %v3128, %v3134
    %s3137 = scalar_lea.vmem [#allocation2], 5
    %3138 = vst.msk [vmem:[%s3137] ss:$8 sm:$0x3] %vm2717, %v3135
    %3139 = vst.msk [vmem:[%s3137] ss:$8 sm:$0x0] %vm2717, %v3135
    %v3142 = vcombine.low %v2941, %v2958
    %v3144 = vunpack.c.l.s4 1966171168
    %v3145 = vunpack.c.0.s8 %v3144
    %v3146 = vlaneseq
    %v3147 = vshrl.u32 %v3146, 7
    %v3148 = vsub.s32 %v3145, %v3147
    %v3149 = vrot.slane %v3142, %v3148
    %v3151 = vunpack.c.l.s4 1966171168
    %v3152 = vunpack.c.0.s8 %v3151
    %v3153 = vlaneseq
    %v3154 = vshrl.u32 %v3153, 7
    %v3155 = vsub.s32 %v3152, %v3154
    %v3156 = vrot.slane %v3149, %v3155
    %s3158 = scalar_lea.vmem [#allocation2], 7
    %3159 = vst.msk [vmem:[%s3158] ss:$8 sm:$0x3] %vm2717, %v3156
    %3160 = vst.msk [vmem:[%s3158] ss:$8 sm:$0x0] %vm2717, %v3156
    %v3163 = vcombine.low %v2975, %v2992
    %v3165 = vunpack.c.l.s4 1966171168
    %v3166 = vunpack.c.0.s8 %v3165
    %v3167 = vlaneseq
    %v3168 = vshrl.u32 %v3167, 7
    %v3169 = vsub.s32 %v3166, %v3168
    %v3170 = vrot.slane %v3163, %v3169
    %v3172 = vunpack.c.l.s4 1966171168
    %v3173 = vunpack.c.0.s8 %v3172
    %v3174 = vlaneseq
    %v3175 = vshrl.u32 %v3174, 7
    %v3176 = vsub.s32 %v3173, %v3175
    %v3177 = vrot.slane %v3170, %v3176
    %s3179 = scalar_lea.vmem [#allocation2], 17
    %3180 = vst.msk [vmem:[%s3179] ss:$8 sm:$0x3] %vm2717, %v3177
    %3181 = vst.msk [vmem:[%s3179] ss:$8 sm:$0x0] %vm2717, %v3177
    %v3184 = vcombine.low %v3005, %v3018
    %v3186 = vunpack.c.l.s4 1966171168
    %v3187 = vunpack.c.0.s8 %v3186
    %v3188 = vlaneseq
    %v3189 = vshrl.u32 %v3188, 7
    %v3190 = vsub.s32 %v3187, %v3189
    %v3191 = vrot.slane %v3184, %v3190
    %v3193 = vunpack.c.l.s4 1966171168
    %v3194 = vunpack.c.0.s8 %v3193
    %v3195 = vlaneseq
    %v3196 = vshrl.u32 %v3195, 7
    %v3197 = vsub.s32 %v3194, %v3196
    %v3198 = vrot.slane %v3191, %v3197
    %s3200 = scalar_lea.vmem [#allocation2], 19
    %3201 = vst.msk [vmem:[%s3200] ss:$8 sm:$0x3] %vm2717, %v3198
    %3202 = vst.msk [vmem:[%s3200] ss:$8 sm:$0x0] %vm2717, %v3198
    %v3205 = vcombine.low %v3031, %v3044
    %v3207 = vunpack.c.l.s4 1966171168
    %v3208 = vunpack.c.0.s8 %v3207
    %v3209 = vlaneseq
    %v3210 = vshrl.u32 %v3209, 7
    %v3211 = vsub.s32 %v3208, %v3210
    %v3212 = vrot.slane %v3205, %v3211
    %v3214 = vunpack.c.l.s4 1966171168
    %v3215 = vunpack.c.0.s8 %v3214
    %v3216 = vlaneseq
    %v3217 = vshrl.u32 %v3216, 7
    %v3218 = vsub.s32 %v3215, %v3217
    %v3219 = vrot.slane %v3212, %v3218
    %s3221 = scalar_lea.vmem [#allocation2], 21
    %3222 = vst.msk [vmem:[%s3221] ss:$8 sm:$0x3] %vm2717, %v3219
    %3223 = vst.msk [vmem:[%s3221] ss:$8 sm:$0x0] %vm2717, %v3219
    %v3226 = vcombine.low %v3057, %v3070
    %v3228 = vunpack.c.l.s4 1966171168
    %v3229 = vunpack.c.0.s8 %v3228
    %v3230 = vlaneseq
    %v3231 = vshrl.u32 %v3230, 7
    %v3232 = vsub.s32 %v3229, %v3231
    %v3233 = vrot.slane %v3226, %v3232
    %v3235 = vunpack.c.l.s4 1966171168
    %v3236 = vunpack.c.0.s8 %v3235
    %v3237 = vlaneseq
    %v3238 = vshrl.u32 %v3237, 7
    %v3239 = vsub.s32 %v3236, %v3238
    %v3240 = vrot.slane %v3233, %v3239
    %s3242 = scalar_lea.vmem [#allocation2], 23
    %3243 = vst.msk [vmem:[%s3242] ss:$8 sm:$0x3] %vm2717, %v3240
    %3244 = vst.msk [vmem:[%s3242] ss:$8 sm:$0x0] %vm2717, %v3240
    %v3245 = vld [vmem:[#allocation2] sm:$0x3]
    %v3246 = vld [vmem:[#allocation2 + $0x8] sm:$0x3]
    %v3247 = vpack.c.bf16 %v3245, %v3245
    %v3248 = vpack.c.bf16 %v3246, %v3246
    %v3249 = vld [vmem:[#allocation6] sm:$0xf]
    %v3250 = vld [vmem:[#allocation6 + $0x4] sm:$0xf]
    %v3251 = vld [vmem:[#allocation6 + $0x8] sm:$0xf]
    %v3252 = vld [vmem:[#allocation6 + $0xc] sm:$0xf]
    %v3253 = vld [vmem:[#allocation6 + $0x10] sm:$0xf]
    %v3254 = vld [vmem:[#allocation6 + $0x14] sm:$0xf]
    %v3255 = vld [vmem:[#allocation6 + $0x18] sm:$0xf]
    %v3256 = vld [vmem:[#allocation6 + $0x1c] sm:$0xf]
    %v3257 = vld [vmem:[#allocation6 + $0x20] sm:$0xf]
    %v3258 = vld [vmem:[#allocation6 + $0x24] sm:$0xf]
    %v3259 = vld [vmem:[#allocation6 + $0x28] sm:$0xf]
    %v3260 = vld [vmem:[#allocation6 + $0x2c] sm:$0xf]
    %v3261 = vld [vmem:[#allocation6 + $0x30] sm:$0xf]
    %v3262 = vld [vmem:[#allocation6 + $0x34] sm:$0xf]
    %v3263 = vld [vmem:[#allocation6 + $0x38] sm:$0xf]
    %v3264 = vld [vmem:[#allocation6 + $0x3c] sm:$0xf]
    %v3265 = vld [vmem:[#allocation6 + $0x40] sm:$0xf]
    %v3266 = vld [vmem:[#allocation6 + $0x44] sm:$0xf]
    %v3267 = vld [vmem:[#allocation6 + $0x48] sm:$0xf]
    %v3268 = vld [vmem:[#allocation6 + $0x4c] sm:$0xf]
    %v3269 = vld [vmem:[#allocation6 + $0x50] sm:$0xf]
    %v3270 = vld [vmem:[#allocation6 + $0x54] sm:$0xf]
    %v3271 = vld [vmem:[#allocation6 + $0x58] sm:$0xf]
    %v3272 = vld [vmem:[#allocation6 + $0x5c] sm:$0xf]
    %v3273 = vld [vmem:[#allocation6 + $0x60] sm:$0xf]
    %v3274 = vld [vmem:[#allocation6 + $0x64] sm:$0xf]
    %v3275 = vld [vmem:[#allocation6 + $0x68] sm:$0xf]
    %v3276 = vld [vmem:[#allocation6 + $0x6c] sm:$0xf]
    %v3277 = vld [vmem:[#allocation6 + $0x70] sm:$0xf]
    %v3278 = vld [vmem:[#allocation6 + $0x74] sm:$0xf]
    %v3279 = vld [vmem:[#allocation6 + $0x78] sm:$0xf]
    %v3280 = vld [vmem:[#allocation6 + $0x7c] sm:$0xf]
    %v3313 = vunpack.c.l.b16 %v3249
    %v3314 = vunpack.c.l.b16 %v3250
    %v3315 = vunpack.c.l.b16 %v3251
    %v3316 = vunpack.c.l.b16 %v3252
    %v3317 = vunpack.c.l.b16 %v3253
    %v3318 = vunpack.c.l.b16 %v3254
    %v3319 = vunpack.c.l.b16 %v3255
    %v3320 = vunpack.c.l.b16 %v3256
    %v3321 = vunpack.c.l.b16 %v3257
    %v3322 = vunpack.c.l.b16 %v3258
    %v3323 = vunpack.c.l.b16 %v3259
    %v3324 = vunpack.c.l.b16 %v3260
    %v3325 = vunpack.c.l.b16 %v3261
    %v3326 = vunpack.c.l.b16 %v3262
    %v3327 = vunpack.c.l.b16 %v3263
    %v3328 = vunpack.c.l.b16 %v3264
    %v3329 = vunpack.c.l.b16 %v3265
    %v3330 = vunpack.c.l.b16 %v3266
    %v3331 = vunpack.c.l.b16 %v3267
    %v3332 = vunpack.c.l.b16 %v3268
    %v3333 = vunpack.c.l.b16 %v3269
    %v3334 = vunpack.c.l.b16 %v3270
    %v3335 = vunpack.c.l.b16 %v3271
    %v3336 = vunpack.c.l.b16 %v3272
    %v3337 = vunpack.c.l.b16 %v3273
    %v3338 = vunpack.c.l.b16 %v3274
    %v3339 = vunpack.c.l.b16 %v3275
    %v3340 = vunpack.c.l.b16 %v3276
    %v3341 = vunpack.c.l.b16 %v3277
    %v3342 = vunpack.c.l.b16 %v3278
    %v3343 = vunpack.c.l.b16 %v3279
    %v3344 = vunpack.c.l.b16 %v3280
    %v3345 = vpack.c.b16 %v3314, %v3313
    %v3346 = vpack.c.b16 %v3316, %v3315
    %v3347 = vpack.c.b16 %v3318, %v3317
    %v3348 = vpack.c.b16 %v3320, %v3319
    %v3349 = vpack.c.b16 %v3322, %v3321
    %v3350 = vpack.c.b16 %v3324, %v3323
    %v3351 = vpack.c.b16 %v3326, %v3325
    %v3352 = vpack.c.b16 %v3328, %v3327
    %v3353 = vpack.c.b16 %v3330, %v3329
    %v3354 = vpack.c.b16 %v3332, %v3331
    %v3355 = vpack.c.b16 %v3334, %v3333
    %v3356 = vpack.c.b16 %v3336, %v3335
    %v3357 = vpack.c.b16 %v3338, %v3337
    %v3358 = vpack.c.b16 %v3340, %v3339
    %v3359 = vpack.c.b16 %v3342, %v3341
    %v3360 = vpack.c.b16 %v3344, %v3343
    %3377 = vmatprep.subr.bf16.mxu0 0
    %3378 = vmatpush1.bf16.msra.mxu0 %v3352
    %3379 = vmatprep.subr.bf16.mxu0 0
    %3380 = vmatpush1.bf16.msra.mxu0 %v3351
    %3381 = vmatprep.subr.bf16.mxu0 0
    %3382 = vmatpush1.bf16.msra.mxu0 %v3350
    %3383 = vmatprep.subr.bf16.mxu0 0
    %3384 = vmatpush1.bf16.msra.mxu0 %v3349
    %3385 = vmatprep.subr.bf16.mxu0 0
    %3386 = vmatpush1.bf16.msra.mxu0 %v3348
    %3387 = vmatprep.subr.bf16.mxu0 0
    %3388 = vmatpush1.bf16.msra.mxu0 %v3347
    %3389 = vmatprep.subr.bf16.mxu0 0
    %3390 = vmatpush1.bf16.msra.mxu0 %v3346
    %3391 = vmatprep.subr.bf16.mxu0 0
    %3392 = vmatpush1.bf16.msra.mxu0 %v3345
    %3393 = vmatprep.subr.bf16.mxu0 0
    %3394 = vmatpush2.bf16.msra.mxu0 %v3360
    %3395 = vmatprep.subr.bf16.mxu0 0
    %3396 = vmatpush2.bf16.msra.mxu0 %v3359
    %3397 = vmatprep.subr.bf16.mxu0 0
    %3398 = vmatpush2.bf16.msra.mxu0 %v3358
    %3399 = vmatprep.subr.bf16.mxu0 0
    %3400 = vmatpush2.bf16.msra.mxu0 %v3357
    %3401 = vmatprep.subr.bf16.mxu0 0
    %3402 = vmatpush2.bf16.msra.mxu0 %v3356
    %3403 = vmatprep.subr.bf16.mxu0 0
    %3404 = vmatpush2.bf16.msra.mxu0 %v3355
    %3405 = vmatprep.subr.bf16.mxu0 0
    %3406 = vmatpush2.bf16.msra.mxu0 %v3354
    %3407 = vmatprep.subr.bf16.mxu0 0
    %3408 = vmatpush2.bf16.msra.mxu0 %v3353
    %3409 = vmatprep.mubr.bf16.mxu0 %v3248
    %3410 = vmatmul.mubr.bf16.gmra.mxu0 %v3247
    %v3411 = vpop.f32.mrf.mxu0
    %v3412 = vadd.f32 0.0, %v3411
    %v3413 = vpop.f32.mrf.mxu0
    %v3414 = vpop.f32.mrf.mxu0
    %v3415 = vpop.f32.mrf.mxu0
    %3416 = vdwg.mxu0
    %v3417 = vld [vmem:[%s6] sm:$0x1]
    %v3419 = vlaneseq
    %v3420 = vshrl.u32 %v3419, 7
    %v3421 = vsub.s32 0, %v3420
    %v3422 = vrot.slane %v3417, %v3421
    %v3424 = vmul.f32 %v3412, %v3422
    %v3425 = vld [vmem:[%s7] sm:$0x1]
    %v3427 = vlaneseq
    %v3428 = vshrl.u32 %v3427, 7
    %v3429 = vsub.s32 0, %v3428
    %v3430 = vrot.slane %v3425, %v3429
    %v3432 = vadd.f32 %v3424, %v3430
    %vm3433 = vcmp.ge.f32.partialorder %v3432, 0.0
    %v3434 = vld [vmem:[%s8] sm:$0x1]
    %v3436 = vlaneseq
    %v3437 = vshrl.u32 %v3436, 7
    %v3438 = vsub.s32 0, %v3437
    %v3439 = vrot.slane %v3434, %v3438
    %v3441 = vmul.f32 %v3439, %v3432
    %v3442 = vsel %vm3433, %v3432, %v3441
    %v3443 = vld [vmem:[#allocation2] sm:$0xc]
    %v3444 = vld [vmem:[#allocation2 + $0x8] sm:$0xc]
    %v3445 = vpack.c.bf16 %v3443, %v3443
    %v3446 = vpack.c.bf16 %v3444, %v3444
    %s3447 = scalar_lea.vmem [#allocation6], 128
    %v3448 = vld [vmem:[%s3447] sm:$0xf]
    %v3449 = vld [vmem:[%s3447 + $0x4] sm:$0xf]
    %v3450 = vld [vmem:[%s3447 + $0x8] sm:$0xf]
    %v3451 = vld [vmem:[%s3447 + $0xc] sm:$0xf]
    %v3452 = vld [vmem:[%s3447 + $0x10] sm:$0xf]
    %v3453 = vld [vmem:[%s3447 + $0x14] sm:$0xf]
    %v3454 = vld [vmem:[%s3447 + $0x18] sm:$0xf]
    %v3455 = vld [vmem:[%s3447 + $0x1c] sm:$0xf]
    %v3456 = vld [vmem:[%s3447 + $0x20] sm:$0xf]
    %v3457 = vld [vmem:[%s3447 + $0x24] sm:$0xf]
    %v3458 = vld [vmem:[%s3447 + $0x28] sm:$0xf]
    %v3459 = vld [vmem:[%s3447 + $0x2c] sm:$0xf]
    %v3460 = vld [vmem:[%s3447 + $0x30] sm:$0xf]
    %v3461 = vld [vmem:[%s3447 + $0x34] sm:$0xf]
    %v3462 = vld [vmem:[%s3447 + $0x38] sm:$0xf]
    %v3463 = vld [vmem:[%s3447 + $0x3c] sm:$0xf]
    %v3464 = vld [vmem:[%s3447 + $0x40] sm:$0xf]
    %v3465 = vld [vmem:[%s3447 + $0x44] sm:$0xf]
    %v3466 = vld [vmem:[%s3447 + $0x48] sm:$0xf]
    %v3467 = vld [vmem:[%s3447 + $0x4c] sm:$0xf]
    %v3468 = vld [vmem:[%s3447 + $0x50] sm:$0xf]
    %v3469 = vld [vmem:[%s3447 + $0x54] sm:$0xf]
    %v3470 = vld [vmem:[%s3447 + $0x58] sm:$0xf]
    %v3471 = vld [vmem:[%s3447 + $0x5c] sm:$0xf]
    %v3472 = vld [vmem:[%s3447 + $0x60] sm:$0xf]
    %v3473 = vld [vmem:[%s3447 + $0x64] sm:$0xf]
    %v3474 = vld [vmem:[%s3447 + $0x68] sm:$0xf]
    %v3475 = vld [vmem:[%s3447 + $0x6c] sm:$0xf]
    %v3476 = vld [vmem:[%s3447 + $0x70] sm:$0xf]
    %v3477 = vld [vmem:[%s3447 + $0x74] sm:$0xf]
    %v3478 = vld [vmem:[%s3447 + $0x78] sm:$0xf]
    %v3479 = vld [vmem:[%s3447 + $0x7c] sm:$0xf]
    %v3482 = vrot.slane %v3445, 1
    %v3483 = vrot.slane %v3446, 1
    %v3518 = vunpack.c.l.b16 %v3448
    %v3519 = vunpack.c.l.b16 %v3449
    %v3520 = vunpack.c.l.b16 %v3450
    %v3521 = vunpack.c.l.b16 %v3451
    %v3522 = vunpack.c.l.b16 %v3452
    %v3523 = vunpack.c.l.b16 %v3453
    %v3524 = vunpack.c.l.b16 %v3454
    %v3525 = vunpack.c.l.b16 %v3455
    %v3526 = vunpack.c.l.b16 %v3456
    %v3527 = vunpack.c.l.b16 %v3457
    %v3528 = vunpack.c.l.b16 %v3458
    %v3529 = vunpack.c.l.b16 %v3459
    %v3530 = vunpack.c.l.b16 %v3460
    %v3531 = vunpack.c.l.b16 %v3461
    %v3532 = vunpack.c.l.b16 %v3462
    %v3533 = vunpack.c.l.b16 %v3463
    %v3534 = vunpack.c.l.b16 %v3464
    %v3535 = vunpack.c.l.b16 %v3465
    %v3536 = vunpack.c.l.b16 %v3466
    %v3537 = vunpack.c.l.b16 %v3467
    %v3538 = vunpack.c.l.b16 %v3468
    %v3539 = vunpack.c.l.b16 %v3469
    %v3540 = vunpack.c.l.b16 %v3470
    %v3541 = vunpack.c.l.b16 %v3471
    %v3542 = vunpack.c.l.b16 %v3472
    %v3543 = vunpack.c.l.b16 %v3473
    %v3544 = vunpack.c.l.b16 %v3474
    %v3545 = vunpack.c.l.b16 %v3475
    %v3546 = vunpack.c.l.b16 %v3476
    %v3547 = vunpack.c.l.b16 %v3477
    %v3548 = vunpack.c.l.b16 %v3478
    %v3549 = vunpack.c.l.b16 %v3479
    %v3550 = vpack.c.b16 %v3519, %v3518
    %v3551 = vpack.c.b16 %v3521, %v3520
    %v3552 = vpack.c.b16 %v3523, %v3522
    %v3553 = vpack.c.b16 %v3525, %v3524
    %v3554 = vpack.c.b16 %v3527, %v3526
    %v3555 = vpack.c.b16 %v3529, %v3528
    %v3556 = vpack.c.b16 %v3531, %v3530
    %v3557 = vpack.c.b16 %v3533, %v3532
    %v3558 = vpack.c.b16 %v3535, %v3534
    %v3559 = vpack.c.b16 %v3537, %v3536
    %v3560 = vpack.c.b16 %v3539, %v3538
    %v3561 = vpack.c.b16 %v3541, %v3540
    %v3562 = vpack.c.b16 %v3543, %v3542
    %v3563 = vpack.c.b16 %v3545, %v3544
    %v3564 = vpack.c.b16 %v3547, %v3546
    %v3565 = vpack.c.b16 %v3549, %v3548
    %3582 = vmatprep.subr.bf16.mxu0 0
    %3583 = vmatpush1.bf16.msra.mxu0 %v3557
    %3584 = vmatprep.subr.bf16.mxu0 0
    %3585 = vmatpush1.bf16.msra.mxu0 %v3556
    %3586 = vmatprep.subr.bf16.mxu0 0
    %3587 = vmatpush1.bf16.msra.mxu0 %v3555
    %3588 = vmatprep.subr.bf16.mxu0 0
    %3589 = vmatpush1.bf16.msra.mxu0 %v3554
    %3590 = vmatprep.subr.bf16.mxu0 0
    %3591 = vmatpush1.bf16.msra.mxu0 %v3553
    %3592 = vmatprep.subr.bf16.mxu0 0
    %3593 = vmatpush1.bf16.msra.mxu0 %v3552
    %3594 = vmatprep.subr.bf16.mxu0 0
    %3595 = vmatpush1.bf16.msra.mxu0 %v3551
    %3596 = vmatprep.subr.bf16.mxu0 0
    %3597 = vmatpush1.bf16.msra.mxu0 %v3550
    %3598 = vmatprep.subr.bf16.mxu0 0
    %3599 = vmatpush2.bf16.msra.mxu0 %v3565
    %3600 = vmatprep.subr.bf16.mxu0 0
    %3601 = vmatpush2.bf16.msra.mxu0 %v3564
    %3602 = vmatprep.subr.bf16.mxu0 0
    %3603 = vmatpush2.bf16.msra.mxu0 %v3563
    %3604 = vmatprep.subr.bf16.mxu0 0
    %3605 = vmatpush2.bf16.msra.mxu0 %v3562
    %3606 = vmatprep.subr.bf16.mxu0 0
    %3607 = vmatpush2.bf16.msra.mxu0 %v3561
    %3608 = vmatprep.subr.bf16.mxu0 0
    %3609 = vmatpush2.bf16.msra.mxu0 %v3560
    %3610 = vmatprep.subr.bf16.mxu0 0
    %3611 = vmatpush2.bf16.msra.mxu0 %v3559
    %3612 = vmatprep.subr.bf16.mxu0 0
    %3613 = vmatpush2.bf16.msra.mxu0 %v3558
    %3614 = vmatprep.mubr.bf16.mxu0 %v3483
    %3615 = vmatmul.mubr.bf16.gmra.mxu0 %v3482
    %v3616 = vpop.f32.mrf.mxu0
    %v3617 = vadd.f32 0.0, %v3616
    %v3618 = vpop.f32.mrf.mxu0
    %v3619 = vpop.f32.mrf.mxu0
    %v3620 = vpop.f32.mrf.mxu0
    %3621 = vdwg.mxu0
    %s3622 = scalar_lea.vmem %s6, 1
    %v3623 = vld [vmem:[%s3622] sm:$0x1]
    %v3625 = vlaneseq
    %v3626 = vshrl.u32 %v3625, 7
    %v3627 = vsub.s32 0, %v3626
    %v3628 = vrot.slane %v3623, %v3627
    %v3630 = vmul.f32 %v3617, %v3628
    %s3631 = scalar_lea.vmem %s7, 1
    %v3632 = vld [vmem:[%s3631] sm:$0x1]
    %v3634 = vlaneseq
    %v3635 = vshrl.u32 %v3634, 7
    %v3636 = vsub.s32 0, %v3635
    %v3637 = vrot.slane %v3632, %v3636
    %v3639 = vadd.f32 %v3630, %v3637
    %vm3640 = vcmp.ge.f32.partialorder %v3639, 0.0
    %s3641 = scalar_lea.vmem %s8, 1
    %v3642 = vld [vmem:[%s3641] sm:$0x1]
    %v3644 = vlaneseq
    %v3645 = vshrl.u32 %v3644, 7
    %v3646 = vsub.s32 0, %v3645
    %v3647 = vrot.slane %v3642, %v3646
    %v3649 = vmul.f32 %v3647, %v3639
    %v3650 = vsel %vm3640, %v3639, %v3649
    %v3651 = vld [vmem:[#allocation2] sm:$0x30]
    %v3652 = vld [vmem:[#allocation2 + $0x8] sm:$0x30]
    %v3653 = vpack.c.bf16 %v3651, %v3651
    %v3654 = vpack.c.bf16 %v3652, %v3652
    %s3655 = scalar_lea.vmem [#allocation6], 256
    %v3656 = vld [vmem:[%s3655] sm:$0xf]
    %v3657 = vld [vmem:[%s3655 + $0x4] sm:$0xf]
    %v3658 = vld [vmem:[%s3655 + $0x8] sm:$0xf]
    %v3659 = vld [vmem:[%s3655 + $0xc] sm:$0xf]
    %v3660 = vld [vmem:[%s3655 + $0x10] sm:$0xf]
    %v3661 = vld [vmem:[%s3655 + $0x14] sm:$0xf]
    %v3662 = vld [vmem:[%s3655 + $0x18] sm:$0xf]
    %v3663 = vld [vmem:[%s3655 + $0x1c] sm:$0xf]
    %v3664 = vld [vmem:[%s3655 + $0x20] sm:$0xf]
    %v3665 = vld [vmem:[%s3655 + $0x24] sm:$0xf]
    %v3666 = vld [vmem:[%s3655 + $0x28] sm:$0xf]
    %v3667 = vld [vmem:[%s3655 + $0x2c] sm:$0xf]
    %v3668 = vld [vmem:[%s3655 + $0x30] sm:$0xf]
    %v3669 = vld [vmem:[%s3655 + $0x34] sm:$0xf]
    %v3670 = vld [vmem:[%s3655 + $0x38] sm:$0xf]
    %v3671 = vld [vmem:[%s3655 + $0x3c] sm:$0xf]
    %v3672 = vld [vmem:[%s3655 + $0x40] sm:$0xf]
    %v3673 = vld [vmem:[%s3655 + $0x44] sm:$0xf]
    %v3674 = vld [vmem:[%s3655 + $0x48] sm:$0xf]
    %v3675 = vld [vmem:[%s3655 + $0x4c] sm:$0xf]
    %v3676 = vld [vmem:[%s3655 + $0x50] sm:$0xf]
    %v3677 = vld [vmem:[%s3655 + $0x54] sm:$0xf]
    %v3678 = vld [vmem:[%s3655 + $0x58] sm:$0xf]
    %v3679 = vld [vmem:[%s3655 + $0x5c] sm:$0xf]
    %v3680 = vld [vmem:[%s3655 + $0x60] sm:$0xf]
    %v3681 = vld [vmem:[%s3655 + $0x64] sm:$0xf]
    %v3682 = vld [vmem:[%s3655 + $0x68] sm:$0xf]
    %v3683 = vld [vmem:[%s3655 + $0x6c] sm:$0xf]
    %v3684 = vld [vmem:[%s3655 + $0x70] sm:$0xf]
    %v3685 = vld [vmem:[%s3655 + $0x74] sm:$0xf]
    %v3686 = vld [vmem:[%s3655 + $0x78] sm:$0xf]
    %v3687 = vld [vmem:[%s3655 + $0x7c] sm:$0xf]
    %v3690 = vrot.slane %v3653, 2
    %v3691 = vrot.slane %v3654, 2
    %v3726 = vunpack.c.l.b16 %v3656
    %v3727 = vunpack.c.l.b16 %v3657
    %v3728 = vunpack.c.l.b16 %v3658
    %v3729 = vunpack.c.l.b16 %v3659
    %v3730 = vunpack.c.l.b16 %v3660
    %v3731 = vunpack.c.l.b16 %v3661
    %v3732 = vunpack.c.l.b16 %v3662
    %v3733 = vunpack.c.l.b16 %v3663
    %v3734 = vunpack.c.l.b16 %v3664
    %v3735 = vunpack.c.l.b16 %v3665
    %v3736 = vunpack.c.l.b16 %v3666
    %v3737 = vunpack.c.l.b16 %v3667
    %v3738 = vunpack.c.l.b16 %v3668
    %v3739 = vunpack.c.l.b16 %v3669
    %v3740 = vunpack.c.l.b16 %v3670
    %v3741 = vunpack.c.l.b16 %v3671
    %v3742 = vunpack.c.l.b16 %v3672
    %v3743 = vunpack.c.l.b16 %v3673
    %v3744 = vunpack.c.l.b16 %v3674
    %v3745 = vunpack.c.l.b16 %v3675
    %v3746 = vunpack.c.l.b16 %v3676
    %v3747 = vunpack.c.l.b16 %v3677
    %v3748 = vunpack.c.l.b16 %v3678
    %v3749 = vunpack.c.l.b16 %v3679
    %v3750 = vunpack.c.l.b16 %v3680
    %v3751 = vunpack.c.l.b16 %v3681
    %v3752 = vunpack.c.l.b16 %v3682
    %v3753 = vunpack.c.l.b16 %v3683
    %v3754 = vunpack.c.l.b16 %v3684
    %v3755 = vunpack.c.l.b16 %v3685
    %v3756 = vunpack.c.l.b16 %v3686
    %v3757 = vunpack.c.l.b16 %v3687
    %v3758 = vpack.c.b16 %v3727, %v3726
    %v3759 = vpack.c.b16 %v3729, %v3728
    %v3760 = vpack.c.b16 %v3731, %v3730
    %v3761 = vpack.c.b16 %v3733, %v3732
    %v3762 = vpack.c.b16 %v3735, %v3734
    %v3763 = vpack.c.b16 %v3737, %v3736
    %v3764 = vpack.c.b16 %v3739, %v3738
    %v3765 = vpack.c.b16 %v3741, %v3740
    %v3766 = vpack.c.b16 %v3743, %v3742
    %v3767 = vpack.c.b16 %v3745, %v3744
    %v3768 = vpack.c.b16 %v3747, %v3746
    %v3769 = vpack.c.b16 %v3749, %v3748
    %v3770 = vpack.c.b16 %v3751, %v3750
    %v3771 = vpack.c.b16 %v3753, %v3752
    %v3772 = vpack.c.b16 %v3755, %v3754
    %v3773 = vpack.c.b16 %v3757, %v3756
    %3790 = vmatprep.subr.bf16.mxu0 0
    %3791 = vmatpush1.bf16.msra.mxu0 %v3765
    %3792 = vmatprep.subr.bf16.mxu0 0
    %3793 = vmatpush1.bf16.msra.mxu0 %v3764
    %3794 = vmatprep.subr.bf16.mxu0 0
    %3795 = vmatpush1.bf16.msra.mxu0 %v3763
    %3796 = vmatprep.subr.bf16.mxu0 0
    %3797 = vmatpush1.bf16.msra.mxu0 %v3762
    %3798 = vmatprep.subr.bf16.mxu0 0
    %3799 = vmatpush1.bf16.msra.mxu0 %v3761
    %3800 = vmatprep.subr.bf16.mxu0 0
    %3801 = vmatpush1.bf16.msra.mxu0 %v3760
    %3802 = vmatprep.subr.bf16.mxu0 0
    %3803 = vmatpush1.bf16.msra.mxu0 %v3759
    %3804 = vmatprep.subr.bf16.mxu0 0
    %3805 = vmatpush1.bf16.msra.mxu0 %v3758
    %3806 = vmatprep.subr.bf16.mxu0 0
    %3807 = vmatpush2.bf16.msra.mxu0 %v3773
    %3808 = vmatprep.subr.bf16.mxu0 0
    %3809 = vmatpush2.bf16.msra.mxu0 %v3772
    %3810 = vmatprep.subr.bf16.mxu0 0
    %3811 = vmatpush2.bf16.msra.mxu0 %v3771
    %3812 = vmatprep.subr.bf16.mxu0 0
    %3813 = vmatpush2.bf16.msra.mxu0 %v3770
    %3814 = vmatprep.subr.bf16.mxu0 0
    %3815 = vmatpush2.bf16.msra.mxu0 %v3769
    %3816 = vmatprep.subr.bf16.mxu0 0
    %3817 = vmatpush2.bf16.msra.mxu0 %v3768
    %3818 = vmatprep.subr.bf16.mxu0 0
    %3819 = vmatpush2.bf16.msra.mxu0 %v3767
    %3820 = vmatprep.subr.bf16.mxu0 0
    %3821 = vmatpush2.bf16.msra.mxu0 %v3766
    %3822 = vmatprep.mubr.bf16.mxu0 %v3691
    %3823 = vmatmul.mubr.bf16.gmra.mxu0 %v3690
    %v3824 = vpop.f32.mrf.mxu0
    %v3825 = vadd.f32 0.0, %v3824
    %v3826 = vpop.f32.mrf.mxu0
    %v3827 = vpop.f32.mrf.mxu0
    %v3828 = vpop.f32.mrf.mxu0
    %3829 = vdwg.mxu0
    %s3830 = scalar_lea.vmem %s6, 2
    %v3831 = vld [vmem:[%s3830] sm:$0x1]
    %v3833 = vlaneseq
    %v3834 = vshrl.u32 %v3833, 7
    %v3835 = vsub.s32 0, %v3834
    %v3836 = vrot.slane %v3831, %v3835
    %v3838 = vmul.f32 %v3825, %v3836
    %s3839 = scalar_lea.vmem %s7, 2
    %v3840 = vld [vmem:[%s3839] sm:$0x1]
    %v3842 = vlaneseq
    %v3843 = vshrl.u32 %v3842, 7
    %v3844 = vsub.s32 0, %v3843
    %v3845 = vrot.slane %v3840, %v3844
    %v3847 = vadd.f32 %v3838, %v3845
    %vm3848 = vcmp.ge.f32.partialorder %v3847, 0.0
    %s3849 = scalar_lea.vmem %s8, 2
    %v3850 = vld [vmem:[%s3849] sm:$0x1]
    %v3852 = vlaneseq
    %v3853 = vshrl.u32 %v3852, 7
    %v3854 = vsub.s32 0, %v3853
    %v3855 = vrot.slane %v3850, %v3854
    %v3857 = vmul.f32 %v3855, %v3847
    %v3858 = vsel %vm3848, %v3847, %v3857
    %v3859 = vld [vmem:[#allocation2] sm:$0xc0]
    %v3860 = vld [vmem:[#allocation2 + $0x8] sm:$0xc0]
    %v3861 = vpack.c.bf16 %v3859, %v3859
    %v3862 = vpack.c.bf16 %v3860, %v3860
    %s3863 = scalar_lea.vmem [#allocation6], 384
    %v3864 = vld [vmem:[%s3863] sm:$0xf]
    %v3865 = vld [vmem:[%s3863 + $0x4] sm:$0xf]
    %v3866 = vld [vmem:[%s3863 + $0x8] sm:$0xf]
    %v3867 = vld [vmem:[%s3863 + $0xc] sm:$0xf]
    %v3868 = vld [vmem:[%s3863 + $0x10] sm:$0xf]
    %v3869 = vld [vmem:[%s3863 + $0x14] sm:$0xf]
    %v3870 = vld [vmem:[%s3863 + $0x18] sm:$0xf]
    %v3871 = vld [vmem:[%s3863 + $0x1c] sm:$0xf]
    %v3872 = vld [vmem:[%s3863 + $0x20] sm:$0xf]
    %v3873 = vld [vmem:[%s3863 + $0x24] sm:$0xf]
    %v3874 = vld [vmem:[%s3863 + $0x28] sm:$0xf]
    %v3875 = vld [vmem:[%s3863 + $0x2c] sm:$0xf]
    %v3876 = vld [vmem:[%s3863 + $0x30] sm:$0xf]
    %v3877 = vld [vmem:[%s3863 + $0x34] sm:$0xf]
    %v3878 = vld [vmem:[%s3863 + $0x38] sm:$0xf]
    %v3879 = vld [vmem:[%s3863 + $0x3c] sm:$0xf]
    %v3880 = vld [vmem:[%s3863 + $0x40] sm:$0xf]
    %v3881 = vld [vmem:[%s3863 + $0x44] sm:$0xf]
    %v3882 = vld [vmem:[%s3863 + $0x48] sm:$0xf]
    %v3883 = vld [vmem:[%s3863 + $0x4c] sm:$0xf]
    %v3884 = vld [vmem:[%s3863 + $0x50] sm:$0xf]
    %v3885 = vld [vmem:[%s3863 + $0x54] sm:$0xf]
    %v3886 = vld [vmem:[%s3863 + $0x58] sm:$0xf]
    %v3887 = vld [vmem:[%s3863 + $0x5c] sm:$0xf]
    %v3888 = vld [vmem:[%s3863 + $0x60] sm:$0xf]
    %v3889 = vld [vmem:[%s3863 + $0x64] sm:$0xf]
    %v3890 = vld [vmem:[%s3863 + $0x68] sm:$0xf]
    %v3891 = vld [vmem:[%s3863 + $0x6c] sm:$0xf]
    %v3892 = vld [vmem:[%s3863 + $0x70] sm:$0xf]
    %v3893 = vld [vmem:[%s3863 + $0x74] sm:$0xf]
    %v3894 = vld [vmem:[%s3863 + $0x78] sm:$0xf]
    %v3895 = vld [vmem:[%s3863 + $0x7c] sm:$0xf]
    %v3898 = vrot.slane %v3861, 3
    %v3899 = vrot.slane %v3862, 3
    %v3934 = vunpack.c.l.b16 %v3864
    %v3935 = vunpack.c.l.b16 %v3865
    %v3936 = vunpack.c.l.b16 %v3866
    %v3937 = vunpack.c.l.b16 %v3867
    %v3938 = vunpack.c.l.b16 %v3868
    %v3939 = vunpack.c.l.b16 %v3869
    %v3940 = vunpack.c.l.b16 %v3870
    %v3941 = vunpack.c.l.b16 %v3871
    %v3942 = vunpack.c.l.b16 %v3872
    %v3943 = vunpack.c.l.b16 %v3873
    %v3944 = vunpack.c.l.b16 %v3874
    %v3945 = vunpack.c.l.b16 %v3875
    %v3946 = vunpack.c.l.b16 %v3876
    %v3947 = vunpack.c.l.b16 %v3877
    %v3948 = vunpack.c.l.b16 %v3878
    %v3949 = vunpack.c.l.b16 %v3879
    %v3950 = vunpack.c.l.b16 %v3880
    %v3951 = vunpack.c.l.b16 %v3881
    %v3952 = vunpack.c.l.b16 %v3882
    %v3953 = vunpack.c.l.b16 %v3883
    %v3954 = vunpack.c.l.b16 %v3884
    %v3955 = vunpack.c.l.b16 %v3885
    %v3956 = vunpack.c.l.b16 %v3886
    %v3957 = vunpack.c.l.b16 %v3887
    %v3958 = vunpack.c.l.b16 %v3888
    %v3959 = vunpack.c.l.b16 %v3889
    %v3960 = vunpack.c.l.b16 %v3890
    %v3961 = vunpack.c.l.b16 %v3891
    %v3962 = vunpack.c.l.b16 %v3892
    %v3963 = vunpack.c.l.b16 %v3893
    %v3964 = vunpack.c.l.b16 %v3894
    %v3965 = vunpack.c.l.b16 %v3895
    %v3966 = vpack.c.b16 %v3935, %v3934
    %v3967 = vpack.c.b16 %v3937, %v3936
    %v3968 = vpack.c.b16 %v3939, %v3938
    %v3969 = vpack.c.b16 %v3941, %v3940
    %v3970 = vpack.c.b16 %v3943, %v3942
    %v3971 = vpack.c.b16 %v3945, %v3944
    %v3972 = vpack.c.b16 %v3947, %v3946
    %v3973 = vpack.c.b16 %v3949, %v3948
    %v3974 = vpack.c.b16 %v3951, %v3950
    %v3975 = vpack.c.b16 %v3953, %v3952
    %v3976 = vpack.c.b16 %v3955, %v3954
    %v3977 = vpack.c.b16 %v3957, %v3956
    %v3978 = vpack.c.b16 %v3959, %v3958
    %v3979 = vpack.c.b16 %v3961, %v3960
    %v3980 = vpack.c.b16 %v3963, %v3962
    %v3981 = vpack.c.b16 %v3965, %v3964
    %3998 = vmatprep.subr.bf16.mxu0 0
    %3999 = vmatpush1.bf16.msra.mxu0 %v3973
    %4000 = vmatprep.subr.bf16.mxu0 0
    %4001 = vmatpush1.bf16.msra.mxu0 %v3972
    %4002 = vmatprep.subr.bf16.mxu0 0
    %4003 = vmatpush1.bf16.msra.mxu0 %v3971
    %4004 = vmatprep.subr.bf16.mxu0 0
    %4005 = vmatpush1.bf16.msra.mxu0 %v3970
    %4006 = vmatprep.subr.bf16.mxu0 0
    %4007 = vmatpush1.bf16.msra.mxu0 %v3969
    %4008 = vmatprep.subr.bf16.mxu0 0
    %4009 = vmatpush1.bf16.msra.mxu0 %v3968
    %4010 = vmatprep.subr.bf16.mxu0 0
    %4011 = vmatpush1.bf16.msra.mxu0 %v3967
    %4012 = vmatprep.subr.bf16.mxu0 0
    %4013 = vmatpush1.bf16.msra.mxu0 %v3966
    %4014 = vmatprep.subr.bf16.mxu0 0
    %4015 = vmatpush2.bf16.msra.mxu0 %v3981
    %4016 = vmatprep.subr.bf16.mxu0 0
    %4017 = vmatpush2.bf16.msra.mxu0 %v3980
    %4018 = vmatprep.subr.bf16.mxu0 0
    %4019 = vmatpush2.bf16.msra.mxu0 %v3979
    %4020 = vmatprep.subr.bf16.mxu0 0
    %4021 = vmatpush2.bf16.msra.mxu0 %v3978
    %4022 = vmatprep.subr.bf16.mxu0 0
    %4023 = vmatpush2.bf16.msra.mxu0 %v3977
    %4024 = vmatprep.subr.bf16.mxu0 0
    %4025 = vmatpush2.bf16.msra.mxu0 %v3976
    %4026 = vmatprep.subr.bf16.mxu0 0
    %4027 = vmatpush2.bf16.msra.mxu0 %v3975
    %4028 = vmatprep.subr.bf16.mxu0 0
    %4029 = vmatpush2.bf16.msra.mxu0 %v3974
    %4030 = vmatprep.mubr.bf16.mxu0 %v3899
    %4031 = vmatmul.mubr.bf16.gmra.mxu0 %v3898
    %v4032 = vpop.f32.mrf.mxu0
    %v4033 = vadd.f32 0.0, %v4032
    %v4034 = vpop.f32.mrf.mxu0
    %v4035 = vpop.f32.mrf.mxu0
    %v4036 = vpop.f32.mrf.mxu0
    %4037 = vdwg.mxu0
    %s4038 = scalar_lea.vmem %s6, 3
    %v4039 = vld [vmem:[%s4038] sm:$0x1]
    %v4041 = vlaneseq
    %v4042 = vshrl.u32 %v4041, 7
    %v4043 = vsub.s32 0, %v4042
    %v4044 = vrot.slane %v4039, %v4043
    %v4046 = vmul.f32 %v4033, %v4044
    %s4047 = scalar_lea.vmem %s7, 3
    %v4048 = vld [vmem:[%s4047] sm:$0x1]
    %v4050 = vlaneseq
    %v4051 = vshrl.u32 %v4050, 7
    %v4052 = vsub.s32 0, %v4051
    %v4053 = vrot.slane %v4048, %v4052
    %v4055 = vadd.f32 %v4046, %v4053
    %vm4056 = vcmp.ge.f32.partialorder %v4055, 0.0
    %s4057 = scalar_lea.vmem %s8, 3
    %v4058 = vld [vmem:[%s4057] sm:$0x1]
    %v4060 = vlaneseq
    %v4061 = vshrl.u32 %v4060, 7
    %v4062 = vsub.s32 0, %v4061
    %v4063 = vrot.slane %v4058, %v4062
    %v4065 = vmul.f32 %v4063, %v4055
    %v4066 = vsel %vm4056, %v4055, %v4065
    %v4067 = vld [vmem:[#allocation2 + $0x10] sm:$0x3]
    %v4068 = vld [vmem:[#allocation2 + $0x18] sm:$0x3]
    %v4069 = vpack.c.bf16 %v4067, %v4067
    %v4070 = vpack.c.bf16 %v4068, %v4068
    %s4071 = scalar_lea.vmem [#allocation6], 512
    %v4072 = vld [vmem:[%s4071] sm:$0xf]
    %v4073 = vld [vmem:[%s4071 + $0x4] sm:$0xf]
    %v4074 = vld [vmem:[%s4071 + $0x8] sm:$0xf]
    %v4075 = vld [vmem:[%s4071 + $0xc] sm:$0xf]
    %v4076 = vld [vmem:[%s4071 + $0x10] sm:$0xf]
    %v4077 = vld [vmem:[%s4071 + $0x14] sm:$0xf]
    %v4078 = vld [vmem:[%s4071 + $0x18] sm:$0xf]
    %v4079 = vld [vmem:[%s4071 + $0x1c] sm:$0xf]
    %v4080 = vld [vmem:[%s4071 + $0x20] sm:$0xf]
    %v4081 = vld [vmem:[%s4071 + $0x24] sm:$0xf]
    %v4082 = vld [vmem:[%s4071 + $0x28] sm:$0xf]
    %v4083 = vld [vmem:[%s4071 + $0x2c] sm:$0xf]
    %v4084 = vld [vmem:[%s4071 + $0x30] sm:$0xf]
    %v4085 = vld [vmem:[%s4071 + $0x34] sm:$0xf]
    %v4086 = vld [vmem:[%s4071 + $0x38] sm:$0xf]
    %v4087 = vld [vmem:[%s4071 + $0x3c] sm:$0xf]
    %v4088 = vld [vmem:[%s4071 + $0x40] sm:$0xf]
    %v4089 = vld [vmem:[%s4071 + $0x44] sm:$0xf]
    %v4090 = vld [vmem:[%s4071 + $0x48] sm:$0xf]
    %v4091 = vld [vmem:[%s4071 + $0x4c] sm:$0xf]
    %v4092 = vld [vmem:[%s4071 + $0x50] sm:$0xf]
    %v4093 = vld [vmem:[%s4071 + $0x54] sm:$0xf]
    %v4094 = vld [vmem:[%s4071 + $0x58] sm:$0xf]
    %v4095 = vld [vmem:[%s4071 + $0x5c] sm:$0xf]
    %v4096 = vld [vmem:[%s4071 + $0x60] sm:$0xf]
    %v4097 = vld [vmem:[%s4071 + $0x64] sm:$0xf]
    %v4098 = vld [vmem:[%s4071 + $0x68] sm:$0xf]
    %v4099 = vld [vmem:[%s4071 + $0x6c] sm:$0xf]
    %v4100 = vld [vmem:[%s4071 + $0x70] sm:$0xf]
    %v4101 = vld [vmem:[%s4071 + $0x74] sm:$0xf]
    %v4102 = vld [vmem:[%s4071 + $0x78] sm:$0xf]
    %v4103 = vld [vmem:[%s4071 + $0x7c] sm:$0xf]
    %v4136 = vunpack.c.l.b16 %v4072
    %v4137 = vunpack.c.l.b16 %v4073
    %v4138 = vunpack.c.l.b16 %v4074
    %v4139 = vunpack.c.l.b16 %v4075
    %v4140 = vunpack.c.l.b16 %v4076
    %v4141 = vunpack.c.l.b16 %v4077
    %v4142 = vunpack.c.l.b16 %v4078
    %v4143 = vunpack.c.l.b16 %v4079
    %v4144 = vunpack.c.l.b16 %v4080
    %v4145 = vunpack.c.l.b16 %v4081
    %v4146 = vunpack.c.l.b16 %v4082
    %v4147 = vunpack.c.l.b16 %v4083
    %v4148 = vunpack.c.l.b16 %v4084
    %v4149 = vunpack.c.l.b16 %v4085
    %v4150 = vunpack.c.l.b16 %v4086
    %v4151 = vunpack.c.l.b16 %v4087
    %v4152 = vunpack.c.l.b16 %v4088
    %v4153 = vunpack.c.l.b16 %v4089
    %v4154 = vunpack.c.l.b16 %v4090
    %v4155 = vunpack.c.l.b16 %v4091
    %v4156 = vunpack.c.l.b16 %v4092
    %v4157 = vunpack.c.l.b16 %v4093
    %v4158 = vunpack.c.l.b16 %v4094
    %v4159 = vunpack.c.l.b16 %v4095
    %v4160 = vunpack.c.l.b16 %v4096
    %v4161 = vunpack.c.l.b16 %v4097
    %v4162 = vunpack.c.l.b16 %v4098
    %v4163 = vunpack.c.l.b16 %v4099
    %v4164 = vunpack.c.l.b16 %v4100
    %v4165 = vunpack.c.l.b16 %v4101
    %v4166 = vunpack.c.l.b16 %v4102
    %v4167 = vunpack.c.l.b16 %v4103
    %v4168 = vpack.c.b16 %v4137, %v4136
    %v4169 = vpack.c.b16 %v4139, %v4138
    %v4170 = vpack.c.b16 %v4141, %v4140
    %v4171 = vpack.c.b16 %v4143, %v4142
    %v4172 = vpack.c.b16 %v4145, %v4144
    %v4173 = vpack.c.b16 %v4147, %v4146
    %v4174 = vpack.c.b16 %v4149, %v4148
    %v4175 = vpack.c.b16 %v4151, %v4150
    %v4176 = vpack.c.b16 %v4153, %v4152
    %v4177 = vpack.c.b16 %v4155, %v4154
    %v4178 = vpack.c.b16 %v4157, %v4156
    %v4179 = vpack.c.b16 %v4159, %v4158
    %v4180 = vpack.c.b16 %v4161, %v4160
    %v4181 = vpack.c.b16 %v4163, %v4162
    %v4182 = vpack.c.b16 %v4165, %v4164
    %v4183 = vpack.c.b16 %v4167, %v4166
    %4200 = vmatprep.subr.bf16.mxu0 0
    %4201 = vmatpush1.bf16.msra.mxu0 %v4175
    %4202 = vmatprep.subr.bf16.mxu0 0
    %4203 = vmatpush1.bf16.msra.mxu0 %v4174
    %4204 = vmatprep.subr.bf16.mxu0 0
    %4205 = vmatpush1.bf16.msra.mxu0 %v4173
    %4206 = vmatprep.subr.bf16.mxu0 0
    %4207 = vmatpush1.bf16.msra.mxu0 %v4172
    %4208 = vmatprep.subr.bf16.mxu0 0
    %4209 = vmatpush1.bf16.msra.mxu0 %v4171
    %4210 = vmatprep.subr.bf16.mxu0 0
    %4211 = vmatpush1.bf16.msra.mxu0 %v4170
    %4212 = vmatprep.subr.bf16.mxu0 0
    %4213 = vmatpush1.bf16.msra.mxu0 %v4169
    %4214 = vmatprep.subr.bf16.mxu0 0
    %4215 = vmatpush1.bf16.msra.mxu0 %v4168
    %4216 = vmatprep.subr.bf16.mxu0 0
    %4217 = vmatpush2.bf16.msra.mxu0 %v4183
    %4218 = vmatprep.subr.bf16.mxu0 0
    %4219 = vmatpush2.bf16.msra.mxu0 %v4182
    %4220 = vmatprep.subr.bf16.mxu0 0
    %4221 = vmatpush2.bf16.msra.mxu0 %v4181
    %4222 = vmatprep.subr.bf16.mxu0 0
    %4223 = vmatpush2.bf16.msra.mxu0 %v4180
    %4224 = vmatprep.subr.bf16.mxu0 0
    %4225 = vmatpush2.bf16.msra.mxu0 %v4179
    %4226 = vmatprep.subr.bf16.mxu0 0
    %4227 = vmatpush2.bf16.msra.mxu0 %v4178
    %4228 = vmatprep.subr.bf16.mxu0 0
    %4229 = vmatpush2.bf16.msra.mxu0 %v4177
    %4230 = vmatprep.subr.bf16.mxu0 0
    %4231 = vmatpush2.bf16.msra.mxu0 %v4176
    %4232 = vmatprep.mubr.bf16.mxu0 %v4070
    %4233 = vmatmul.mubr.bf16.gmra.mxu0 %v4069
    %v4234 = vpop.f32.mrf.mxu0
    %v4235 = vadd.f32 0.0, %v4234
    %v4236 = vpop.f32.mrf.mxu0
    %v4237 = vpop.f32.mrf.mxu0
    %v4238 = vpop.f32.mrf.mxu0
    %4239 = vdwg.mxu0
    %s4240 = scalar_lea.vmem %s6, 4
    %v4241 = vld [vmem:[%s4240] sm:$0x1]
    %v4243 = vlaneseq
    %v4244 = vshrl.u32 %v4243, 7
    %v4245 = vsub.s32 0, %v4244
    %v4246 = vrot.slane %v4241, %v4245
    %v4248 = vmul.f32 %v4235, %v4246
    %s4249 = scalar_lea.vmem %s7, 4
    %v4250 = vld [vmem:[%s4249] sm:$0x1]
    %v4252 = vlaneseq
    %v4253 = vshrl.u32 %v4252, 7
    %v4254 = vsub.s32 0, %v4253
    %v4255 = vrot.slane %v4250, %v4254
    %v4257 = vadd.f32 %v4248, %v4255
    %vm4258 = vcmp.ge.f32.partialorder %v4257, 0.0
    %s4259 = scalar_lea.vmem %s8, 4
    %v4260 = vld [vmem:[%s4259] sm:$0x1]
    %v4262 = vlaneseq
    %v4263 = vshrl.u32 %v4262, 7
    %v4264 = vsub.s32 0, %v4263
    %v4265 = vrot.slane %v4260, %v4264
    %v4267 = vmul.f32 %v4265, %v4257
    %v4268 = vsel %vm4258, %v4257, %v4267
    %v4269 = vld [vmem:[#allocation2 + $0x10] sm:$0xc]
    %v4270 = vld [vmem:[#allocation2 + $0x18] sm:$0xc]
    %v4271 = vpack.c.bf16 %v4269, %v4269
    %v4272 = vpack.c.bf16 %v4270, %v4270
    %s4273 = scalar_lea.vmem [#allocation6], 640
    %v4274 = vld [vmem:[%s4273] sm:$0xf]
    %v4275 = vld [vmem:[%s4273 + $0x4] sm:$0xf]
    %v4276 = vld [vmem:[%s4273 + $0x8] sm:$0xf]
    %v4277 = vld [vmem:[%s4273 + $0xc] sm:$0xf]
    %v4278 = vld [vmem:[%s4273 + $0x10] sm:$0xf]
    %v4279 = vld [vmem:[%s4273 + $0x14] sm:$0xf]
    %v4280 = vld [vmem:[%s4273 + $0x18] sm:$0xf]
    %v4281 = vld [vmem:[%s4273 + $0x1c] sm:$0xf]
    %v4282 = vld [vmem:[%s4273 + $0x20] sm:$0xf]
    %v4283 = vld [vmem:[%s4273 + $0x24] sm:$0xf]
    %v4284 = vld [vmem:[%s4273 + $0x28] sm:$0xf]
    %v4285 = vld [vmem:[%s4273 + $0x2c] sm:$0xf]
    %v4286 = vld [vmem:[%s4273 + $0x30] sm:$0xf]
    %v4287 = vld [vmem:[%s4273 + $0x34] sm:$0xf]
    %v4288 = vld [vmem:[%s4273 + $0x38] sm:$0xf]
    %v4289 = vld [vmem:[%s4273 + $0x3c] sm:$0xf]
    %v4290 = vld [vmem:[%s4273 + $0x40] sm:$0xf]
    %v4291 = vld [vmem:[%s4273 + $0x44] sm:$0xf]
    %v4292 = vld [vmem:[%s4273 + $0x48] sm:$0xf]
    %v4293 = vld [vmem:[%s4273 + $0x4c] sm:$0xf]
    %v4294 = vld [vmem:[%s4273 + $0x50] sm:$0xf]
    %v4295 = vld [vmem:[%s4273 + $0x54] sm:$0xf]
    %v4296 = vld [vmem:[%s4273 + $0x58] sm:$0xf]
    %v4297 = vld [vmem:[%s4273 + $0x5c] sm:$0xf]
    %v4298 = vld [vmem:[%s4273 + $0x60] sm:$0xf]
    %v4299 = vld [vmem:[%s4273 + $0x64] sm:$0xf]
    %v4300 = vld [vmem:[%s4273 + $0x68] sm:$0xf]
    %v4301 = vld [vmem:[%s4273 + $0x6c] sm:$0xf]
    %v4302 = vld [vmem:[%s4273 + $0x70] sm:$0xf]
    %v4303 = vld [vmem:[%s4273 + $0x74] sm:$0xf]
    %v4304 = vld [vmem:[%s4273 + $0x78] sm:$0xf]
    %v4305 = vld [vmem:[%s4273 + $0x7c] sm:$0xf]
    %v4308 = vrot.slane %v4271, 1
    %v4309 = vrot.slane %v4272, 1
    %v4344 = vunpack.c.l.b16 %v4274
    %v4345 = vunpack.c.l.b16 %v4275
    %v4346 = vunpack.c.l.b16 %v4276
    %v4347 = vunpack.c.l.b16 %v4277
    %v4348 = vunpack.c.l.b16 %v4278
    %v4349 = vunpack.c.l.b16 %v4279
    %v4350 = vunpack.c.l.b16 %v4280
    %v4351 = vunpack.c.l.b16 %v4281
    %v4352 = vunpack.c.l.b16 %v4282
    %v4353 = vunpack.c.l.b16 %v4283
    %v4354 = vunpack.c.l.b16 %v4284
    %v4355 = vunpack.c.l.b16 %v4285
    %v4356 = vunpack.c.l.b16 %v4286
    %v4357 = vunpack.c.l.b16 %v4287
    %v4358 = vunpack.c.l.b16 %v4288
    %v4359 = vunpack.c.l.b16 %v4289
    %v4360 = vunpack.c.l.b16 %v4290
    %v4361 = vunpack.c.l.b16 %v4291
    %v4362 = vunpack.c.l.b16 %v4292
    %v4363 = vunpack.c.l.b16 %v4293
    %v4364 = vunpack.c.l.b16 %v4294
    %v4365 = vunpack.c.l.b16 %v4295
    %v4366 = vunpack.c.l.b16 %v4296
    %v4367 = vunpack.c.l.b16 %v4297
    %v4368 = vunpack.c.l.b16 %v4298
    %v4369 = vunpack.c.l.b16 %v4299
    %v4370 = vunpack.c.l.b16 %v4300
    %v4371 = vunpack.c.l.b16 %v4301
    %v4372 = vunpack.c.l.b16 %v4302
    %v4373 = vunpack.c.l.b16 %v4303
    %v4374 = vunpack.c.l.b16 %v4304
    %v4375 = vunpack.c.l.b16 %v4305
    %v4376 = vpack.c.b16 %v4345, %v4344
    %v4377 = vpack.c.b16 %v4347, %v4346
    %v4378 = vpack.c.b16 %v4349, %v4348
    %v4379 = vpack.c.b16 %v4351, %v4350
    %v4380 = vpack.c.b16 %v4353, %v4352
    %v4381 = vpack.c.b16 %v4355, %v4354
    %v4382 = vpack.c.b16 %v4357, %v4356
    %v4383 = vpack.c.b16 %v4359, %v4358
    %v4384 = vpack.c.b16 %v4361, %v4360
    %v4385 = vpack.c.b16 %v4363, %v4362
    %v4386 = vpack.c.b16 %v4365, %v4364
    %v4387 = vpack.c.b16 %v4367, %v4366
    %v4388 = vpack.c.b16 %v4369, %v4368
    %v4389 = vpack.c.b16 %v4371, %v4370
    %v4390 = vpack.c.b16 %v4373, %v4372
    %v4391 = vpack.c.b16 %v4375, %v4374
    %4408 = vmatprep.subr.bf16.mxu0 0
    %4409 = vmatpush1.bf16.msra.mxu0 %v4383
    %4410 = vmatprep.subr.bf16.mxu0 0
    %4411 = vmatpush1.bf16.msra.mxu0 %v4382
    %4412 = vmatprep.subr.bf16.mxu0 0
    %4413 = vmatpush1.bf16.msra.mxu0 %v4381
    %4414 = vmatprep.subr.bf16.mxu0 0
    %4415 = vmatpush1.bf16.msra.mxu0 %v4380
    %4416 = vmatprep.subr.bf16.mxu0 0
    %4417 = vmatpush1.bf16.msra.mxu0 %v4379
    %4418 = vmatprep.subr.bf16.mxu0 0
    %4419 = vmatpush1.bf16.msra.mxu0 %v4378
    %4420 = vmatprep.subr.bf16.mxu0 0
    %4421 = vmatpush1.bf16.msra.mxu0 %v4377
    %4422 = vmatprep.subr.bf16.mxu0 0
    %4423 = vmatpush1.bf16.msra.mxu0 %v4376
    %4424 = vmatprep.subr.bf16.mxu0 0
    %4425 = vmatpush2.bf16.msra.mxu0 %v4391
    %4426 = vmatprep.subr.bf16.mxu0 0
    %4427 = vmatpush2.bf16.msra.mxu0 %v4390
    %4428 = vmatprep.subr.bf16.mxu0 0
    %4429 = vmatpush2.bf16.msra.mxu0 %v4389
    %4430 = vmatprep.subr.bf16.mxu0 0
    %4431 = vmatpush2.bf16.msra.mxu0 %v4388
    %4432 = vmatprep.subr.bf16.mxu0 0
    %4433 = vmatpush2.bf16.msra.mxu0 %v4387
    %4434 = vmatprep.subr.bf16.mxu0 0
    %4435 = vmatpush2.bf16.msra.mxu0 %v4386
    %4436 = vmatprep.subr.bf16.mxu0 0
    %4437 = vmatpush2.bf16.msra.mxu0 %v4385
    %4438 = vmatprep.subr.bf16.mxu0 0
    %4439 = vmatpush2.bf16.msra.mxu0 %v4384
    %4440 = vmatprep.mubr.bf16.mxu0 %v4309
    %4441 = vmatmul.mubr.bf16.gmra.mxu0 %v4308
    %v4442 = vpop.f32.mrf.mxu0
    %v4443 = vadd.f32 0.0, %v4442
    %v4444 = vpop.f32.mrf.mxu0
    %v4445 = vpop.f32.mrf.mxu0
    %v4446 = vpop.f32.mrf.mxu0
    %4447 = vdwg.mxu0
    %s4448 = scalar_lea.vmem %s6, 5
    %v4449 = vld [vmem:[%s4448] sm:$0x1]
    %v4451 = vlaneseq
    %v4452 = vshrl.u32 %v4451, 7
    %v4453 = vsub.s32 0, %v4452
    %v4454 = vrot.slane %v4449, %v4453
    %v4456 = vmul.f32 %v4443, %v4454
    %s4457 = scalar_lea.vmem %s7, 5
    %v4458 = vld [vmem:[%s4457] sm:$0x1]
    %v4460 = vlaneseq
    %v4461 = vshrl.u32 %v4460, 7
    %v4462 = vsub.s32 0, %v4461
    %v4463 = vrot.slane %v4458, %v4462
    %v4465 = vadd.f32 %v4456, %v4463
    %vm4466 = vcmp.ge.f32.partialorder %v4465, 0.0
    %s4467 = scalar_lea.vmem %s8, 5
    %v4468 = vld [vmem:[%s4467] sm:$0x1]
    %v4470 = vlaneseq
    %v4471 = vshrl.u32 %v4470, 7
    %v4472 = vsub.s32 0, %v4471
    %v4473 = vrot.slane %v4468, %v4472
    %v4475 = vmul.f32 %v4473, %v4465
    %v4476 = vsel %vm4466, %v4465, %v4475
    %v4477 = vld [vmem:[#allocation2 + $0x10] sm:$0x30]
    %v4478 = vld [vmem:[#allocation2 + $0x18] sm:$0x30]
    %v4479 = vpack.c.bf16 %v4477, %v4477
    %v4480 = vpack.c.bf16 %v4478, %v4478
    %s4481 = scalar_lea.vmem [#allocation6], 768
    %v4482 = vld [vmem:[%s4481] sm:$0xf]
    %v4483 = vld [vmem:[%s4481 + $0x4] sm:$0xf]
    %v4484 = vld [vmem:[%s4481 + $0x8] sm:$0xf]
    %v4485 = vld [vmem:[%s4481 + $0xc] sm:$0xf]
    %v4486 = vld [vmem:[%s4481 + $0x10] sm:$0xf]
    %v4487 = vld [vmem:[%s4481 + $0x14] sm:$0xf]
    %v4488 = vld [vmem:[%s4481 + $0x18] sm:$0xf]
    %v4489 = vld [vmem:[%s4481 + $0x1c] sm:$0xf]
    %v4490 = vld [vmem:[%s4481 + $0x20] sm:$0xf]
    %v4491 = vld [vmem:[%s4481 + $0x24] sm:$0xf]
    %v4492 = vld [vmem:[%s4481 + $0x28] sm:$0xf]
    %v4493 = vld [vmem:[%s4481 + $0x2c] sm:$0xf]
    %v4494 = vld [vmem:[%s4481 + $0x30] sm:$0xf]
    %v4495 = vld [vmem:[%s4481 + $0x34] sm:$0xf]
    %v4496 = vld [vmem:[%s4481 + $0x38] sm:$0xf]
    %v4497 = vld [vmem:[%s4481 + $0x3c] sm:$0xf]
    %v4498 = vld [vmem:[%s4481 + $0x40] sm:$0xf]
    %v4499 = vld [vmem:[%s4481 + $0x44] sm:$0xf]
    %v4500 = vld [vmem:[%s4481 + $0x48] sm:$0xf]
    %v4501 = vld [vmem:[%s4481 + $0x4c] sm:$0xf]
    %v4502 = vld [vmem:[%s4481 + $0x50] sm:$0xf]
    %v4503 = vld [vmem:[%s4481 + $0x54] sm:$0xf]
    %v4504 = vld [vmem:[%s4481 + $0x58] sm:$0xf]
    %v4505 = vld [vmem:[%s4481 + $0x5c] sm:$0xf]
    %v4506 = vld [vmem:[%s4481 + $0x60] sm:$0xf]
    %v4507 = vld [vmem:[%s4481 + $0x64] sm:$0xf]
    %v4508 = vld [vmem:[%s4481 + $0x68] sm:$0xf]
    %v4509 = vld [vmem:[%s4481 + $0x6c] sm:$0xf]
    %v4510 = vld [vmem:[%s4481 + $0x70] sm:$0xf]
    %v4511 = vld [vmem:[%s4481 + $0x74] sm:$0xf]
    %v4512 = vld [vmem:[%s4481 + $0x78] sm:$0xf]
    %v4513 = vld [vmem:[%s4481 + $0x7c] sm:$0xf]
    %v4516 = vrot.slane %v4479, 2
    %v4517 = vrot.slane %v4480, 2
    %v4552 = vunpack.c.l.b16 %v4482
    %v4553 = vunpack.c.l.b16 %v4483
    %v4554 = vunpack.c.l.b16 %v4484
    %v4555 = vunpack.c.l.b16 %v4485
    %v4556 = vunpack.c.l.b16 %v4486
    %v4557 = vunpack.c.l.b16 %v4487
    %v4558 = vunpack.c.l.b16 %v4488
    %v4559 = vunpack.c.l.b16 %v4489
    %v4560 = vunpack.c.l.b16 %v4490
    %v4561 = vunpack.c.l.b16 %v4491
    %v4562 = vunpack.c.l.b16 %v4492
    %v4563 = vunpack.c.l.b16 %v4493
    %v4564 = vunpack.c.l.b16 %v4494
    %v4565 = vunpack.c.l.b16 %v4495
    %v4566 = vunpack.c.l.b16 %v4496
    %v4567 = vunpack.c.l.b16 %v4497
    %v4568 = vunpack.c.l.b16 %v4498
    %v4569 = vunpack.c.l.b16 %v4499
    %v4570 = vunpack.c.l.b16 %v4500
    %v4571 = vunpack.c.l.b16 %v4501
    %v4572 = vunpack.c.l.b16 %v4502
    %v4573 = vunpack.c.l.b16 %v4503
    %v4574 = vunpack.c.l.b16 %v4504
    %v4575 = vunpack.c.l.b16 %v4505
    %v4576 = vunpack.c.l.b16 %v4506
    %v4577 = vunpack.c.l.b16 %v4507
    %v4578 = vunpack.c.l.b16 %v4508
    %v4579 = vunpack.c.l.b16 %v4509
    %v4580 = vunpack.c.l.b16 %v4510
    %v4581 = vunpack.c.l.b16 %v4511
    %v4582 = vunpack.c.l.b16 %v4512
    %v4583 = vunpack.c.l.b16 %v4513
    %v4584 = vpack.c.b16 %v4553, %v4552
    %v4585 = vpack.c.b16 %v4555, %v4554
    %v4586 = vpack.c.b16 %v4557, %v4556
    %v4587 = vpack.c.b16 %v4559, %v4558
    %v4588 = vpack.c.b16 %v4561, %v4560
    %v4589 = vpack.c.b16 %v4563, %v4562
    %v4590 = vpack.c.b16 %v4565, %v4564
    %v4591 = vpack.c.b16 %v4567, %v4566
    %v4592 = vpack.c.b16 %v4569, %v4568
    %v4593 = vpack.c.b16 %v4571, %v4570
    %v4594 = vpack.c.b16 %v4573, %v4572
    %v4595 = vpack.c.b16 %v4575, %v4574
    %v4596 = vpack.c.b16 %v4577, %v4576
    %v4597 = vpack.c.b16 %v4579, %v4578
    %v4598 = vpack.c.b16 %v4581, %v4580
    %v4599 = vpack.c.b16 %v4583, %v4582
    %4616 = vmatprep.subr.bf16.mxu0 0
    %4617 = vmatpush1.bf16.msra.mxu0 %v4591
    %4618 = vmatprep.subr.bf16.mxu0 0
    %4619 = vmatpush1.bf16.msra.mxu0 %v4590
    %4620 = vmatprep.subr.bf16.mxu0 0
    %4621 = vmatpush1.bf16.msra.mxu0 %v4589
    %4622 = vmatprep.subr.bf16.mxu0 0
    %4623 = vmatpush1.bf16.msra.mxu0 %v4588
    %4624 = vmatprep.subr.bf16.mxu0 0
    %4625 = vmatpush1.bf16.msra.mxu0 %v4587
    %4626 = vmatprep.subr.bf16.mxu0 0
    %4627 = vmatpush1.bf16.msra.mxu0 %v4586
    %4628 = vmatprep.subr.bf16.mxu0 0
    %4629 = vmatpush1.bf16.msra.mxu0 %v4585
    %4630 = vmatprep.subr.bf16.mxu0 0
    %4631 = vmatpush1.bf16.msra.mxu0 %v4584
    %4632 = vmatprep.subr.bf16.mxu0 0
    %4633 = vmatpush2.bf16.msra.mxu0 %v4599
    %4634 = vmatprep.subr.bf16.mxu0 0
    %4635 = vmatpush2.bf16.msra.mxu0 %v4598
    %4636 = vmatprep.subr.bf16.mxu0 0
    %4637 = vmatpush2.bf16.msra.mxu0 %v4597
    %4638 = vmatprep.subr.bf16.mxu0 0
    %4639 = vmatpush2.bf16.msra.mxu0 %v4596
    %4640 = vmatprep.subr.bf16.mxu0 0
    %4641 = vmatpush2.bf16.msra.mxu0 %v4595
    %4642 = vmatprep.subr.bf16.mxu0 0
    %4643 = vmatpush2.bf16.msra.mxu0 %v4594
    %4644 = vmatprep.subr.bf16.mxu0 0
    %4645 = vmatpush2.bf16.msra.mxu0 %v4593
    %4646 = vmatprep.subr.bf16.mxu0 0
    %4647 = vmatpush2.bf16.msra.mxu0 %v4592
    %4648 = vmatprep.mubr.bf16.mxu0 %v4517
    %4649 = vmatmul.mubr.bf16.gmra.mxu0 %v4516
    %v4650 = vpop.f32.mrf.mxu0
    %v4651 = vadd.f32 0.0, %v4650
    %v4652 = vpop.f32.mrf.mxu0
    %v4653 = vpop.f32.mrf.mxu0
    %v4654 = vpop.f32.mrf.mxu0
    %4655 = vdwg.mxu0
    %s4656 = scalar_lea.vmem %s6, 6
    %v4657 = vld [vmem:[%s4656] sm:$0x1]
    %v4659 = vlaneseq
    %v4660 = vshrl.u32 %v4659, 7
    %v4661 = vsub.s32 0, %v4660
    %v4662 = vrot.slane %v4657, %v4661
    %v4664 = vmul.f32 %v4651, %v4662
    %s4665 = scalar_lea.vmem %s7, 6
    %v4666 = vld [vmem:[%s4665] sm:$0x1]
    %v4668 = vlaneseq
    %v4669 = vshrl.u32 %v4668, 7
    %v4670 = vsub.s32 0, %v4669
    %v4671 = vrot.slane %v4666, %v4670
    %v4673 = vadd.f32 %v4664, %v4671
    %vm4674 = vcmp.ge.f32.partialorder %v4673, 0.0
    %s4675 = scalar_lea.vmem %s8, 6
    %v4676 = vld [vmem:[%s4675] sm:$0x1]
    %v4678 = vlaneseq
    %v4679 = vshrl.u32 %v4678, 7
    %v4680 = vsub.s32 0, %v4679
    %v4681 = vrot.slane %v4676, %v4680
    %v4683 = vmul.f32 %v4681, %v4673
    %v4684 = vsel %vm4674, %v4673, %v4683
    %v4685 = vld [vmem:[#allocation2 + $0x10] sm:$0xc0]
    %v4686 = vld [vmem:[#allocation2 + $0x18] sm:$0xc0]
    %v4687 = vpack.c.bf16 %v4685, %v4685
    %v4688 = vpack.c.bf16 %v4686, %v4686
    %s4689 = scalar_lea.vmem [#allocation6], 896
    %v4690 = vld [vmem:[%s4689] sm:$0xf]
    %v4691 = vld [vmem:[%s4689 + $0x4] sm:$0xf]
    %v4692 = vld [vmem:[%s4689 + $0x8] sm:$0xf]
    %v4693 = vld [vmem:[%s4689 + $0xc] sm:$0xf]
    %v4694 = vld [vmem:[%s4689 + $0x10] sm:$0xf]
    %v4695 = vld [vmem:[%s4689 + $0x14] sm:$0xf]
    %v4696 = vld [vmem:[%s4689 + $0x18] sm:$0xf]
    %v4697 = vld [vmem:[%s4689 + $0x1c] sm:$0xf]
    %v4698 = vld [vmem:[%s4689 + $0x20] sm:$0xf]
    %v4699 = vld [vmem:[%s4689 + $0x24] sm:$0xf]
    %v4700 = vld [vmem:[%s4689 + $0x28] sm:$0xf]
    %v4701 = vld [vmem:[%s4689 + $0x2c] sm:$0xf]
    %v4702 = vld [vmem:[%s4689 + $0x30] sm:$0xf]
    %v4703 = vld [vmem:[%s4689 + $0x34] sm:$0xf]
    %v4704 = vld [vmem:[%s4689 + $0x38] sm:$0xf]
    %v4705 = vld [vmem:[%s4689 + $0x3c] sm:$0xf]
    %v4706 = vld [vmem:[%s4689 + $0x40] sm:$0xf]
    %v4707 = vld [vmem:[%s4689 + $0x44] sm:$0xf]
    %v4708 = vld [vmem:[%s4689 + $0x48] sm:$0xf]
    %v4709 = vld [vmem:[%s4689 + $0x4c] sm:$0xf]
    %v4710 = vld [vmem:[%s4689 + $0x50] sm:$0xf]
    %v4711 = vld [vmem:[%s4689 + $0x54] sm:$0xf]
    %v4712 = vld [vmem:[%s4689 + $0x58] sm:$0xf]
    %v4713 = vld [vmem:[%s4689 + $0x5c] sm:$0xf]
    %v4714 = vld [vmem:[%s4689 + $0x60] sm:$0xf]
    %v4715 = vld [vmem:[%s4689 + $0x64] sm:$0xf]
    %v4716 = vld [vmem:[%s4689 + $0x68] sm:$0xf]
    %v4717 = vld [vmem:[%s4689 + $0x6c] sm:$0xf]
    %v4718 = vld [vmem:[%s4689 + $0x70] sm:$0xf]
    %v4719 = vld [vmem:[%s4689 + $0x74] sm:$0xf]
    %v4720 = vld [vmem:[%s4689 + $0x78] sm:$0xf]
    %v4721 = vld [vmem:[%s4689 + $0x7c] sm:$0xf]
    %v4724 = vrot.slane %v4687, 3
    %v4725 = vrot.slane %v4688, 3
    %v4760 = vunpack.c.l.b16 %v4690
    %v4761 = vunpack.c.l.b16 %v4691
    %v4762 = vunpack.c.l.b16 %v4692
    %v4763 = vunpack.c.l.b16 %v4693
    %v4764 = vunpack.c.l.b16 %v4694
    %v4765 = vunpack.c.l.b16 %v4695
    %v4766 = vunpack.c.l.b16 %v4696
    %v4767 = vunpack.c.l.b16 %v4697
    %v4768 = vunpack.c.l.b16 %v4698
    %v4769 = vunpack.c.l.b16 %v4699
    %v4770 = vunpack.c.l.b16 %v4700
    %v4771 = vunpack.c.l.b16 %v4701
    %v4772 = vunpack.c.l.b16 %v4702
    %v4773 = vunpack.c.l.b16 %v4703
    %v4774 = vunpack.c.l.b16 %v4704
    %v4775 = vunpack.c.l.b16 %v4705
    %v4776 = vunpack.c.l.b16 %v4706
    %v4777 = vunpack.c.l.b16 %v4707
    %v4778 = vunpack.c.l.b16 %v4708
    %v4779 = vunpack.c.l.b16 %v4709
    %v4780 = vunpack.c.l.b16 %v4710
    %v4781 = vunpack.c.l.b16 %v4711
    %v4782 = vunpack.c.l.b16 %v4712
    %v4783 = vunpack.c.l.b16 %v4713
    %v4784 = vunpack.c.l.b16 %v4714
    %v4785 = vunpack.c.l.b16 %v4715
    %v4786 = vunpack.c.l.b16 %v4716
    %v4787 = vunpack.c.l.b16 %v4717
    %v4788 = vunpack.c.l.b16 %v4718
    %v4789 = vunpack.c.l.b16 %v4719
    %v4790 = vunpack.c.l.b16 %v4720
    %v4791 = vunpack.c.l.b16 %v4721
    %v4792 = vpack.c.b16 %v4761, %v4760
    %v4793 = vpack.c.b16 %v4763, %v4762
    %v4794 = vpack.c.b16 %v4765, %v4764
    %v4795 = vpack.c.b16 %v4767, %v4766
    %v4796 = vpack.c.b16 %v4769, %v4768
    %v4797 = vpack.c.b16 %v4771, %v4770
    %v4798 = vpack.c.b16 %v4773, %v4772
    %v4799 = vpack.c.b16 %v4775, %v4774
    %v4800 = vpack.c.b16 %v4777, %v4776
    %v4801 = vpack.c.b16 %v4779, %v4778
    %v4802 = vpack.c.b16 %v4781, %v4780
    %v4803 = vpack.c.b16 %v4783, %v4782
    %v4804 = vpack.c.b16 %v4785, %v4784
    %v4805 = vpack.c.b16 %v4787, %v4786
    %v4806 = vpack.c.b16 %v4789, %v4788
    %v4807 = vpack.c.b16 %v4791, %v4790
    %4824 = vmatprep.subr.bf16.mxu0 0
    %4825 = vmatpush1.bf16.msra.mxu0 %v4799
    %4826 = vmatprep.subr.bf16.mxu0 0
    %4827 = vmatpush1.bf16.msra.mxu0 %v4798
    %4828 = vmatprep.subr.bf16.mxu0 0
    %4829 = vmatpush1.bf16.msra.mxu0 %v4797
    %4830 = vmatprep.subr.bf16.mxu0 0
    %4831 = vmatpush1.bf16.msra.mxu0 %v4796
    %4832 = vmatprep.subr.bf16.mxu0 0
    %4833 = vmatpush1.bf16.msra.mxu0 %v4795
    %4834 = vmatprep.subr.bf16.mxu0 0
    %4835 = vmatpush1.bf16.msra.mxu0 %v4794
    %4836 = vmatprep.subr.bf16.mxu0 0
    %4837 = vmatpush1.bf16.msra.mxu0 %v4793
    %4838 = vmatprep.subr.bf16.mxu0 0
    %4839 = vmatpush1.bf16.msra.mxu0 %v4792
    %4840 = vmatprep.subr.bf16.mxu0 0
    %4841 = vmatpush2.bf16.msra.mxu0 %v4807
    %4842 = vmatprep.subr.bf16.mxu0 0
    %4843 = vmatpush2.bf16.msra.mxu0 %v4806
    %4844 = vmatprep.subr.bf16.mxu0 0
    %4845 = vmatpush2.bf16.msra.mxu0 %v4805
    %4846 = vmatprep.subr.bf16.mxu0 0
    %4847 = vmatpush2.bf16.msra.mxu0 %v4804
    %4848 = vmatprep.subr.bf16.mxu0 0
    %4849 = vmatpush2.bf16.msra.mxu0 %v4803
    %4850 = vmatprep.subr.bf16.mxu0 0
    %4851 = vmatpush2.bf16.msra.mxu0 %v4802
    %4852 = vmatprep.subr.bf16.mxu0 0
    %4853 = vmatpush2.bf16.msra.mxu0 %v4801
    %4854 = vmatprep.subr.bf16.mxu0 0
    %4855 = vmatpush2.bf16.msra.mxu0 %v4800
    %4856 = vmatprep.mubr.bf16.mxu0 %v4725
    %4857 = vmatmul.mubr.bf16.gmra.mxu0 %v4724
    %v4858 = vpop.f32.mrf.mxu0
    %v4859 = vadd.f32 0.0, %v4858
    %v4860 = vpop.f32.mrf.mxu0
    %v4861 = vpop.f32.mrf.mxu0
    %v4862 = vpop.f32.mrf.mxu0
    %4863 = vdwg.mxu0
    %s4864 = scalar_lea.vmem %s6, 7
    %v4865 = vld [vmem:[%s4864] sm:$0x1]
    %v4867 = vlaneseq
    %v4868 = vshrl.u32 %v4867, 7
    %v4869 = vsub.s32 0, %v4868
    %v4870 = vrot.slane %v4865, %v4869
    %v4872 = vmul.f32 %v4859, %v4870
    %s4873 = scalar_lea.vmem %s7, 7
    %v4874 = vld [vmem:[%s4873] sm:$0x1]
    %v4876 = vlaneseq
    %v4877 = vshrl.u32 %v4876, 7
    %v4878 = vsub.s32 0, %v4877
    %v4879 = vrot.slane %v4874, %v4878
    %v4881 = vadd.f32 %v4872, %v4879
    %vm4882 = vcmp.ge.f32.partialorder %v4881, 0.0
    %s4883 = scalar_lea.vmem %s8, 7
    %v4884 = vld [vmem:[%s4883] sm:$0x1]
    %v4886 = vlaneseq
    %v4887 = vshrl.u32 %v4886, 7
    %v4888 = vsub.s32 0, %v4887
    %v4889 = vrot.slane %v4884, %v4888
    %v4891 = vmul.f32 %v4889, %v4881
    %v4892 = vsel %vm4882, %v4881, %v4891
    %v4901 = vcombine.low %v3442, %v3650
    %v4902 = vcombine.low %v3858, %v4066
    %v4904 = vunpack.c.l.s4 1983009808
    %v4905 = vunpack.c.0.s8 %v4904
    %v4906 = vlaneseq
    %v4907 = vshrl.u32 %v4906, 7
    %v4908 = vsub.s32 %v4905, %v4907
    %v4909 = vrot.slane %v4901, %v4908
    %v4911 = vunpack.c.l.s4 1983009808
    %v4912 = vunpack.c.0.s8 %v4911
    %v4913 = vlaneseq
    %v4914 = vshrl.u32 %v4913, 7
    %v4915 = vsub.s32 %v4912, %v4914
    %v4916 = vrot.slane %v4902, %v4915
    %v4917 = vcombine.low %v4909, %v4916
    %v4918 = vcombine.low %v4268, %v4476
    %v4919 = vcombine.low %v4684, %v4892
    %v4921 = vunpack.c.l.s4 1983009808
    %v4922 = vunpack.c.0.s8 %v4921
    %v4923 = vlaneseq
    %v4924 = vshrl.u32 %v4923, 7
    %v4925 = vsub.s32 %v4922, %v4924
    %v4926 = vrot.slane %v4918, %v4925
    %v4928 = vunpack.c.l.s4 1983009808
    %v4929 = vunpack.c.0.s8 %v4928
    %v4930 = vlaneseq
    %v4931 = vshrl.u32 %v4930, 7
    %v4932 = vsub.s32 %v4929, %v4931
    %v4933 = vrot.slane %v4919, %v4932
    %v4934 = vcombine.low %v4926, %v4933
    %4937 = vst [vmem:[#allocation9] sm:$0xff] %v4917
    %4938 = vst [vmem:[#allocation9 + $0x8] sm:$0xff] %v4934
    %v4939 = vpack.c.bf16 %v3442, %v3442
    %v4940 = vpack.c.bf16 %v3650, %v3650
    %v4941 = vpack.c.bf16 %v3858, %v3858
    %v4942 = vpack.c.bf16 %v4066, %v4066
    %v4943 = vpack.c.bf16 %v4268, %v4268
    %v4944 = vpack.c.bf16 %v4476, %v4476
    %v4945 = vpack.c.bf16 %v4684, %v4684
    %v4946 = vpack.c.bf16 %v4892, %v4892
    %v4947 = vld [vmem:[#allocation8] sm:$0xf]
    %v4948 = vld [vmem:[#allocation8 + $0x4] sm:$0xf]
    %v4949 = vld [vmem:[#allocation8 + $0x8] sm:$0xf]
    %v4950 = vld [vmem:[#allocation8 + $0xc] sm:$0xf]
    %v4951 = vld [vmem:[#allocation8 + $0x10] sm:$0xf]
    %v4952 = vld [vmem:[#allocation8 + $0x14] sm:$0xf]
    %v4953 = vld [vmem:[#allocation8 + $0x18] sm:$0xf]
    %v4954 = vld [vmem:[#allocation8 + $0x1c] sm:$0xf]
    %v4955 = vld [vmem:[#allocation8 + $0x20] sm:$0xf]
    %v4956 = vld [vmem:[#allocation8 + $0x24] sm:$0xf]
    %v4957 = vld [vmem:[#allocation8 + $0x28] sm:$0xf]
    %v4958 = vld [vmem:[#allocation8 + $0x2c] sm:$0xf]
    %v4959 = vld [vmem:[#allocation8 + $0x30] sm:$0xf]
    %v4960 = vld [vmem:[#allocation8 + $0x34] sm:$0xf]
    %v4961 = vld [vmem:[#allocation8 + $0x38] sm:$0xf]
    %v4962 = vld [vmem:[#allocation8 + $0x3c] sm:$0xf]
    %v4963 = vld [vmem:[#allocation8 + $0x40] sm:$0xf]
    %v4964 = vld [vmem:[#allocation8 + $0x44] sm:$0xf]
    %v4965 = vld [vmem:[#allocation8 + $0x48] sm:$0xf]
    %v4966 = vld [vmem:[#allocation8 + $0x4c] sm:$0xf]
    %v4967 = vld [vmem:[#allocation8 + $0x50] sm:$0xf]
    %v4968 = vld [vmem:[#allocation8 + $0x54] sm:$0xf]
    %v4969 = vld [vmem:[#allocation8 + $0x58] sm:$0xf]
    %v4970 = vld [vmem:[#allocation8 + $0x5c] sm:$0xf]
    %v4971 = vld [vmem:[#allocation8 + $0x60] sm:$0xf]
    %v4972 = vld [vmem:[#allocation8 + $0x64] sm:$0xf]
    %v4973 = vld [vmem:[#allocation8 + $0x68] sm:$0xf]
    %v4974 = vld [vmem:[#allocation8 + $0x6c] sm:$0xf]
    %v4975 = vld [vmem:[#allocation8 + $0x70] sm:$0xf]
    %v4976 = vld [vmem:[#allocation8 + $0x74] sm:$0xf]
    %v4977 = vld [vmem:[#allocation8 + $0x78] sm:$0xf]
    %v4978 = vld [vmem:[#allocation8 + $0x7c] sm:$0xf]
    %v4979 = vld [vmem:[#allocation8 + $0x80] sm:$0xf]
    %v4980 = vld [vmem:[#allocation8 + $0x84] sm:$0xf]
    %v4981 = vld [vmem:[#allocation8 + $0x88] sm:$0xf]
    %v4982 = vld [vmem:[#allocation8 + $0x8c] sm:$0xf]
    %v4983 = vld [vmem:[#allocation8 + $0x90] sm:$0xf]
    %v4984 = vld [vmem:[#allocation8 + $0x94] sm:$0xf]
    %v4985 = vld [vmem:[#allocation8 + $0x98] sm:$0xf]
    %v4986 = vld [vmem:[#allocation8 + $0x9c] sm:$0xf]
    %v4987 = vld [vmem:[#allocation8 + $0xa0] sm:$0xf]
    %v4988 = vld [vmem:[#allocation8 + $0xa4] sm:$0xf]
    %v4989 = vld [vmem:[#allocation8 + $0xa8] sm:$0xf]
    %v4990 = vld [vmem:[#allocation8 + $0xac] sm:$0xf]
    %v4991 = vld [vmem:[#allocation8 + $0xb0] sm:$0xf]
    %v4992 = vld [vmem:[#allocation8 + $0xb4] sm:$0xf]
    %v4993 = vld [vmem:[#allocation8 + $0xb8] sm:$0xf]
    %v4994 = vld [vmem:[#allocation8 + $0xbc] sm:$0xf]
    %v4995 = vld [vmem:[#allocation8 + $0xc0] sm:$0xf]
    %v4996 = vld [vmem:[#allocation8 + $0xc4] sm:$0xf]
    %v4997 = vld [vmem:[#allocation8 + $0xc8] sm:$0xf]
    %v4998 = vld [vmem:[#allocation8 + $0xcc] sm:$0xf]
    %v4999 = vld [vmem:[#allocation8 + $0xd0] sm:$0xf]
    %v5000 = vld [vmem:[#allocation8 + $0xd4] sm:$0xf]
    %v5001 = vld [vmem:[#allocation8 + $0xd8] sm:$0xf]
    %v5002 = vld [vmem:[#allocation8 + $0xdc] sm:$0xf]
    %v5003 = vld [vmem:[#allocation8 + $0xe0] sm:$0xf]
    %v5004 = vld [vmem:[#allocation8 + $0xe4] sm:$0xf]
    %v5005 = vld [vmem:[#allocation8 + $0xe8] sm:$0xf]
    %v5006 = vld [vmem:[#allocation8 + $0xec] sm:$0xf]
    %v5007 = vld [vmem:[#allocation8 + $0xf0] sm:$0xf]
    %v5008 = vld [vmem:[#allocation8 + $0xf4] sm:$0xf]
    %v5009 = vld [vmem:[#allocation8 + $0xf8] sm:$0xf]
    %v5010 = vld [vmem:[#allocation8 + $0xfc] sm:$0xf]
    %v5011 = vld [vmem:[#allocation8 + $0x100] sm:$0xf]
    %v5012 = vld [vmem:[#allocation8 + $0x104] sm:$0xf]
    %v5013 = vld [vmem:[#allocation8 + $0x108] sm:$0xf]
    %v5014 = vld [vmem:[#allocation8 + $0x10c] sm:$0xf]
    %v5015 = vld [vmem:[#allocation8 + $0x110] sm:$0xf]
    %v5016 = vld [vmem:[#allocation8 + $0x114] sm:$0xf]
    %v5017 = vld [vmem:[#allocation8 + $0x118] sm:$0xf]
    %v5018 = vld [vmem:[#allocation8 + $0x11c] sm:$0xf]
    %v5019 = vld [vmem:[#allocation8 + $0x120] sm:$0xf]
    %v5020 = vld [vmem:[#allocation8 + $0x124] sm:$0xf]
    %v5021 = vld [vmem:[#allocation8 + $0x128] sm:$0xf]
    %v5022 = vld [vmem:[#allocation8 + $0x12c] sm:$0xf]
    %v5023 = vld [vmem:[#allocation8 + $0x130] sm:$0xf]
    %v5024 = vld [vmem:[#allocation8 + $0x134] sm:$0xf]
    %v5025 = vld [vmem:[#allocation8 + $0x138] sm:$0xf]
    %v5026 = vld [vmem:[#allocation8 + $0x13c] sm:$0xf]
    %v5027 = vld [vmem:[#allocation8 + $0x140] sm:$0xf]
    %v5028 = vld [vmem:[#allocation8 + $0x144] sm:$0xf]
    %v5029 = vld [vmem:[#allocation8 + $0x148] sm:$0xf]
    %v5030 = vld [vmem:[#allocation8 + $0x14c] sm:$0xf]
    %v5031 = vld [vmem:[#allocation8 + $0x150] sm:$0xf]
    %v5032 = vld [vmem:[#allocation8 + $0x154] sm:$0xf]
    %v5033 = vld [vmem:[#allocation8 + $0x158] sm:$0xf]
    %v5034 = vld [vmem:[#allocation8 + $0x15c] sm:$0xf]
    %v5035 = vld [vmem:[#allocation8 + $0x160] sm:$0xf]
    %v5036 = vld [vmem:[#allocation8 + $0x164] sm:$0xf]
    %v5037 = vld [vmem:[#allocation8 + $0x168] sm:$0xf]
    %v5038 = vld [vmem:[#allocation8 + $0x16c] sm:$0xf]
    %v5039 = vld [vmem:[#allocation8 + $0x170] sm:$0xf]
    %v5040 = vld [vmem:[#allocation8 + $0x174] sm:$0xf]
    %v5041 = vld [vmem:[#allocation8 + $0x178] sm:$0xf]
    %v5042 = vld [vmem:[#allocation8 + $0x17c] sm:$0xf]
    %v5043 = vld [vmem:[#allocation8 + $0x180] sm:$0xf]
    %v5044 = vld [vmem:[#allocation8 + $0x184] sm:$0xf]
    %v5045 = vld [vmem:[#allocation8 + $0x188] sm:$0xf]
    %v5046 = vld [vmem:[#allocation8 + $0x18c] sm:$0xf]
    %v5047 = vld [vmem:[#allocation8 + $0x190] sm:$0xf]
    %v5048 = vld [vmem:[#allocation8 + $0x194] sm:$0xf]
    %v5049 = vld [vmem:[#allocation8 + $0x198] sm:$0xf]
    %v5050 = vld [vmem:[#allocation8 + $0x19c] sm:$0xf]
    %v5051 = vld [vmem:[#allocation8 + $0x1a0] sm:$0xf]
    %v5052 = vld [vmem:[#allocation8 + $0x1a4] sm:$0xf]
    %v5053 = vld [vmem:[#allocation8 + $0x1a8] sm:$0xf]
    %v5054 = vld [vmem:[#allocation8 + $0x1ac] sm:$0xf]
    %v5055 = vld [vmem:[#allocation8 + $0x1b0] sm:$0xf]
    %v5056 = vld [vmem:[#allocation8 + $0x1b4] sm:$0xf]
    %v5057 = vld [vmem:[#allocation8 + $0x1b8] sm:$0xf]
    %v5058 = vld [vmem:[#allocation8 + $0x1bc] sm:$0xf]
    %v5059 = vld [vmem:[#allocation8 + $0x1c0] sm:$0xf]
    %v5060 = vld [vmem:[#allocation8 + $0x1c4] sm:$0xf]
    %v5061 = vld [vmem:[#allocation8 + $0x1c8] sm:$0xf]
    %v5062 = vld [vmem:[#allocation8 + $0x1cc] sm:$0xf]
    %v5063 = vld [vmem:[#allocation8 + $0x1d0] sm:$0xf]
    %v5064 = vld [vmem:[#allocation8 + $0x1d4] sm:$0xf]
    %v5065 = vld [vmem:[#allocation8 + $0x1d8] sm:$0xf]
    %v5066 = vld [vmem:[#allocation8 + $0x1dc] sm:$0xf]
    %v5067 = vld [vmem:[#allocation8 + $0x1e0] sm:$0xf]
    %v5068 = vld [vmem:[#allocation8 + $0x1e4] sm:$0xf]
    %v5069 = vld [vmem:[#allocation8 + $0x1e8] sm:$0xf]
    %v5070 = vld [vmem:[#allocation8 + $0x1ec] sm:$0xf]
    %v5071 = vld [vmem:[#allocation8 + $0x1f0] sm:$0xf]
    %v5072 = vld [vmem:[#allocation8 + $0x1f4] sm:$0xf]
    %v5073 = vld [vmem:[#allocation8 + $0x1f8] sm:$0xf]
    %v5074 = vld [vmem:[#allocation8 + $0x1fc] sm:$0xf]
    %v5075 = vld [vmem:[%s10] sm:$0x1]
    %v5077 = vlaneseq
    %v5078 = vshrl.u32 %v5077, 7
    %v5079 = vsub.s32 0, %v5078
    %v5080 = vrot.slane %v5075, %v5079
    %v5210 = vunpack.c.l.b16 %v4947
    %v5211 = vunpack.c.l.b16 %v4948
    %v5212 = vunpack.c.l.b16 %v4949
    %v5213 = vunpack.c.l.b16 %v4950
    %v5214 = vunpack.c.l.b16 %v4951
    %v5215 = vunpack.c.l.b16 %v4952
    %v5216 = vunpack.c.l.b16 %v4953
    %v5217 = vunpack.c.l.b16 %v4954
    %v5218 = vunpack.c.l.b16 %v4955
    %v5219 = vunpack.c.l.b16 %v4956
    %v5220 = vunpack.c.l.b16 %v4957
    %v5221 = vunpack.c.l.b16 %v4958
    %v5222 = vunpack.c.l.b16 %v4959
    %v5223 = vunpack.c.l.b16 %v4960
    %v5224 = vunpack.c.l.b16 %v4961
    %v5225 = vunpack.c.l.b16 %v4962
    %v5226 = vunpack.c.l.b16 %v4963
    %v5227 = vunpack.c.l.b16 %v4964
    %v5228 = vunpack.c.l.b16 %v4965
    %v5229 = vunpack.c.l.b16 %v4966
    %v5230 = vunpack.c.l.b16 %v4967
    %v5231 = vunpack.c.l.b16 %v4968
    %v5232 = vunpack.c.l.b16 %v4969
    %v5233 = vunpack.c.l.b16 %v4970
    %v5234 = vunpack.c.l.b16 %v4971
    %v5235 = vunpack.c.l.b16 %v4972
    %v5236 = vunpack.c.l.b16 %v4973
    %v5237 = vunpack.c.l.b16 %v4974
    %v5238 = vunpack.c.l.b16 %v4975
    %v5239 = vunpack.c.l.b16 %v4976
    %v5240 = vunpack.c.l.b16 %v4977
    %v5241 = vunpack.c.l.b16 %v4978
    %v5242 = vunpack.c.l.b16 %v4979
    %v5243 = vunpack.c.l.b16 %v4980
    %v5244 = vunpack.c.l.b16 %v4981
    %v5245 = vunpack.c.l.b16 %v4982
    %v5246 = vunpack.c.l.b16 %v4983
    %v5247 = vunpack.c.l.b16 %v4984
    %v5248 = vunpack.c.l.b16 %v4985
    %v5249 = vunpack.c.l.b16 %v4986
    %v5250 = vunpack.c.l.b16 %v4987
    %v5251 = vunpack.c.l.b16 %v4988
    %v5252 = vunpack.c.l.b16 %v4989
    %v5253 = vunpack.c.l.b16 %v4990
    %v5254 = vunpack.c.l.b16 %v4991
    %v5255 = vunpack.c.l.b16 %v4992
    %v5256 = vunpack.c.l.b16 %v4993
    %v5257 = vunpack.c.l.b16 %v4994
    %v5258 = vunpack.c.l.b16 %v4995
    %v5259 = vunpack.c.l.b16 %v4996
    %v5260 = vunpack.c.l.b16 %v4997
    %v5261 = vunpack.c.l.b16 %v4998
    %v5262 = vunpack.c.l.b16 %v4999
    %v5263 = vunpack.c.l.b16 %v5000
    %v5264 = vunpack.c.l.b16 %v5001
    %v5265 = vunpack.c.l.b16 %v5002
    %v5266 = vunpack.c.l.b16 %v5003
    %v5267 = vunpack.c.l.b16 %v5004
    %v5268 = vunpack.c.l.b16 %v5005
    %v5269 = vunpack.c.l.b16 %v5006
    %v5270 = vunpack.c.l.b16 %v5007
    %v5271 = vunpack.c.l.b16 %v5008
    %v5272 = vunpack.c.l.b16 %v5009
    %v5273 = vunpack.c.l.b16 %v5010
    %v5274 = vunpack.c.l.b16 %v5011
    %v5275 = vunpack.c.l.b16 %v5012
    %v5276 = vunpack.c.l.b16 %v5013
    %v5277 = vunpack.c.l.b16 %v5014
    %v5278 = vunpack.c.l.b16 %v5015
    %v5279 = vunpack.c.l.b16 %v5016
    %v5280 = vunpack.c.l.b16 %v5017
    %v5281 = vunpack.c.l.b16 %v5018
    %v5282 = vunpack.c.l.b16 %v5019
    %v5283 = vunpack.c.l.b16 %v5020
    %v5284 = vunpack.c.l.b16 %v5021
    %v5285 = vunpack.c.l.b16 %v5022
    %v5286 = vunpack.c.l.b16 %v5023
    %v5287 = vunpack.c.l.b16 %v5024
    %v5288 = vunpack.c.l.b16 %v5025
    %v5289 = vunpack.c.l.b16 %v5026
    %v5290 = vunpack.c.l.b16 %v5027
    %v5291 = vunpack.c.l.b16 %v5028
    %v5292 = vunpack.c.l.b16 %v5029
    %v5293 = vunpack.c.l.b16 %v5030
    %v5294 = vunpack.c.l.b16 %v5031
    %v5295 = vunpack.c.l.b16 %v5032
    %v5296 = vunpack.c.l.b16 %v5033
    %v5297 = vunpack.c.l.b16 %v5034
    %v5298 = vunpack.c.l.b16 %v5035
    %v5299 = vunpack.c.l.b16 %v5036
    %v5300 = vunpack.c.l.b16 %v5037
    %v5301 = vunpack.c.l.b16 %v5038
    %v5302 = vunpack.c.l.b16 %v5039
    %v5303 = vunpack.c.l.b16 %v5040
    %v5304 = vunpack.c.l.b16 %v5041
    %v5305 = vunpack.c.l.b16 %v5042
    %v5306 = vunpack.c.l.b16 %v5043
    %v5307 = vunpack.c.l.b16 %v5044
    %v5308 = vunpack.c.l.b16 %v5045
    %v5309 = vunpack.c.l.b16 %v5046
    %v5310 = vunpack.c.l.b16 %v5047
    %v5311 = vunpack.c.l.b16 %v5048
    %v5312 = vunpack.c.l.b16 %v5049
    %v5313 = vunpack.c.l.b16 %v5050
    %v5314 = vunpack.c.l.b16 %v5051
    %v5315 = vunpack.c.l.b16 %v5052
    %v5316 = vunpack.c.l.b16 %v5053
    %v5317 = vunpack.c.l.b16 %v5054
    %v5318 = vunpack.c.l.b16 %v5055
    %v5319 = vunpack.c.l.b16 %v5056
    %v5320 = vunpack.c.l.b16 %v5057
    %v5321 = vunpack.c.l.b16 %v5058
    %v5322 = vunpack.c.l.b16 %v5059
    %v5323 = vunpack.c.l.b16 %v5060
    %v5324 = vunpack.c.l.b16 %v5061
    %v5325 = vunpack.c.l.b16 %v5062
    %v5326 = vunpack.c.l.b16 %v5063
    %v5327 = vunpack.c.l.b16 %v5064
    %v5328 = vunpack.c.l.b16 %v5065
    %v5329 = vunpack.c.l.b16 %v5066
    %v5330 = vunpack.c.l.b16 %v5067
    %v5331 = vunpack.c.l.b16 %v5068
    %v5332 = vunpack.c.l.b16 %v5069
    %v5333 = vunpack.c.l.b16 %v5070
    %v5334 = vunpack.c.l.b16 %v5071
    %v5335 = vunpack.c.l.b16 %v5072
    %v5336 = vunpack.c.l.b16 %v5073
    %v5337 = vunpack.c.l.b16 %v5074
    %v5338 = vpack.c.b16 %v5211, %v5210
    %v5339 = vpack.c.b16 %v5213, %v5212
    %v5340 = vpack.c.b16 %v5215, %v5214
    %v5341 = vpack.c.b16 %v5217, %v5216
    %v5342 = vpack.c.b16 %v5219, %v5218
    %v5343 = vpack.c.b16 %v5221, %v5220
    %v5344 = vpack.c.b16 %v5223, %v5222
    %v5345 = vpack.c.b16 %v5225, %v5224
    %v5346 = vpack.c.b16 %v5227, %v5226
    %v5347 = vpack.c.b16 %v5229, %v5228
    %v5348 = vpack.c.b16 %v5231, %v5230
    %v5349 = vpack.c.b16 %v5233, %v5232
    %v5350 = vpack.c.b16 %v5235, %v5234
    %v5351 = vpack.c.b16 %v5237, %v5236
    %v5352 = vpack.c.b16 %v5239, %v5238
    %v5353 = vpack.c.b16 %v5241, %v5240
    %v5354 = vpack.c.b16 %v5243, %v5242
    %v5355 = vpack.c.b16 %v5245, %v5244
    %v5356 = vpack.c.b16 %v5247, %v5246
    %v5357 = vpack.c.b16 %v5249, %v5248
    %v5358 = vpack.c.b16 %v5251, %v5250
    %v5359 = vpack.c.b16 %v5253, %v5252
    %v5360 = vpack.c.b16 %v5255, %v5254
    %v5361 = vpack.c.b16 %v5257, %v5256
    %v5362 = vpack.c.b16 %v5259, %v5258
    %v5363 = vpack.c.b16 %v5261, %v5260
    %v5364 = vpack.c.b16 %v5263, %v5262
    %v5365 = vpack.c.b16 %v5265, %v5264
    %v5366 = vpack.c.b16 %v5267, %v5266
    %v5367 = vpack.c.b16 %v5269, %v5268
    %v5368 = vpack.c.b16 %v5271, %v5270
    %v5369 = vpack.c.b16 %v5273, %v5272
    %v5370 = vpack.c.b16 %v5275, %v5274
    %v5371 = vpack.c.b16 %v5277, %v5276
    %v5372 = vpack.c.b16 %v5279, %v5278
    %v5373 = vpack.c.b16 %v5281, %v5280
    %v5374 = vpack.c.b16 %v5283, %v5282
    %v5375 = vpack.c.b16 %v5285, %v5284
    %v5376 = vpack.c.b16 %v5287, %v5286
    %v5377 = vpack.c.b16 %v5289, %v5288
    %v5378 = vpack.c.b16 %v5291, %v5290
    %v5379 = vpack.c.b16 %v5293, %v5292
    %v5380 = vpack.c.b16 %v5295, %v5294
    %v5381 = vpack.c.b16 %v5297, %v5296
    %v5382 = vpack.c.b16 %v5299, %v5298
    %v5383 = vpack.c.b16 %v5301, %v5300
    %v5384 = vpack.c.b16 %v5303, %v5302
    %v5385 = vpack.c.b16 %v5305, %v5304
    %v5386 = vpack.c.b16 %v5307, %v5306
    %v5387 = vpack.c.b16 %v5309, %v5308
    %v5388 = vpack.c.b16 %v5311, %v5310
    %v5389 = vpack.c.b16 %v5313, %v5312
    %v5390 = vpack.c.b16 %v5315, %v5314
    %v5391 = vpack.c.b16 %v5317, %v5316
    %v5392 = vpack.c.b16 %v5319, %v5318
    %v5393 = vpack.c.b16 %v5321, %v5320
    %v5394 = vpack.c.b16 %v5323, %v5322
    %v5395 = vpack.c.b16 %v5325, %v5324
    %v5396 = vpack.c.b16 %v5327, %v5326
    %v5397 = vpack.c.b16 %v5329, %v5328
    %v5398 = vpack.c.b16 %v5331, %v5330
    %v5399 = vpack.c.b16 %v5333, %v5332
    %v5400 = vpack.c.b16 %v5335, %v5334
    %v5401 = vpack.c.b16 %v5337, %v5336
    %5466 = vmatprep.subr.bf16.mxu0 0
    %5467 = vmatpush1.bf16.msra.mxu0 %v5345
    %5468 = vmatprep.subr.bf16.mxu0 0
    %5469 = vmatpush1.bf16.msra.mxu0 %v5344
    %5470 = vmatprep.subr.bf16.mxu0 0
    %5471 = vmatpush1.bf16.msra.mxu0 %v5343
    %5472 = vmatprep.subr.bf16.mxu0 0
    %5473 = vmatpush1.bf16.msra.mxu0 %v5342
    %5474 = vmatprep.subr.bf16.mxu0 0
    %5475 = vmatpush1.bf16.msra.mxu0 %v5341
    %5476 = vmatprep.subr.bf16.mxu0 0
    %5477 = vmatpush1.bf16.msra.mxu0 %v5340
    %5478 = vmatprep.subr.bf16.mxu0 0
    %5479 = vmatpush1.bf16.msra.mxu0 %v5339
    %5480 = vmatprep.subr.bf16.mxu0 0
    %5481 = vmatpush1.bf16.msra.mxu0 %v5338
    %5482 = vmatprep.subr.bf16.mxu0 0
    %5483 = vmatpush2.bf16.msra.mxu0 %v5353
    %5484 = vmatprep.subr.bf16.mxu0 0
    %5485 = vmatpush2.bf16.msra.mxu0 %v5352
    %5486 = vmatprep.subr.bf16.mxu0 0
    %5487 = vmatpush2.bf16.msra.mxu0 %v5351
    %5488 = vmatprep.subr.bf16.mxu0 0
    %5489 = vmatpush2.bf16.msra.mxu0 %v5350
    %5490 = vmatprep.subr.bf16.mxu0 0
    %5491 = vmatpush2.bf16.msra.mxu0 %v5349
    %5492 = vmatprep.subr.bf16.mxu0 0
    %5493 = vmatpush2.bf16.msra.mxu0 %v5348
    %5494 = vmatprep.subr.bf16.mxu0 0
    %5495 = vmatpush2.bf16.msra.mxu0 %v5347
    %5496 = vmatprep.subr.bf16.mxu0 0
    %5497 = vmatpush2.bf16.msra.mxu0 %v5346
    %5498 = vmatprep.mubr.bf16.mxu0 %v4940
    %5499 = vmatmul.mubr.bf16.gmra.mxu0 %v4939
    %v5500 = vpop.f32.mrf.mxu0
    %v5501 = vadd.f32 %v5080, %v5500
    %v5502 = vpop.f32.mrf.mxu0
    %v5503 = vpop.f32.mrf.mxu0
    %v5504 = vpop.f32.mrf.mxu0
    %5505 = vdwg.mxu0
    %5506 = vmatprep.subr.bf16.mxu0 0
    %5507 = vmatpush1.bf16.msra.mxu0 %v5361
    %5508 = vmatprep.subr.bf16.mxu0 0
    %5509 = vmatpush1.bf16.msra.mxu0 %v5360
    %5510 = vmatprep.subr.bf16.mxu0 0
    %5511 = vmatpush1.bf16.msra.mxu0 %v5359
    %5512 = vmatprep.subr.bf16.mxu0 0
    %5513 = vmatpush1.bf16.msra.mxu0 %v5358
    %5514 = vmatprep.subr.bf16.mxu0 0
    %5515 = vmatpush1.bf16.msra.mxu0 %v5357
    %5516 = vmatprep.subr.bf16.mxu0 0
    %5517 = vmatpush1.bf16.msra.mxu0 %v5356
    %5518 = vmatprep.subr.bf16.mxu0 0
    %5519 = vmatpush1.bf16.msra.mxu0 %v5355
    %5520 = vmatprep.subr.bf16.mxu0 0
    %5521 = vmatpush1.bf16.msra.mxu0 %v5354
    %5522 = vmatprep.subr.bf16.mxu0 0
    %5523 = vmatpush2.bf16.msra.mxu0 %v5369
    %5524 = vmatprep.subr.bf16.mxu0 0
    %5525 = vmatpush2.bf16.msra.mxu0 %v5368
    %5526 = vmatprep.subr.bf16.mxu0 0
    %5527 = vmatpush2.bf16.msra.mxu0 %v5367
    %5528 = vmatprep.subr.bf16.mxu0 0
    %5529 = vmatpush2.bf16.msra.mxu0 %v5366
    %5530 = vmatprep.subr.bf16.mxu0 0
    %5531 = vmatpush2.bf16.msra.mxu0 %v5365
    %5532 = vmatprep.subr.bf16.mxu0 0
    %5533 = vmatpush2.bf16.msra.mxu0 %v5364
    %5534 = vmatprep.subr.bf16.mxu0 0
    %5535 = vmatpush2.bf16.msra.mxu0 %v5363
    %5536 = vmatprep.subr.bf16.mxu0 0
    %5537 = vmatpush2.bf16.msra.mxu0 %v5362
    %5538 = vmatprep.mubr.bf16.mxu0 %v4942
    %5539 = vmatmul.mubr.bf16.gmra.mxu0 %v4941
    %v5540 = vpop.f32.mrf.mxu0
    %v5541 = vadd.f32 %v5501, %v5540
    %v5542 = vpop.f32.mrf.mxu0
    %v5543 = vpop.f32.mrf.mxu0
    %v5544 = vpop.f32.mrf.mxu0
    %5545 = vdwg.mxu0
    %5546 = vmatprep.subr.bf16.mxu0 0
    %5547 = vmatpush1.bf16.msra.mxu0 %v5377
    %5548 = vmatprep.subr.bf16.mxu0 0
    %5549 = vmatpush1.bf16.msra.mxu0 %v5376
    %5550 = vmatprep.subr.bf16.mxu0 0
    %5551 = vmatpush1.bf16.msra.mxu0 %v5375
    %5552 = vmatprep.subr.bf16.mxu0 0
    %5553 = vmatpush1.bf16.msra.mxu0 %v5374
    %5554 = vmatprep.subr.bf16.mxu0 0
    %5555 = vmatpush1.bf16.msra.mxu0 %v5373
    %5556 = vmatprep.subr.bf16.mxu0 0
    %5557 = vmatpush1.bf16.msra.mxu0 %v5372
    %5558 = vmatprep.subr.bf16.mxu0 0
    %5559 = vmatpush1.bf16.msra.mxu0 %v5371
    %5560 = vmatprep.subr.bf16.mxu0 0
    %5561 = vmatpush1.bf16.msra.mxu0 %v5370
    %5562 = vmatprep.subr.bf16.mxu0 0
    %5563 = vmatpush2.bf16.msra.mxu0 %v5385
    %5564 = vmatprep.subr.bf16.mxu0 0
    %5565 = vmatpush2.bf16.msra.mxu0 %v5384
    %5566 = vmatprep.subr.bf16.mxu0 0
    %5567 = vmatpush2.bf16.msra.mxu0 %v5383
    %5568 = vmatprep.subr.bf16.mxu0 0
    %5569 = vmatpush2.bf16.msra.mxu0 %v5382
    %5570 = vmatprep.subr.bf16.mxu0 0
    %5571 = vmatpush2.bf16.msra.mxu0 %v5381
    %5572 = vmatprep.subr.bf16.mxu0 0
    %5573 = vmatpush2.bf16.msra.mxu0 %v5380
    %5574 = vmatprep.subr.bf16.mxu0 0
    %5575 = vmatpush2.bf16.msra.mxu0 %v5379
    %5576 = vmatprep.subr.bf16.mxu0 0
    %5577 = vmatpush2.bf16.msra.mxu0 %v5378
    %5578 = vmatprep.mubr.bf16.mxu0 %v4944
    %5579 = vmatmul.mubr.bf16.gmra.mxu0 %v4943
    %v5580 = vpop.f32.mrf.mxu0
    %v5581 = vadd.f32 %v5541, %v5580
    %v5582 = vpop.f32.mrf.mxu0
    %v5583 = vpop.f32.mrf.mxu0
    %v5584 = vpop.f32.mrf.mxu0
    %5585 = vdwg.mxu0
    %5586 = vmatprep.subr.bf16.mxu0 0
    %5587 = vmatpush1.bf16.msra.mxu0 %v5393
    %5588 = vmatprep.subr.bf16.mxu0 0
    %5589 = vmatpush1.bf16.msra.mxu0 %v5392
    %5590 = vmatprep.subr.bf16.mxu0 0
    %5591 = vmatpush1.bf16.msra.mxu0 %v5391
    %5592 = vmatprep.subr.bf16.mxu0 0
    %5593 = vmatpush1.bf16.msra.mxu0 %v5390
    %5594 = vmatprep.subr.bf16.mxu0 0
    %5595 = vmatpush1.bf16.msra.mxu0 %v5389
    %5596 = vmatprep.subr.bf16.mxu0 0
    %5597 = vmatpush1.bf16.msra.mxu0 %v5388
    %5598 = vmatprep.subr.bf16.mxu0 0
    %5599 = vmatpush1.bf16.msra.mxu0 %v5387
    %5600 = vmatprep.subr.bf16.mxu0 0
    %5601 = vmatpush1.bf16.msra.mxu0 %v5386
    %5602 = vmatprep.subr.bf16.mxu0 0
    %5603 = vmatpush2.bf16.msra.mxu0 %v5401
    %5604 = vmatprep.subr.bf16.mxu0 0
    %5605 = vmatpush2.bf16.msra.mxu0 %v5400
    %5606 = vmatprep.subr.bf16.mxu0 0
    %5607 = vmatpush2.bf16.msra.mxu0 %v5399
    %5608 = vmatprep.subr.bf16.mxu0 0
    %5609 = vmatpush2.bf16.msra.mxu0 %v5398
    %5610 = vmatprep.subr.bf16.mxu0 0
    %5611 = vmatpush2.bf16.msra.mxu0 %v5397
    %5612 = vmatprep.subr.bf16.mxu0 0
    %5613 = vmatpush2.bf16.msra.mxu0 %v5396
    %5614 = vmatprep.subr.bf16.mxu0 0
    %5615 = vmatpush2.bf16.msra.mxu0 %v5395
    %5616 = vmatprep.subr.bf16.mxu0 0
    %5617 = vmatpush2.bf16.msra.mxu0 %v5394
    %5618 = vmatprep.mubr.bf16.mxu0 %v4946
    %5619 = vmatmul.mubr.bf16.gmra.mxu0 %v4945
    %v5620 = vpop.f32.mrf.mxu0
    %v5621 = vadd.f32 %v5581, %v5620
    %v5622 = vpop.f32.mrf.mxu0
    %v5623 = vpop.f32.mrf.mxu0
    %v5624 = vpop.f32.mrf.mxu0
    %5625 = vdwg.mxu0
    %5626 = vst [vmem:[#allocation10] sm:$0x3] %v5621
    // Predicated region
    $region58: #{tpu_custom_call.1} parent=1 // pred_check
      _
    $region59: #{tpu_custom_call.1} parent=1 // pred_check_branch
      %5628 = sbr.rel (0) target = $region61
    $region60: #{tpu_custom_call.1} parent=1 // pred_region
      %s5630 = ssub.s32 256, 256
      %5631 = vsyncadd [#allocation5], %s5630
      %s5633 = sshll.u32 [#allocation9], 4
      %s5634 = int_to_ptr.vmem [resolvable:$true] %s5633
      %5636 = dma.vmem_to_hbm [thread:$0]  %s5634, 256, %s11, [#allocation5]
    $region61: #{tpu_custom_call.1} parent=1 // pred_fallthru
      _
    // Predicated region
    $region62: #{tpu_custom_call.1} parent=1 // pred_check
      _
    $region63: #{tpu_custom_call.1} parent=1 // pred_check_branch
      %5638 = sbr.rel (0) target = $region65
    $region64: #{tpu_custom_call.1} parent=1 // pred_region
      %s5640 = ssub.s32 32, 32
      %5641 = vsyncadd [#allocation11], %s5640
      %s5643 = sshll.u32 [#allocation10], 4
      %s5644 = int_to_ptr.vmem [resolvable:$true] %s5643
      %5646 = dma.vmem_to_hbm [thread:$0]  %s5644, 32, %s12, [#allocation11]
    $region65: #{tpu_custom_call.1} parent=1 // pred_fallthru
      _
    // Predicated region
    $region66: #{tpu_custom_call.1} parent=1 // pred_check
      _
    $region67: #{tpu_custom_call.1} parent=1 // pred_check_branch
      %5648 = sbr.rel (0) target = $region69
    $region68: #{tpu_custom_call.1} parent=1 // pred_region
      %5649 = dma.done [#allocation5], 256
    $region69: #{tpu_custom_call.1} parent=1 // pred_fallthru
      _
    // Predicated region
    $region70: #{tpu_custom_call.1} parent=1 // pred_check
      _
    $region71: #{tpu_custom_call.1} parent=1 // pred_check_branch
      %5651 = sbr.rel (0) target = $region73
    $region72: #{tpu_custom_call.1} parent=1 // pred_region
      %5652 = dma.done [#allocation11], 32
    $region73: #{tpu_custom_call.1} parent=1 // pred_fallthru
      _
    %5653 = vsyncpa [#allocation4], 1
    %5654 = vsyncpa [#allocation7], 1
    %5655 = vsyncpa [#allocation5], 1
    %5656 = vsyncpa [#allocation11], 1

</llo_original>
